<compile_context>
chip_gen: v6e
topology: v6e:2x2x1
jax: 0.10.0
libtpu: 0.0.40
codegen_flags: <defaults>
</compile_context>

<pallas_src>
import functools

import jax
import jax.numpy as jnp
from jax.experimental import pallas as pl
from jax.experimental.pallas import tpu as pltpu

N_PAD = 128          # lane-dense channel padding
KSIZE = 10           # Conv1d kernel size (all three layers)
STRIDE = 5           # Conv1d stride (all three layers)


# ----------------------------------------------------------------------------
# Fused Pallas kernel (one grid step == one batch sample)
# ----------------------------------------------------------------------------
def _fused_kernel(x_ref, w1_ref, w2_ref, w3_ref, wfc1_ref, wfc2_ref, vec_ref,
                  o_ref, a1_ref, a2_ref, *, l1, l2, l3):
    f32 = jnp.float32
    bf16 = jnp.bfloat16

    def conv_relu_bn(src_ref, w_ref, l_out, bias_row, scale_row, shift_row):
        # y[l, co] = BN(ReLU(sum_k sum_c src[STRIDE*l + k, c] * w[k, c, co] + b[co]))
        y = jnp.zeros((l_out, w_ref.shape[-1]), f32)
        for k in range(KSIZE):                                    # static unroll over taps
            taps = src_ref[pl.ds(k, l_out, stride=STRIDE), :]     # (l_out, C_in)
            y = y + jnp.dot(taps.astype(bf16), w_ref[k],
                            preferred_element_type=f32)
        y = jnp.maximum(y + vec_ref[bias_row:bias_row + 1, :], 0.0)        # conv bias + ReLU
        return (y * vec_ref[scale_row:scale_row + 1, :]                    # BatchNorm (eval)
                + vec_ref[shift_row:shift_row + 1, :])

    # CNN stack; activations live in VMEM scratch, frame-major (L, 128).
    a1_ref[...] = conv_relu_bn(x_ref, w1_ref, l1, 0, 1, 2)
    a2_ref[...] = conv_relu_bn(a1_ref, w2_ref, l2, 3, 4, 5)
    y3 = conv_relu_bn(a2_ref, w3_ref, l3, 6, 7, 8)                # (l3, 128), stays in vregs

    # fc1 over the flattened CNN features.  PyTorch's (channel, frame) flatten
    # order is pre-folded into wfc1 (one (C, N) slab per frame l).
    h = jnp.zeros((1, wfc1_ref.shape[-1]), f32)
    for l in range(l3):
        h = h + jnp.dot(y3[l:l + 1, :].astype(bf16), wfc1_ref[l],
                        preferred_element_type=f32)
    h = jnp.maximum(h + vec_ref[9:10, :], 0.0)
    # TODO(synk): Dropout(0.5) is identity in eval mode; training-mode mask not implemented.
    o_ref[...] = jnp.dot(h.astype(bf16), wfc2_ref[...],
                         preferred_element_type=f32) + vec_ref[10:11, :]


def fused_forward(xt, prepped, *, class_num):
    # xt: (B, L, C0) frame-major input
    B, L0, C0 = xt.shape
    l1 = (L0 - KSIZE) // STRIDE + 1
    l2 = (l1 - KSIZE) // STRIDE + 1
    l3 = (l2 - KSIZE) // STRIDE + 1
    assert l3 == 5, "Linear(50, 32) requires 5 output frames (input length ~801)"

    kernel = functools.partial(_fused_kernel, l1=l1, l2=l2, l3=l3)
    out = pl.pallas_call(
        kernel,
        out_shape=jax.ShapeDtypeStruct((B, 1, N_PAD), jnp.float32),
        grid=(B,),
        in_specs=[
            pl.BlockSpec((None, L0, C0), lambda b: (b, 0, 0)),          # x (per-sample)
            pl.BlockSpec(prepped["w1"].shape, lambda b: (0, 0, 0)),     # conv1 taps
            pl.BlockSpec(prepped["w2"].shape, lambda b: (0, 0, 0)),     # conv2 taps
            pl.BlockSpec(prepped["w3"].shape, lambda b: (0, 0, 0)),     # conv3 taps
            pl.BlockSpec(prepped["wfc1"].shape, lambda b: (0, 0, 0)),   # fc1 per-frame slabs
            pl.BlockSpec(prepped["wfc2"].shape, lambda b: (0, 0)),      # fc2
            pl.BlockSpec(prepped["vecs"].shape, lambda b: (0, 0)),      # biases / BN scale-shift
        ],
        out_specs=pl.BlockSpec((None, 1, N_PAD), lambda b: (b, 0, 0)),
        scratch_shapes=[
            pltpu.VMEM((l1, N_PAD), jnp.float32),   # conv1 output
            pltpu.VMEM((l2, N_PAD), jnp.float32),   # conv2 output
        ],
        compiler_params=pltpu.CompilerParams(
            dimension_semantics=("parallel",)),
    )(xt, prepped["w1"], prepped["w2"], prepped["w3"],
      prepped["wfc1"], prepped["wfc2"], prepped["vecs"])
    return out[:, 0, :class_num]


def forward(prepped, x, *, class_num):
    # x: (B, 1, 40, L)  -> squeeze(1) like the PyTorch module, then a single
    # small XLA transpose to frame-major (B, L, 40); everything else is fused.
    xt = jnp.transpose(jnp.squeeze(x, axis=1), (0, 2, 1))
    # (the PyTorch forward prints cnn.shape == (B, 50) here; omitted)
    return fused_forward(xt, prepped, class_num=class_num)


# ----------------------------------------------------------------------------
# One-time parameter preparation (weight re-layout, padding, BN folding, bf16)
# ----------------------------------------------------------------------------
def prepare_params(p, class_num, eps=1e-5):
    bf16, f32 = jnp.bfloat16, jnp.float32

    def pad_vec(v):
        return jnp.zeros((N_PAD,), f32).at[:v.shape[0]].set(v.astype(f32))

    def prep_conv(w, cin_pad):
        # PyTorch (C_out, C_in, K)  ->  per-tap slabs (K, cin_pad, N_PAD), zero padded.
        c_out, c_in, k = w.shape
        wt = jnp.transpose(w, (2, 1, 0)).astype(bf16)            # (K, C_in, C_out)
        return jnp.zeros((k, cin_pad, N_PAD), bf16).at[:, :c_in, :c_out].set(wt)

    def bn_fold(g, b, m, v):
        scale = g / jnp.sqrt(v + eps)
        shift = b - m * scale
        return pad_vec(scale), pad_vec(shift)

    s1, t1 = bn_fold(p["bn1_g"], p["bn1_b"], p["bn1_m"], p["bn1_v"])
    s2, t2 = bn_fold(p["bn2_g"], p["bn2_b"], p["bn2_m"], p["bn2_v"])
    s3, t3 = bn_fold(p["bn3_g"], p["bn3_b"], p["bn3_m"], p["bn3_v"])

    # fc1: PyTorch flattens conv3 output as (channel, frame); reorder its weight
    # into one (C3, 32) slab per frame so the kernel consumes frame-major features.
    c3, l3 = 10, 5
    wfc1 = p["fc1_w"].reshape(-1, c3, l3)                        # (32, 10, 5)  [n, c, l]
    wfc1 = jnp.transpose(wfc1, (2, 1, 0)).astype(bf16)           # (5, 10, 32)  [l, c, n]
    wfc1_p = jnp.zeros((l3, N_PAD, N_PAD), bf16).at[:, :c3, :wfc1.shape[-1]].set(wfc1)

    wfc2 = p["fc2_w"].T.astype(bf16)                             # (32, class_num)
    wfc2_p = jnp.zeros((N_PAD, N_PAD), bf16).at[:wfc2.shape[0], :class_num].set(wfc2)

    vecs = jnp.stack([
        pad_vec(p["b1"]), s1, t1,
        pad_vec(p["b2"]), s2, t2,
        pad_vec(p["b3"]), s3, t3,
        pad_vec(p["fc1_b"]), pad_vec(p["fc2_b"]),
    ])                                                           # (11, 128) f32

    return {
        "w1": prep_conv(p["w1"], p["w1"].shape[1]),              # (10, 40, 128)
        "w2": prep_conv(p["w2"], N_PAD),                         # (10, 128, 128)
        "w3": prep_conv(p["w3"], N_PAD),                         # (10, 128, 128)
        "wfc1": wfc1_p, "wfc2": wfc2_p, "vecs": vecs,
    }


# ----------------------------------------------------------------------------
# Deterministic parameter init (shapes from the module's __init__)
# ----------------------------------------------------------------------------
def init_params(key, class_num):
    keys = jax.random.split(key, 24)

    def u(k, shape, fan_in):
        bound = 1.0 / (fan_in ** 0.5)
        return jax.random.uniform(k, shape, jnp.float32, -bound, bound)

    p = {}
    # Conv1d(40 -> 100, k=10, s=5) + BatchNorm1d(100)
    p["w1"] = u(keys[0], (100, 40, 10), 40 * 10)
    p["b1"] = u(keys[1], (100,), 40 * 10)
    p["bn1_g"] = 1.0 + 0.1 * jax.random.normal(keys[2], (100,), jnp.float32)
    p["bn1_b"] = 0.1 * jax.random.normal(keys[3], (100,), jnp.float32)
    p["bn1_m"] = 0.1 * jax.random.normal(keys[4], (100,), jnp.float32)
    p["bn1_v"] = jax.random.uniform(keys[5], (100,), jnp.float32, 0.5, 1.5)
    # Conv1d(100 -> 50, k=10, s=5) + BatchNorm1d(50)
    p["w2"] = u(keys[6], (50, 100, 10), 100 * 10)
    p["b2"] = u(keys[7], (50,), 100 * 10)
    p["bn2_g"] = 1.0 + 0.1 * jax.random.normal(keys[8], (50,), jnp.float32)
    p["bn2_b"] = 0.1 * jax.random.normal(keys[9], (50,), jnp.float32)
    p["bn2_m"] = 0.1 * jax.random.normal(keys[10], (50,), jnp.float32)
    p["bn2_v"] = jax.random.uniform(keys[11], (50,), jnp.float32, 0.5, 1.5)
    # Conv1d(50 -> 10, k=10, s=5) + BatchNorm1d(10)
    p["w3"] = u(keys[12], (10, 50, 10), 50 * 10)
    p["b3"] = u(keys[13], (10,), 50 * 10)
    p["bn3_g"] = 1.0 + 0.1 * jax.random.normal(keys[14], (10,), jnp.float32)
    p["bn3_b"] = 0.1 * jax.random.normal(keys[15], (10,), jnp.float32)
    p["bn3_m"] = 0.1 * jax.random.normal(keys[16], (10,), jnp.float32)
    p["bn3_v"] = jax.random.uniform(keys[17], (10,), jnp.float32, 0.5, 1.5)
    # Linear(50 -> 32), Linear(32 -> class_num)   (PyTorch layout: (out, in))
    p["fc1_w"] = u(keys[18], (32, 50), 50)
    p["fc1_b"] = u(keys[19], (32,), 50)
    p["fc2_w"] = u(keys[20], (class_num, 32), 32)
    p["fc2_b"] = u(keys[21], (class_num,), 32)
    return p


if __name__ == "__main__":
    class_num = 5
    key = jax.random.PRNGKey(0)
    pkey, xkey = jax.random.split(key)

    params = init_params(pkey, class_num)
    prepped = prepare_params(params, class_num)   # one-time weight prep, outside forward

    # Input length 801 so the three stride-5 convs yield 5 frames -> 10*5 = 50
    # features, matching Linear(50, 32) (same as the module's own summary shape).
    x = jax.random.normal(xkey, (2, 1, 40, 801), jnp.float32)

    fwd = jax.jit(functools.partial(forward, class_num=class_num))
    out = jax.block_until_ready(fwd(prepped, x))
    assert out.shape == (2, class_num), out.shape
    assert jnp.all(jnp.isfinite(out))
    print("KERNEL_OK")
</pallas_src>

<mosaic_0001>
module attributes {stable_mosaic.version = 11 : i64} {
  func.func @_fused_kernel(%arg0: i32, %arg1: memref<1x801x40xf32, #tpu.memory_space<vmem>>, %arg2: memref<10x40x128xbf16, #tpu.memory_space<vmem>>, %arg3: memref<10x128x128xbf16, #tpu.memory_space<vmem>>, %arg4: memref<10x128x128xbf16, #tpu.memory_space<vmem>>, %arg5: memref<5x128x128xbf16, #tpu.memory_space<vmem>>, %arg6: memref<128x128xbf16, #tpu.memory_space<vmem>>, %arg7: memref<11x128xf32, #tpu.memory_space<vmem>>, %arg8: memref<1x1x128xf32, #tpu.memory_space<vmem>>, %arg9: memref<159x128xf32, #tpu.memory_space<vmem>>, %arg10: memref<30x128xf32, #tpu.memory_space<vmem>>) attributes {dimension_semantics = [#tpu.dimension_semantics<parallel>], iteration_bounds = array<i64: 2>, scalar_prefetch = 0 : i64, scratch_operands = 2 : i64, tpu.core_type = #tpu.core_type<tc>, window_params = [{transform_indices = @transform_0, window_bounds = array<i64: 1, 801, 40>}, {pipeline_mode = #tpu.pipeline_mode<synchronous>, transform_indices = @transform_1, window_bounds = array<i64: 10, 40, 128>}, {pipeline_mode = #tpu.pipeline_mode<synchronous>, transform_indices = @transform_2, window_bounds = array<i64: 10, 128, 128>}, {pipeline_mode = #tpu.pipeline_mode<synchronous>, transform_indices = @transform_3, window_bounds = array<i64: 10, 128, 128>}, {pipeline_mode = #tpu.pipeline_mode<synchronous>, transform_indices = @transform_4, window_bounds = array<i64: 5, 128, 128>}, {pipeline_mode = #tpu.pipeline_mode<synchronous>, transform_indices = @transform_5, window_bounds = array<i64: 128, 128>}, {pipeline_mode = #tpu.pipeline_mode<synchronous>, transform_indices = @transform_6, window_bounds = array<i64: 11, 128>}, {transform_indices = @transform_7, window_bounds = array<i64: 1, 1, 128>}]} {
    %cst = arith.constant 0.000000e+00 : f32
    %0 = vector.broadcast %cst : f32 to vector<159x128xf32>
    %c0 = arith.constant 0 : index
    %c0_0 = arith.constant 0 : index
    %c0_1 = arith.constant 0 : index
    %1 = tpu.strided_load %arg1[%c0, %c0_0, %c0_1] {strides = array<i32: 1, 5, 1>} : memref<1x801x40xf32, #tpu.memory_space<vmem>>, vector<1x159x40xf32>
    %2 = vector.shape_cast %1 : vector<1x159x40xf32> to vector<159x40xf32>
    %3 = arith.truncf %2 : vector<159x40xf32> to vector<159x40xbf16>
    %c0_2 = arith.constant 0 : index
    %c0_3 = arith.constant 0 : index
    %c0_4 = arith.constant 0 : index
    %4 = vector.load %arg2[%c0_2, %c0_3, %c0_4] : memref<10x40x128xbf16, #tpu.memory_space<vmem>>, vector<1x40x128xbf16>
    %5 = vector.shape_cast %4 : vector<1x40x128xbf16> to vector<40x128xbf16>
    %cst_5 = arith.constant dense<0.000000e+00> : vector<159x128xf32>
    %6 = tpu.matmul %3, %5, %cst_5 {dimension_numbers = #tpu.dot_dimension_numbers<[1], [0], [0], [1], [0, 0, 1, 1], [], []>} : vector<159x40xbf16>, vector<40x128xbf16>, vector<159x128xf32> -> vector<159x128xf32>
    %7 = arith.addf %0, %6 : vector<159x128xf32>
    %c0_6 = arith.constant 0 : index
    %c1 = arith.constant 1 : index
    %c0_7 = arith.constant 0 : index
    %8 = tpu.strided_load %arg1[%c0_6, %c1, %c0_7] {strides = array<i32: 1, 5, 1>} : memref<1x801x40xf32, #tpu.memory_space<vmem>>, vector<1x159x40xf32>
    %9 = vector.shape_cast %8 : vector<1x159x40xf32> to vector<159x40xf32>
    %10 = arith.truncf %9 : vector<159x40xf32> to vector<159x40xbf16>
    %c1_8 = arith.constant 1 : index
    %c0_9 = arith.constant 0 : index
    %c0_10 = arith.constant 0 : index
    %11 = vector.load %arg2[%c1_8, %c0_9, %c0_10] : memref<10x40x128xbf16, #tpu.memory_space<vmem>>, vector<1x40x128xbf16>
    %12 = vector.shape_cast %11 : vector<1x40x128xbf16> to vector<40x128xbf16>
    %cst_11 = arith.constant dense<0.000000e+00> : vector<159x128xf32>
    %13 = tpu.matmul %10, %12, %cst_11 {dimension_numbers = #tpu.dot_dimension_numbers<[1], [0], [0], [1], [0, 0, 1, 1], [], []>} : vector<159x40xbf16>, vector<40x128xbf16>, vector<159x128xf32> -> vector<159x128xf32>
    %14 = arith.addf %7, %13 : vector<159x128xf32>
    %c0_12 = arith.constant 0 : index
    %c2 = arith.constant 2 : index
    %c0_13 = arith.constant 0 : index
    %15 = tpu.strided_load %arg1[%c0_12, %c2, %c0_13] {strides = array<i32: 1, 5, 1>} : memref<1x801x40xf32, #tpu.memory_space<vmem>>, vector<1x159x40xf32>
    %16 = vector.shape_cast %15 : vector<1x159x40xf32> to vector<159x40xf32>
    %17 = arith.truncf %16 : vector<159x40xf32> to vector<159x40xbf16>
    %c2_14 = arith.constant 2 : index
    %c0_15 = arith.constant 0 : index
    %c0_16 = arith.constant 0 : index
    %18 = vector.load %arg2[%c2_14, %c0_15, %c0_16] : memref<10x40x128xbf16, #tpu.memory_space<vmem>>, vector<1x40x128xbf16>
    %19 = vector.shape_cast %18 : vector<1x40x128xbf16> to vector<40x128xbf16>
    %cst_17 = arith.constant dense<0.000000e+00> : vector<159x128xf32>
    %20 = tpu.matmul %17, %19, %cst_17 {dimension_numbers = #tpu.dot_dimension_numbers<[1], [0], [0], [1], [0, 0, 1, 1], [], []>} : vector<159x40xbf16>, vector<40x128xbf16>, vector<159x128xf32> -> vector<159x128xf32>
    %21 = arith.addf %14, %20 : vector<159x128xf32>
    %c0_18 = arith.constant 0 : index
    %c3 = arith.constant 3 : index
    %c0_19 = arith.constant 0 : index
    %22 = tpu.strided_load %arg1[%c0_18, %c3, %c0_19] {strides = array<i32: 1, 5, 1>} : memref<1x801x40xf32, #tpu.memory_space<vmem>>, vector<1x159x40xf32>
    %23 = vector.shape_cast %22 : vector<1x159x40xf32> to vector<159x40xf32>
    %24 = arith.truncf %23 : vector<159x40xf32> to vector<159x40xbf16>
    %c3_20 = arith.constant 3 : index
    %c0_21 = arith.constant 0 : index
    %c0_22 = arith.constant 0 : index
    %25 = vector.load %arg2[%c3_20, %c0_21, %c0_22] : memref<10x40x128xbf16, #tpu.memory_space<vmem>>, vector<1x40x128xbf16>
    %26 = vector.shape_cast %25 : vector<1x40x128xbf16> to vector<40x128xbf16>
    %cst_23 = arith.constant dense<0.000000e+00> : vector<159x128xf32>
    %27 = tpu.matmul %24, %26, %cst_23 {dimension_numbers = #tpu.dot_dimension_numbers<[1], [0], [0], [1], [0, 0, 1, 1], [], []>} : vector<159x40xbf16>, vector<40x128xbf16>, vector<159x128xf32> -> vector<159x128xf32>
    %28 = arith.addf %21, %27 : vector<159x128xf32>
    %c0_24 = arith.constant 0 : index
    %c4 = arith.constant 4 : index
    %c0_25 = arith.constant 0 : index
    %29 = tpu.strided_load %arg1[%c0_24, %c4, %c0_25] {strides = array<i32: 1, 5, 1>} : memref<1x801x40xf32, #tpu.memory_space<vmem>>, vector<1x159x40xf32>
    %30 = vector.shape_cast %29 : vector<1x159x40xf32> to vector<159x40xf32>
    %31 = arith.truncf %30 : vector<159x40xf32> to vector<159x40xbf16>
    %c4_26 = arith.constant 4 : index
    %c0_27 = arith.constant 0 : index
    %c0_28 = arith.constant 0 : index
    %32 = vector.load %arg2[%c4_26, %c0_27, %c0_28] : memref<10x40x128xbf16, #tpu.memory_space<vmem>>, vector<1x40x128xbf16>
    %33 = vector.shape_cast %32 : vector<1x40x128xbf16> to vector<40x128xbf16>
    %cst_29 = arith.constant dense<0.000000e+00> : vector<159x128xf32>
    %34 = tpu.matmul %31, %33, %cst_29 {dimension_numbers = #tpu.dot_dimension_numbers<[1], [0], [0], [1], [0, 0, 1, 1], [], []>} : vector<159x40xbf16>, vector<40x128xbf16>, vector<159x128xf32> -> vector<159x128xf32>
    %35 = arith.addf %28, %34 : vector<159x128xf32>
    %c0_30 = arith.constant 0 : index
    %c5 = arith.constant 5 : index
    %c0_31 = arith.constant 0 : index
    %36 = tpu.strided_load %arg1[%c0_30, %c5, %c0_31] {strides = array<i32: 1, 5, 1>} : memref<1x801x40xf32, #tpu.memory_space<vmem>>, vector<1x159x40xf32>
    %37 = vector.shape_cast %36 : vector<1x159x40xf32> to vector<159x40xf32>
    %38 = arith.truncf %37 : vector<159x40xf32> to vector<159x40xbf16>
    %c5_32 = arith.constant 5 : index
    %c0_33 = arith.constant 0 : index
    %c0_34 = arith.constant 0 : index
    %39 = vector.load %arg2[%c5_32, %c0_33, %c0_34] : memref<10x40x128xbf16, #tpu.memory_space<vmem>>, vector<1x40x128xbf16>
    %40 = vector.shape_cast %39 : vector<1x40x128xbf16> to vector<40x128xbf16>
    %cst_35 = arith.constant dense<0.000000e+00> : vector<159x128xf32>
    %41 = tpu.matmul %38, %40, %cst_35 {dimension_numbers = #tpu.dot_dimension_numbers<[1], [0], [0], [1], [0, 0, 1, 1], [], []>} : vector<159x40xbf16>, vector<40x128xbf16>, vector<159x128xf32> -> vector<159x128xf32>
    %42 = arith.addf %35, %41 : vector<159x128xf32>
    %c0_36 = arith.constant 0 : index
    %c6 = arith.constant 6 : index
    %c0_37 = arith.constant 0 : index
    %43 = tpu.strided_load %arg1[%c0_36, %c6, %c0_37] {strides = array<i32: 1, 5, 1>} : memref<1x801x40xf32, #tpu.memory_space<vmem>>, vector<1x159x40xf32>
    %44 = vector.shape_cast %43 : vector<1x159x40xf32> to vector<159x40xf32>
    %45 = arith.truncf %44 : vector<159x40xf32> to vector<159x40xbf16>
    %c6_38 = arith.constant 6 : index
    %c0_39 = arith.constant 0 : index
    %c0_40 = arith.constant 0 : index
    %46 = vector.load %arg2[%c6_38, %c0_39, %c0_40] : memref<10x40x128xbf16, #tpu.memory_space<vmem>>, vector<1x40x128xbf16>
    %47 = vector.shape_cast %46 : vector<1x40x128xbf16> to vector<40x128xbf16>
    %cst_41 = arith.constant dense<0.000000e+00> : vector<159x128xf32>
    %48 = tpu.matmul %45, %47, %cst_41 {dimension_numbers = #tpu.dot_dimension_numbers<[1], [0], [0], [1], [0, 0, 1, 1], [], []>} : vector<159x40xbf16>, vector<40x128xbf16>, vector<159x128xf32> -> vector<159x128xf32>
    %49 = arith.addf %42, %48 : vector<159x128xf32>
    %c0_42 = arith.constant 0 : index
    %c7 = arith.constant 7 : index
    %c0_43 = arith.constant 0 : index
    %50 = tpu.strided_load %arg1[%c0_42, %c7, %c0_43] {strides = array<i32: 1, 5, 1>} : memref<1x801x40xf32, #tpu.memory_space<vmem>>, vector<1x159x40xf32>
    %51 = vector.shape_cast %50 : vector<1x159x40xf32> to vector<159x40xf32>
    %52 = arith.truncf %51 : vector<159x40xf32> to vector<159x40xbf16>
    %c7_44 = arith.constant 7 : index
    %c0_45 = arith.constant 0 : index
    %c0_46 = arith.constant 0 : index
    %53 = vector.load %arg2[%c7_44, %c0_45, %c0_46] : memref<10x40x128xbf16, #tpu.memory_space<vmem>>, vector<1x40x128xbf16>
    %54 = vector.shape_cast %53 : vector<1x40x128xbf16> to vector<40x128xbf16>
    %cst_47 = arith.constant dense<0.000000e+00> : vector<159x128xf32>
    %55 = tpu.matmul %52, %54, %cst_47 {dimension_numbers = #tpu.dot_dimension_numbers<[1], [0], [0], [1], [0, 0, 1, 1], [], []>} : vector<159x40xbf16>, vector<40x128xbf16>, vector<159x128xf32> -> vector<159x128xf32>
    %56 = arith.addf %49, %55 : vector<159x128xf32>
    %c0_48 = arith.constant 0 : index
    %c8 = arith.constant 8 : index
    %c0_49 = arith.constant 0 : index
    %57 = tpu.strided_load %arg1[%c0_48, %c8, %c0_49] {strides = array<i32: 1, 5, 1>} : memref<1x801x40xf32, #tpu.memory_space<vmem>>, vector<1x159x40xf32>
    %58 = vector.shape_cast %57 : vector<1x159x40xf32> to vector<159x40xf32>
    %59 = arith.truncf %58 : vector<159x40xf32> to vector<159x40xbf16>
    %c8_50 = arith.constant 8 : index
    %c0_51 = arith.constant 0 : index
    %c0_52 = arith.constant 0 : index
    %60 = vector.load %arg2[%c8_50, %c0_51, %c0_52] : memref<10x40x128xbf16, #tpu.memory_space<vmem>>, vector<1x40x128xbf16>
    %61 = vector.shape_cast %60 : vector<1x40x128xbf16> to vector<40x128xbf16>
    %cst_53 = arith.constant dense<0.000000e+00> : vector<159x128xf32>
    %62 = tpu.matmul %59, %61, %cst_53 {dimension_numbers = #tpu.dot_dimension_numbers<[1], [0], [0], [1], [0, 0, 1, 1], [], []>} : vector<159x40xbf16>, vector<40x128xbf16>, vector<159x128xf32> -> vector<159x128xf32>
    %63 = arith.addf %56, %62 : vector<159x128xf32>
    %c0_54 = arith.constant 0 : index
    %c9 = arith.constant 9 : index
    %c0_55 = arith.constant 0 : index
    %64 = tpu.strided_load %arg1[%c0_54, %c9, %c0_55] {strides = array<i32: 1, 5, 1>} : memref<1x801x40xf32, #tpu.memory_space<vmem>>, vector<1x159x40xf32>
    %65 = vector.shape_cast %64 : vector<1x159x40xf32> to vector<159x40xf32>
    %66 = arith.truncf %65 : vector<159x40xf32> to vector<159x40xbf16>
    %c9_56 = arith.constant 9 : index
    %c0_57 = arith.constant 0 : index
    %c0_58 = arith.constant 0 : index
    %67 = vector.load %arg2[%c9_56, %c0_57, %c0_58] : memref<10x40x128xbf16, #tpu.memory_space<vmem>>, vector<1x40x128xbf16>
    %68 = vector.shape_cast %67 : vector<1x40x128xbf16> to vector<40x128xbf16>
    %cst_59 = arith.constant dense<0.000000e+00> : vector<159x128xf32>
    %69 = tpu.matmul %66, %68, %cst_59 {dimension_numbers = #tpu.dot_dimension_numbers<[1], [0], [0], [1], [0, 0, 1, 1], [], []>} : vector<159x40xbf16>, vector<40x128xbf16>, vector<159x128xf32> -> vector<159x128xf32>
    %70 = arith.addf %63, %69 : vector<159x128xf32>
    %c0_60 = arith.constant 0 : index
    %c0_61 = arith.constant 0 : index
    %71 = vector.load %arg7[%c0_60, %c0_61] : memref<11x128xf32, #tpu.memory_space<vmem>>, vector<1x128xf32>
    %72 = vector.broadcast %71 : vector<1x128xf32> to vector<159x128xf32>
    %73 = arith.addf %70, %72 : vector<159x128xf32>
    %cst_62 = arith.constant 0.000000e+00 : f32
    %74 = vector.broadcast %cst_62 : f32 to vector<159x128xf32>
    %75 = arith.maximumf %73, %74 : vector<159x128xf32>
    %c1_63 = arith.constant 1 : index
    %c0_64 = arith.constant 0 : index
    %76 = vector.load %arg7[%c1_63, %c0_64] : memref<11x128xf32, #tpu.memory_space<vmem>>, vector<1x128xf32>
    %77 = vector.broadcast %76 : vector<1x128xf32> to vector<159x128xf32>
    %78 = arith.mulf %75, %77 : vector<159x128xf32>
    %c2_65 = arith.constant 2 : index
    %c0_66 = arith.constant 0 : index
    %79 = vector.load %arg7[%c2_65, %c0_66] : memref<11x128xf32, #tpu.memory_space<vmem>>, vector<1x128xf32>
    %80 = vector.broadcast %79 : vector<1x128xf32> to vector<159x128xf32>
    %81 = arith.addf %78, %80 : vector<159x128xf32>
    %c0_67 = arith.constant 0 : index
    %c0_68 = arith.constant 0 : index
    %82 = vector.load %arg9[%c0_67, %c0_68] : memref<159x128xf32, #tpu.memory_space<vmem>>, vector<159x128xf32>
    tpu.vector_store %arg9[%c0_67, %c0_68], %81 {strides = array<i32>} : memref<159x128xf32, #tpu.memory_space<vmem>>, vector<159x128xf32>,
    %cst_69 = arith.constant 0.000000e+00 : f32
    %83 = vector.broadcast %cst_69 : f32 to vector<30x128xf32>
    %c0_70 = arith.constant 0 : index
    %c0_71 = arith.constant 0 : index
    %84 = tpu.strided_load %arg9[%c0_70, %c0_71] {strides = array<i32: 5, 1>} : memref<159x128xf32, #tpu.memory_space<vmem>>, vector<30x128xf32>
    %85 = arith.truncf %84 : vector<30x128xf32> to vector<30x128xbf16>
    %c0_72 = arith.constant 0 : index
    %c0_73 = arith.constant 0 : index
    %c0_74 = arith.constant 0 : index
    %86 = vector.load %arg3[%c0_72, %c0_73, %c0_74] : memref<10x128x128xbf16, #tpu.memory_space<vmem>>, vector<1x128x128xbf16>
    %87 = vector.shape_cast %86 : vector<1x128x128xbf16> to vector<128x128xbf16>
    %cst_75 = arith.constant dense<0.000000e+00> : vector<30x128xf32>
    %88 = tpu.matmul %85, %87, %cst_75 {dimension_numbers = #tpu.dot_dimension_numbers<[1], [0], [0], [1], [0, 0, 1, 1], [], []>} : vector<30x128xbf16>, vector<128x128xbf16>, vector<30x128xf32> -> vector<30x128xf32>
    %89 = arith.addf %83, %88 : vector<30x128xf32>
    %c1_76 = arith.constant 1 : index
    %c0_77 = arith.constant 0 : index
    %90 = tpu.strided_load %arg9[%c1_76, %c0_77] {strides = array<i32: 5, 1>} : memref<159x128xf32, #tpu.memory_space<vmem>>, vector<30x128xf32>
    %91 = arith.truncf %90 : vector<30x128xf32> to vector<30x128xbf16>
    %c1_78 = arith.constant 1 : index
    %c0_79 = arith.constant 0 : index
    %c0_80 = arith.constant 0 : index
    %92 = vector.load %arg3[%c1_78, %c0_79, %c0_80] : memref<10x128x128xbf16, #tpu.memory_space<vmem>>, vector<1x128x128xbf16>
    %93 = vector.shape_cast %92 : vector<1x128x128xbf16> to vector<128x128xbf16>
    %cst_81 = arith.constant dense<0.000000e+00> : vector<30x128xf32>
    %94 = tpu.matmul %91, %93, %cst_81 {dimension_numbers = #tpu.dot_dimension_numbers<[1], [0], [0], [1], [0, 0, 1, 1], [], []>} : vector<30x128xbf16>, vector<128x128xbf16>, vector<30x128xf32> -> vector<30x128xf32>
    %95 = arith.addf %89, %94 : vector<30x128xf32>
    %c2_82 = arith.constant 2 : index
    %c0_83 = arith.constant 0 : index
    %96 = tpu.strided_load %arg9[%c2_82, %c0_83] {strides = array<i32: 5, 1>} : memref<159x128xf32, #tpu.memory_space<vmem>>, vector<30x128xf32>
    %97 = arith.truncf %96 : vector<30x128xf32> to vector<30x128xbf16>
    %c2_84 = arith.constant 2 : index
    %c0_85 = arith.constant 0 : index
    %c0_86 = arith.constant 0 : index
    %98 = vector.load %arg3[%c2_84, %c0_85, %c0_86] : memref<10x128x128xbf16, #tpu.memory_space<vmem>>, vector<1x128x128xbf16>
    %99 = vector.shape_cast %98 : vector<1x128x128xbf16> to vector<128x128xbf16>
    %cst_87 = arith.constant dense<0.000000e+00> : vector<30x128xf32>
    %100 = tpu.matmul %97, %99, %cst_87 {dimension_numbers = #tpu.dot_dimension_numbers<[1], [0], [0], [1], [0, 0, 1, 1], [], []>} : vector<30x128xbf16>, vector<128x128xbf16>, vector<30x128xf32> -> vector<30x128xf32>
    %101 = arith.addf %95, %100 : vector<30x128xf32>
    %c3_88 = arith.constant 3 : index
    %c0_89 = arith.constant 0 : index
    %102 = tpu.strided_load %arg9[%c3_88, %c0_89] {strides = array<i32: 5, 1>} : memref<159x128xf32, #tpu.memory_space<vmem>>, vector<30x128xf32>
    %103 = arith.truncf %102 : vector<30x128xf32> to vector<30x128xbf16>
    %c3_90 = arith.constant 3 : index
    %c0_91 = arith.constant 0 : index
    %c0_92 = arith.constant 0 : index
    %104 = vector.load %arg3[%c3_90, %c0_91, %c0_92] : memref<10x128x128xbf16, #tpu.memory_space<vmem>>, vector<1x128x128xbf16>
    %105 = vector.shape_cast %104 : vector<1x128x128xbf16> to vector<128x128xbf16>
    %cst_93 = arith.constant dense<0.000000e+00> : vector<30x128xf32>
    %106 = tpu.matmul %103, %105, %cst_93 {dimension_numbers = #tpu.dot_dimension_numbers<[1], [0], [0], [1], [0, 0, 1, 1], [], []>} : vector<30x128xbf16>, vector<128x128xbf16>, vector<30x128xf32> -> vector<30x128xf32>
    %107 = arith.addf %101, %106 : vector<30x128xf32>
    %c4_94 = arith.constant 4 : index
    %c0_95 = arith.constant 0 : index
    %108 = tpu.strided_load %arg9[%c4_94, %c0_95] {strides = array<i32: 5, 1>} : memref<159x128xf32, #tpu.memory_space<vmem>>, vector<30x128xf32>
    %109 = arith.truncf %108 : vector<30x128xf32> to vector<30x128xbf16>
    %c4_96 = arith.constant 4 : index
    %c0_97 = arith.constant 0 : index
    %c0_98 = arith.constant 0 : index
    %110 = vector.load %arg3[%c4_96, %c0_97, %c0_98] : memref<10x128x128xbf16, #tpu.memory_space<vmem>>, vector<1x128x128xbf16>
    %111 = vector.shape_cast %110 : vector<1x128x128xbf16> to vector<128x128xbf16>
    %cst_99 = arith.constant dense<0.000000e+00> : vector<30x128xf32>
    %112 = tpu.matmul %109, %111, %cst_99 {dimension_numbers = #tpu.dot_dimension_numbers<[1], [0], [0], [1], [0, 0, 1, 1], [], []>} : vector<30x128xbf16>, vector<128x128xbf16>, vector<30x128xf32> -> vector<30x128xf32>
    %113 = arith.addf %107, %112 : vector<30x128xf32>
    %c5_100 = arith.constant 5 : index
    %c0_101 = arith.constant 0 : index
    %114 = tpu.strided_load %arg9[%c5_100, %c0_101] {strides = array<i32: 5, 1>} : memref<159x128xf32, #tpu.memory_space<vmem>>, vector<30x128xf32>
    %115 = arith.truncf %114 : vector<30x128xf32> to vector<30x128xbf16>
    %c5_102 = arith.constant 5 : index
    %c0_103 = arith.constant 0 : index
    %c0_104 = arith.constant 0 : index
    %116 = vector.load %arg3[%c5_102, %c0_103, %c0_104] : memref<10x128x128xbf16, #tpu.memory_space<vmem>>, vector<1x128x128xbf16>
    %117 = vector.shape_cast %116 : vector<1x128x128xbf16> to vector<128x128xbf16>
    %cst_105 = arith.constant dense<0.000000e+00> : vector<30x128xf32>
    %118 = tpu.matmul %115, %117, %cst_105 {dimension_numbers = #tpu.dot_dimension_numbers<[1], [0], [0], [1], [0, 0, 1, 1], [], []>} : vector<30x128xbf16>, vector<128x128xbf16>, vector<30x128xf32> -> vector<30x128xf32>
    %119 = arith.addf %113, %118 : vector<30x128xf32>
    %c6_106 = arith.constant 6 : index
    %c0_107 = arith.constant 0 : index
    %120 = tpu.strided_load %arg9[%c6_106, %c0_107] {strides = array<i32: 5, 1>} : memref<159x128xf32, #tpu.memory_space<vmem>>, vector<30x128xf32>
    %121 = arith.truncf %120 : vector<30x128xf32> to vector<30x128xbf16>
    %c6_108 = arith.constant 6 : index
    %c0_109 = arith.constant 0 : index
    %c0_110 = arith.constant 0 : index
    %122 = vector.load %arg3[%c6_108, %c0_109, %c0_110] : memref<10x128x128xbf16, #tpu.memory_space<vmem>>, vector<1x128x128xbf16>
    %123 = vector.shape_cast %122 : vector<1x128x128xbf16> to vector<128x128xbf16>
    %cst_111 = arith.constant dense<0.000000e+00> : vector<30x128xf32>
    %124 = tpu.matmul %121, %123, %cst_111 {dimension_numbers = #tpu.dot_dimension_numbers<[1], [0], [0], [1], [0, 0, 1, 1], [], []>} : vector<30x128xbf16>, vector<128x128xbf16>, vector<30x128xf32> -> vector<30x128xf32>
    %125 = arith.addf %119, %124 : vector<30x128xf32>
    %c7_112 = arith.constant 7 : index
    %c0_113 = arith.constant 0 : index
    %126 = tpu.strided_load %arg9[%c7_112, %c0_113] {strides = array<i32: 5, 1>} : memref<159x128xf32, #tpu.memory_space<vmem>>, vector<30x128xf32>
    %127 = arith.truncf %126 : vector<30x128xf32> to vector<30x128xbf16>
    %c7_114 = arith.constant 7 : index
    %c0_115 = arith.constant 0 : index
    %c0_116 = arith.constant 0 : index
    %128 = vector.load %arg3[%c7_114, %c0_115, %c0_116] : memref<10x128x128xbf16, #tpu.memory_space<vmem>>, vector<1x128x128xbf16>
    %129 = vector.shape_cast %128 : vector<1x128x128xbf16> to vector<128x128xbf16>
    %cst_117 = arith.constant dense<0.000000e+00> : vector<30x128xf32>
    %130 = tpu.matmul %127, %129, %cst_117 {dimension_numbers = #tpu.dot_dimension_numbers<[1], [0], [0], [1], [0, 0, 1, 1], [], []>} : vector<30x128xbf16>, vector<128x128xbf16>, vector<30x128xf32> -> vector<30x128xf32>
    %131 = arith.addf %125, %130 : vector<30x128xf32>
    %c8_118 = arith.constant 8 : index
    %c0_119 = arith.constant 0 : index
    %132 = tpu.strided_load %arg9[%c8_118, %c0_119] {strides = array<i32: 5, 1>} : memref<159x128xf32, #tpu.memory_space<vmem>>, vector<30x128xf32>
    %133 = arith.truncf %132 : vector<30x128xf32> to vector<30x128xbf16>
    %c8_120 = arith.constant 8 : index
    %c0_121 = arith.constant 0 : index
    %c0_122 = arith.constant 0 : index
    %134 = vector.load %arg3[%c8_120, %c0_121, %c0_122] : memref<10x128x128xbf16, #tpu.memory_space<vmem>>, vector<1x128x128xbf16>
    %135 = vector.shape_cast %134 : vector<1x128x128xbf16> to vector<128x128xbf16>
    %cst_123 = arith.constant dense<0.000000e+00> : vector<30x128xf32>
    %136 = tpu.matmul %133, %135, %cst_123 {dimension_numbers = #tpu.dot_dimension_numbers<[1], [0], [0], [1], [0, 0, 1, 1], [], []>} : vector<30x128xbf16>, vector<128x128xbf16>, vector<30x128xf32> -> vector<30x128xf32>
    %137 = arith.addf %131, %136 : vector<30x128xf32>
    %c9_124 = arith.constant 9 : index
    %c0_125 = arith.constant 0 : index
    %138 = tpu.strided_load %arg9[%c9_124, %c0_125] {strides = array<i32: 5, 1>} : memref<159x128xf32, #tpu.memory_space<vmem>>, vector<30x128xf32>
    %139 = arith.truncf %138 : vector<30x128xf32> to vector<30x128xbf16>
    %c9_126 = arith.constant 9 : index
    %c0_127 = arith.constant 0 : index
    %c0_128 = arith.constant 0 : index
    %140 = vector.load %arg3[%c9_126, %c0_127, %c0_128] : memref<10x128x128xbf16, #tpu.memory_space<vmem>>, vector<1x128x128xbf16>
    %141 = vector.shape_cast %140 : vector<1x128x128xbf16> to vector<128x128xbf16>
    %cst_129 = arith.constant dense<0.000000e+00> : vector<30x128xf32>
    %142 = tpu.matmul %139, %141, %cst_129 {dimension_numbers = #tpu.dot_dimension_numbers<[1], [0], [0], [1], [0, 0, 1, 1], [], []>} : vector<30x128xbf16>, vector<128x128xbf16>, vector<30x128xf32> -> vector<30x128xf32>
    %143 = arith.addf %137, %142 : vector<30x128xf32>
    %c3_130 = arith.constant 3 : index
    %c0_131 = arith.constant 0 : index
    %144 = vector.load %arg7[%c3_130, %c0_131] : memref<11x128xf32, #tpu.memory_space<vmem>>, vector<1x128xf32>
    %145 = vector.broadcast %144 : vector<1x128xf32> to vector<30x128xf32>
    %146 = arith.addf %143, %145 : vector<30x128xf32>
    %cst_132 = arith.constant 0.000000e+00 : f32
    %147 = vector.broadcast %cst_132 : f32 to vector<30x128xf32>
    %148 = arith.maximumf %146, %147 : vector<30x128xf32>
    %c4_133 = arith.constant 4 : index
    %c0_134 = arith.constant 0 : index
    %149 = vector.load %arg7[%c4_133, %c0_134] : memref<11x128xf32, #tpu.memory_space<vmem>>, vector<1x128xf32>
    %150 = vector.broadcast %149 : vector<1x128xf32> to vector<30x128xf32>
    %151 = arith.mulf %148, %150 : vector<30x128xf32>
    %c5_135 = arith.constant 5 : index
    %c0_136 = arith.constant 0 : index
    %152 = vector.load %arg7[%c5_135, %c0_136] : memref<11x128xf32, #tpu.memory_space<vmem>>, vector<1x128xf32>
    %153 = vector.broadcast %152 : vector<1x128xf32> to vector<30x128xf32>
    %154 = arith.addf %151, %153 : vector<30x128xf32>
    %c0_137 = arith.constant 0 : index
    %c0_138 = arith.constant 0 : index
    %155 = vector.load %arg10[%c0_137, %c0_138] : memref<30x128xf32, #tpu.memory_space<vmem>>, vector<30x128xf32>
    tpu.vector_store %arg10[%c0_137, %c0_138], %154 {strides = array<i32>} : memref<30x128xf32, #tpu.memory_space<vmem>>, vector<30x128xf32>,
    %cst_139 = arith.constant 0.000000e+00 : f32
    %156 = vector.broadcast %cst_139 : f32 to vector<5x128xf32>
    %c0_140 = arith.constant 0 : index
    %c0_141 = arith.constant 0 : index
    %157 = tpu.strided_load %arg10[%c0_140, %c0_141] {strides = array<i32: 5, 1>} : memref<30x128xf32, #tpu.memory_space<vmem>>, vector<5x128xf32>
    %158 = arith.truncf %157 : vector<5x128xf32> to vector<5x128xbf16>
    %c0_142 = arith.constant 0 : index
    %c0_143 = arith.constant 0 : index
    %c0_144 = arith.constant 0 : index
    %159 = vector.load %arg4[%c0_142, %c0_143, %c0_144] : memref<10x128x128xbf16, #tpu.memory_space<vmem>>, vector<1x128x128xbf16>
    %160 = vector.shape_cast %159 : vector<1x128x128xbf16> to vector<128x128xbf16>
    %cst_145 = arith.constant dense<0.000000e+00> : vector<5x128xf32>
    %161 = tpu.matmul %158, %160, %cst_145 {dimension_numbers = #tpu.dot_dimension_numbers<[1], [0], [0], [1], [0, 0, 1, 1], [], []>} : vector<5x128xbf16>, vector<128x128xbf16>, vector<5x128xf32> -> vector<5x128xf32>
    %162 = arith.addf %156, %161 : vector<5x128xf32>
    %c1_146 = arith.constant 1 : index
    %c0_147 = arith.constant 0 : index
    %163 = tpu.strided_load %arg10[%c1_146, %c0_147] {strides = array<i32: 5, 1>} : memref<30x128xf32, #tpu.memory_space<vmem>>, vector<5x128xf32>
    %164 = arith.truncf %163 : vector<5x128xf32> to vector<5x128xbf16>
    %c1_148 = arith.constant 1 : index
    %c0_149 = arith.constant 0 : index
    %c0_150 = arith.constant 0 : index
    %165 = vector.load %arg4[%c1_148, %c0_149, %c0_150] : memref<10x128x128xbf16, #tpu.memory_space<vmem>>, vector<1x128x128xbf16>
    %166 = vector.shape_cast %165 : vector<1x128x128xbf16> to vector<128x128xbf16>
    %cst_151 = arith.constant dense<0.000000e+00> : vector<5x128xf32>
    %167 = tpu.matmul %164, %166, %cst_151 {dimension_numbers = #tpu.dot_dimension_numbers<[1], [0], [0], [1], [0, 0, 1, 1], [], []>} : vector<5x128xbf16>, vector<128x128xbf16>, vector<5x128xf32> -> vector<5x128xf32>
    %168 = arith.addf %162, %167 : vector<5x128xf32>
    %c2_152 = arith.constant 2 : index
    %c0_153 = arith.constant 0 : index
    %169 = tpu.strided_load %arg10[%c2_152, %c0_153] {strides = array<i32: 5, 1>} : memref<30x128xf32, #tpu.memory_space<vmem>>, vector<5x128xf32>
    %170 = arith.truncf %169 : vector<5x128xf32> to vector<5x128xbf16>
    %c2_154 = arith.constant 2 : index
    %c0_155 = arith.constant 0 : index
    %c0_156 = arith.constant 0 : index
    %171 = vector.load %arg4[%c2_154, %c0_155, %c0_156] : memref<10x128x128xbf16, #tpu.memory_space<vmem>>, vector<1x128x128xbf16>
    %172 = vector.shape_cast %171 : vector<1x128x128xbf16> to vector<128x128xbf16>
    %cst_157 = arith.constant dense<0.000000e+00> : vector<5x128xf32>
    %173 = tpu.matmul %170, %172, %cst_157 {dimension_numbers = #tpu.dot_dimension_numbers<[1], [0], [0], [1], [0, 0, 1, 1], [], []>} : vector<5x128xbf16>, vector<128x128xbf16>, vector<5x128xf32> -> vector<5x128xf32>
    %174 = arith.addf %168, %173 : vector<5x128xf32>
    %c3_158 = arith.constant 3 : index
    %c0_159 = arith.constant 0 : index
    %175 = tpu.strided_load %arg10[%c3_158, %c0_159] {strides = array<i32: 5, 1>} : memref<30x128xf32, #tpu.memory_space<vmem>>, vector<5x128xf32>
    %176 = arith.truncf %175 : vector<5x128xf32> to vector<5x128xbf16>
    %c3_160 = arith.constant 3 : index
    %c0_161 = arith.constant 0 : index
    %c0_162 = arith.constant 0 : index
    %177 = vector.load %arg4[%c3_160, %c0_161, %c0_162] : memref<10x128x128xbf16, #tpu.memory_space<vmem>>, vector<1x128x128xbf16>
    %178 = vector.shape_cast %177 : vector<1x128x128xbf16> to vector<128x128xbf16>
    %cst_163 = arith.constant dense<0.000000e+00> : vector<5x128xf32>
    %179 = tpu.matmul %176, %178, %cst_163 {dimension_numbers = #tpu.dot_dimension_numbers<[1], [0], [0], [1], [0, 0, 1, 1], [], []>} : vector<5x128xbf16>, vector<128x128xbf16>, vector<5x128xf32> -> vector<5x128xf32>
    %180 = arith.addf %174, %179 : vector<5x128xf32>
    %c4_164 = arith.constant 4 : index
    %c0_165 = arith.constant 0 : index
    %181 = tpu.strided_load %arg10[%c4_164, %c0_165] {strides = array<i32: 5, 1>} : memref<30x128xf32, #tpu.memory_space<vmem>>, vector<5x128xf32>
    %182 = arith.truncf %181 : vector<5x128xf32> to vector<5x128xbf16>
    %c4_166 = arith.constant 4 : index
    %c0_167 = arith.constant 0 : index
    %c0_168 = arith.constant 0 : index
    %183 = vector.load %arg4[%c4_166, %c0_167, %c0_168] : memref<10x128x128xbf16, #tpu.memory_space<vmem>>, vector<1x128x128xbf16>
    %184 = vector.shape_cast %183 : vector<1x128x128xbf16> to vector<128x128xbf16>
    %cst_169 = arith.constant dense<0.000000e+00> : vector<5x128xf32>
    %185 = tpu.matmul %182, %184, %cst_169 {dimension_numbers = #tpu.dot_dimension_numbers<[1], [0], [0], [1], [0, 0, 1, 1], [], []>} : vector<5x128xbf16>, vector<128x128xbf16>, vector<5x128xf32> -> vector<5x128xf32>
    %186 = arith.addf %180, %185 : vector<5x128xf32>
    %c5_170 = arith.constant 5 : index
    %c0_171 = arith.constant 0 : index
    %187 = tpu.strided_load %arg10[%c5_170, %c0_171] {strides = array<i32: 5, 1>} : memref<30x128xf32, #tpu.memory_space<vmem>>, vector<5x128xf32>
    %188 = arith.truncf %187 : vector<5x128xf32> to vector<5x128xbf16>
    %c5_172 = arith.constant 5 : index
    %c0_173 = arith.constant 0 : index
    %c0_174 = arith.constant 0 : index
    %189 = vector.load %arg4[%c5_172, %c0_173, %c0_174] : memref<10x128x128xbf16, #tpu.memory_space<vmem>>, vector<1x128x128xbf16>
    %190 = vector.shape_cast %189 : vector<1x128x128xbf16> to vector<128x128xbf16>
    %cst_175 = arith.constant dense<0.000000e+00> : vector<5x128xf32>
    %191 = tpu.matmul %188, %190, %cst_175 {dimension_numbers = #tpu.dot_dimension_numbers<[1], [0], [0], [1], [0, 0, 1, 1], [], []>} : vector<5x128xbf16>, vector<128x128xbf16>, vector<5x128xf32> -> vector<5x128xf32>
    %192 = arith.addf %186, %191 : vector<5x128xf32>
    %c6_176 = arith.constant 6 : index
    %c0_177 = arith.constant 0 : index
    %193 = tpu.strided_load %arg10[%c6_176, %c0_177] {strides = array<i32: 5, 1>} : memref<30x128xf32, #tpu.memory_space<vmem>>, vector<5x128xf32>
    %194 = arith.truncf %193 : vector<5x128xf32> to vector<5x128xbf16>
    %c6_178 = arith.constant 6 : index
    %c0_179 = arith.constant 0 : index
    %c0_180 = arith.constant 0 : index
    %195 = vector.load %arg4[%c6_178, %c0_179, %c0_180] : memref<10x128x128xbf16, #tpu.memory_space<vmem>>, vector<1x128x128xbf16>
    %196 = vector.shape_cast %195 : vector<1x128x128xbf16> to vector<128x128xbf16>
    %cst_181 = arith.constant dense<0.000000e+00> : vector<5x128xf32>
    %197 = tpu.matmul %194, %196, %cst_181 {dimension_numbers = #tpu.dot_dimension_numbers<[1], [0], [0], [1], [0, 0, 1, 1], [], []>} : vector<5x128xbf16>, vector<128x128xbf16>, vector<5x128xf32> -> vector<5x128xf32>
    %198 = arith.addf %192, %197 : vector<5x128xf32>
    %c7_182 = arith.constant 7 : index
    %c0_183 = arith.constant 0 : index
    %199 = tpu.strided_load %arg10[%c7_182, %c0_183] {strides = array<i32: 5, 1>} : memref<30x128xf32, #tpu.memory_space<vmem>>, vector<5x128xf32>
    %200 = arith.truncf %199 : vector<5x128xf32> to vector<5x128xbf16>
    %c7_184 = arith.constant 7 : index
    %c0_185 = arith.constant 0 : index
    %c0_186 = arith.constant 0 : index
    %201 = vector.load %arg4[%c7_184, %c0_185, %c0_186] : memref<10x128x128xbf16, #tpu.memory_space<vmem>>, vector<1x128x128xbf16>
    %202 = vector.shape_cast %201 : vector<1x128x128xbf16> to vector<128x128xbf16>
    %cst_187 = arith.constant dense<0.000000e+00> : vector<5x128xf32>
    %203 = tpu.matmul %200, %202, %cst_187 {dimension_numbers = #tpu.dot_dimension_numbers<[1], [0], [0], [1], [0, 0, 1, 1], [], []>} : vector<5x128xbf16>, vector<128x128xbf16>, vector<5x128xf32> -> vector<5x128xf32>
    %204 = arith.addf %198, %203 : vector<5x128xf32>
    %c8_188 = arith.constant 8 : index
    %c0_189 = arith.constant 0 : index
    %205 = tpu.strided_load %arg10[%c8_188, %c0_189] {strides = array<i32: 5, 1>} : memref<30x128xf32, #tpu.memory_space<vmem>>, vector<5x128xf32>
    %206 = arith.truncf %205 : vector<5x128xf32> to vector<5x128xbf16>
    %c8_190 = arith.constant 8 : index
    %c0_191 = arith.constant 0 : index
    %c0_192 = arith.constant 0 : index
    %207 = vector.load %arg4[%c8_190, %c0_191, %c0_192] : memref<10x128x128xbf16, #tpu.memory_space<vmem>>, vector<1x128x128xbf16>
    %208 = vector.shape_cast %207 : vector<1x128x128xbf16> to vector<128x128xbf16>
    %cst_193 = arith.constant dense<0.000000e+00> : vector<5x128xf32>
    %209 = tpu.matmul %206, %208, %cst_193 {dimension_numbers = #tpu.dot_dimension_numbers<[1], [0], [0], [1], [0, 0, 1, 1], [], []>} : vector<5x128xbf16>, vector<128x128xbf16>, vector<5x128xf32> -> vector<5x128xf32>
    %210 = arith.addf %204, %209 : vector<5x128xf32>
    %c9_194 = arith.constant 9 : index
    %c0_195 = arith.constant 0 : index
    %211 = tpu.strided_load %arg10[%c9_194, %c0_195] {strides = array<i32: 5, 1>} : memref<30x128xf32, #tpu.memory_space<vmem>>, vector<5x128xf32>
    %212 = arith.truncf %211 : vector<5x128xf32> to vector<5x128xbf16>
    %c9_196 = arith.constant 9 : index
    %c0_197 = arith.constant 0 : index
    %c0_198 = arith.constant 0 : index
    %213 = vector.load %arg4[%c9_196, %c0_197, %c0_198] : memref<10x128x128xbf16, #tpu.memory_space<vmem>>, vector<1x128x128xbf16>
    %214 = vector.shape_cast %213 : vector<1x128x128xbf16> to vector<128x128xbf16>
    %cst_199 = arith.constant dense<0.000000e+00> : vector<5x128xf32>
    %215 = tpu.matmul %212, %214, %cst_199 {dimension_numbers = #tpu.dot_dimension_numbers<[1], [0], [0], [1], [0, 0, 1, 1], [], []>} : vector<5x128xbf16>, vector<128x128xbf16>, vector<5x128xf32> -> vector<5x128xf32>
    %216 = arith.addf %210, %215 : vector<5x128xf32>
    %c6_200 = arith.constant 6 : index
    %c0_201 = arith.constant 0 : index
    %217 = vector.load %arg7[%c6_200, %c0_201] : memref<11x128xf32, #tpu.memory_space<vmem>>, vector<1x128xf32>
    %218 = vector.broadcast %217 : vector<1x128xf32> to vector<5x128xf32>
    %219 = arith.addf %216, %218 : vector<5x128xf32>
    %cst_202 = arith.constant 0.000000e+00 : f32
    %220 = vector.broadcast %cst_202 : f32 to vector<5x128xf32>
    %221 = arith.maximumf %219, %220 : vector<5x128xf32>
    %c7_203 = arith.constant 7 : index
    %c0_204 = arith.constant 0 : index
    %222 = vector.load %arg7[%c7_203, %c0_204] : memref<11x128xf32, #tpu.memory_space<vmem>>, vector<1x128xf32>
    %223 = vector.broadcast %222 : vector<1x128xf32> to vector<5x128xf32>
    %224 = arith.mulf %221, %223 : vector<5x128xf32>
    %c8_205 = arith.constant 8 : index
    %c0_206 = arith.constant 0 : index
    %225 = vector.load %arg7[%c8_205, %c0_206] : memref<11x128xf32, #tpu.memory_space<vmem>>, vector<1x128xf32>
    %226 = vector.broadcast %225 : vector<1x128xf32> to vector<5x128xf32>
    %227 = arith.addf %224, %226 : vector<5x128xf32>
    %cst_207 = arith.constant 0.000000e+00 : f32
    %228 = vector.broadcast %cst_207 : f32 to vector<1x128xf32>
    %229 = vector.extract_strided_slice %227 {offsets = [0, 0], sizes = [1, 128], strides = [1, 1]} : vector<5x128xf32> to vector<1x128xf32>
    %230 = arith.truncf %229 : vector<1x128xf32> to vector<1x128xbf16>
    %c0_208 = arith.constant 0 : index
    %c0_209 = arith.constant 0 : index
    %c0_210 = arith.constant 0 : index
    %231 = vector.load %arg5[%c0_208, %c0_209, %c0_210] : memref<5x128x128xbf16, #tpu.memory_space<vmem>>, vector<1x128x128xbf16>
    %232 = vector.shape_cast %231 : vector<1x128x128xbf16> to vector<128x128xbf16>
    %cst_211 = arith.constant dense<0.000000e+00> : vector<1x128xf32>
    %233 = tpu.matmul %230, %232, %cst_211 {dimension_numbers = #tpu.dot_dimension_numbers<[1], [0], [0], [1], [0, 0, 1, 1], [], []>} : vector<1x128xbf16>, vector<128x128xbf16>, vector<1x128xf32> -> vector<1x128xf32>
    %234 = arith.addf %228, %233 : vector<1x128xf32>
    %235 = vector.extract_strided_slice %227 {offsets = [1, 0], sizes = [1, 128], strides = [1, 1]} : vector<5x128xf32> to vector<1x128xf32>
    %236 = arith.truncf %235 : vector<1x128xf32> to vector<1x128xbf16>
    %c1_212 = arith.constant 1 : index
    %c0_213 = arith.constant 0 : index
    %c0_214 = arith.constant 0 : index
    %237 = vector.load %arg5[%c1_212, %c0_213, %c0_214] : memref<5x128x128xbf16, #tpu.memory_space<vmem>>, vector<1x128x128xbf16>
    %238 = vector.shape_cast %237 : vector<1x128x128xbf16> to vector<128x128xbf16>
    %cst_215 = arith.constant dense<0.000000e+00> : vector<1x128xf32>
    %239 = tpu.matmul %236, %238, %cst_215 {dimension_numbers = #tpu.dot_dimension_numbers<[1], [0], [0], [1], [0, 0, 1, 1], [], []>} : vector<1x128xbf16>, vector<128x128xbf16>, vector<1x128xf32> -> vector<1x128xf32>
    %240 = arith.addf %234, %239 : vector<1x128xf32>
    %241 = vector.extract_strided_slice %227 {offsets = [2, 0], sizes = [1, 128], strides = [1, 1]} : vector<5x128xf32> to vector<1x128xf32>
    %242 = arith.truncf %241 : vector<1x128xf32> to vector<1x128xbf16>
    %c2_216 = arith.constant 2 : index
    %c0_217 = arith.constant 0 : index
    %c0_218 = arith.constant 0 : index
    %243 = vector.load %arg5[%c2_216, %c0_217, %c0_218] : memref<5x128x128xbf16, #tpu.memory_space<vmem>>, vector<1x128x128xbf16>
    %244 = vector.shape_cast %243 : vector<1x128x128xbf16> to vector<128x128xbf16>
    %cst_219 = arith.constant dense<0.000000e+00> : vector<1x128xf32>
    %245 = tpu.matmul %242, %244, %cst_219 {dimension_numbers = #tpu.dot_dimension_numbers<[1], [0], [0], [1], [0, 0, 1, 1], [], []>} : vector<1x128xbf16>, vector<128x128xbf16>, vector<1x128xf32> -> vector<1x128xf32>
    %246 = arith.addf %240, %245 : vector<1x128xf32>
    %247 = vector.extract_strided_slice %227 {offsets = [3, 0], sizes = [1, 128], strides = [1, 1]} : vector<5x128xf32> to vector<1x128xf32>
    %248 = arith.truncf %247 : vector<1x128xf32> to vector<1x128xbf16>
    %c3_220 = arith.constant 3 : index
    %c0_221 = arith.constant 0 : index
    %c0_222 = arith.constant 0 : index
    %249 = vector.load %arg5[%c3_220, %c0_221, %c0_222] : memref<5x128x128xbf16, #tpu.memory_space<vmem>>, vector<1x128x128xbf16>
    %250 = vector.shape_cast %249 : vector<1x128x128xbf16> to vector<128x128xbf16>
    %cst_223 = arith.constant dense<0.000000e+00> : vector<1x128xf32>
    %251 = tpu.matmul %248, %250, %cst_223 {dimension_numbers = #tpu.dot_dimension_numbers<[1], [0], [0], [1], [0, 0, 1, 1], [], []>} : vector<1x128xbf16>, vector<128x128xbf16>, vector<1x128xf32> -> vector<1x128xf32>
    %252 = arith.addf %246, %251 : vector<1x128xf32>
    %253 = vector.extract_strided_slice %227 {offsets = [4, 0], sizes = [1, 128], strides = [1, 1]} : vector<5x128xf32> to vector<1x128xf32>
    %254 = arith.truncf %253 : vector<1x128xf32> to vector<1x128xbf16>
    %c4_224 = arith.constant 4 : index
    %c0_225 = arith.constant 0 : index
    %c0_226 = arith.constant 0 : index
    %255 = vector.load %arg5[%c4_224, %c0_225, %c0_226] : memref<5x128x128xbf16, #tpu.memory_space<vmem>>, vector<1x128x128xbf16>
    %256 = vector.shape_cast %255 : vector<1x128x128xbf16> to vector<128x128xbf16>
    %cst_227 = arith.constant dense<0.000000e+00> : vector<1x128xf32>
    %257 = tpu.matmul %254, %256, %cst_227 {dimension_numbers = #tpu.dot_dimension_numbers<[1], [0], [0], [1], [0, 0, 1, 1], [], []>} : vector<1x128xbf16>, vector<128x128xbf16>, vector<1x128xf32> -> vector<1x128xf32>
    %258 = arith.addf %252, %257 : vector<1x128xf32>
    %c9_228 = arith.constant 9 : index
    %c0_229 = arith.constant 0 : index
    %259 = vector.load %arg7[%c9_228, %c0_229] : memref<11x128xf32, #tpu.memory_space<vmem>>, vector<1x128xf32>
    %260 = arith.addf %258, %259 : vector<1x128xf32>
    %cst_230 = arith.constant 0.000000e+00 : f32
    %261 = vector.broadcast %cst_230 : f32 to vector<1x128xf32>
    %262 = arith.maximumf %260, %261 : vector<1x128xf32>
    %263 = arith.truncf %262 : vector<1x128xf32> to vector<1x128xbf16>
    %c0_231 = arith.constant 0 : index
    %c0_232 = arith.constant 0 : index
    %264 = vector.load %arg6[%c0_231, %c0_232] : memref<128x128xbf16, #tpu.memory_space<vmem>>, vector<128x128xbf16>
    %cst_233 = arith.constant dense<0.000000e+00> : vector<1x128xf32>
    %265 = tpu.matmul %263, %264, %cst_233 {dimension_numbers = #tpu.dot_dimension_numbers<[1], [0], [0], [1], [0, 0, 1, 1], [], []>} : vector<1x128xbf16>, vector<128x128xbf16>, vector<1x128xf32> -> vector<1x128xf32>
    %c10 = arith.constant 10 : index
    %c0_234 = arith.constant 0 : index
    %266 = vector.load %arg7[%c10, %c0_234] : memref<11x128xf32, #tpu.memory_space<vmem>>, vector<1x128xf32>
    %267 = arith.addf %265, %266 : vector<1x128xf32>
    %c0_235 = arith.constant 0 : index
    %c0_236 = arith.constant 0 : index
    %c0_237 = arith.constant 0 : index
    %268 = vector.load %arg8[%c0_235, %c0_236, %c0_237] : memref<1x1x128xf32, #tpu.memory_space<vmem>>, vector<1x1x128xf32>
    %269 = vector.shape_cast %268 : vector<1x1x128xf32> to vector<1x128xf32>
    %270 = vector.shape_cast %267 : vector<1x128xf32> to vector<1x1x128xf32>
    tpu.vector_store %arg8[%c0_235, %c0_236, %c0_237], %270 {strides = array<i32>} : memref<1x1x128xf32, #tpu.memory_space<vmem>>, vector<1x1x128xf32>,
    return
  }
  func.func @transform_0(%arg0: i32) -> (i32, i32, i32) {
    %c0_i32 = arith.constant 0 : i32
    %c0_i32_0 = arith.constant 0 : i32
    %c0_i32_1 = arith.constant 0 : i32
    return %arg0, %c0_i32, %c0_i32_0 : i32, i32, i32
  }
  func.func @transform_1(%arg0: i32) -> (i32, i32, i32) {
    %c0_i32 = arith.constant 0 : i32
    %c0_i32_0 = arith.constant 0 : i32
    %c0_i32_1 = arith.constant 0 : i32
    %c0_i32_2 = arith.constant 0 : i32
    return %c0_i32, %c0_i32_0, %c0_i32_1 : i32, i32, i32
  }
  func.func @transform_2(%arg0: i32) -> (i32, i32, i32) {
    %c0_i32 = arith.constant 0 : i32
    %c0_i32_0 = arith.constant 0 : i32
    %c0_i32_1 = arith.constant 0 : i32
    %c0_i32_2 = arith.constant 0 : i32
    return %c0_i32, %c0_i32_0, %c0_i32_1 : i32, i32, i32
  }
  func.func @transform_3(%arg0: i32) -> (i32, i32, i32) {
    %c0_i32 = arith.constant 0 : i32
    %c0_i32_0 = arith.constant 0 : i32
    %c0_i32_1 = arith.constant 0 : i32
    %c0_i32_2 = arith.constant 0 : i32
    return %c0_i32, %c0_i32_0, %c0_i32_1 : i32, i32, i32
  }
  func.func @transform_4(%arg0: i32) -> (i32, i32, i32) {
    %c0_i32 = arith.constant 0 : i32
    %c0_i32_0 = arith.constant 0 : i32
    %c0_i32_1 = arith.constant 0 : i32
    %c0_i32_2 = arith.constant 0 : i32
    return %c0_i32, %c0_i32_0, %c0_i32_1 : i32, i32, i32
  }
  func.func @transform_5(%arg0: i32) -> (i32, i32) {
    %c0_i32 = arith.constant 0 : i32
    %c0_i32_0 = arith.constant 0 : i32
    %c0_i32_1 = arith.constant 0 : i32
    return %c0_i32, %c0_i32_0 : i32, i32
  }
  func.func @transform_6(%arg0: i32) -> (i32, i32) {
    %c0_i32 = arith.constant 0 : i32
    %c0_i32_0 = arith.constant 0 : i32
    %c0_i32_1 = arith.constant 0 : i32
    return %c0_i32, %c0_i32_0 : i32, i32
  }
  func.func @transform_7(%arg0: i32) -> (i32, i32, i32) {
    %c0_i32 = arith.constant 0 : i32
    %c0_i32_0 = arith.constant 0 : i32
    %c0_i32_1 = arith.constant 0 : i32
    return %arg0, %c0_i32, %c0_i32_0 : i32, i32, i32
  }
}

</mosaic_0001>

<llo_original>
// kernel: forward.1
$region0: #{forward.1}
  #allocation0 [shape = 'u32[]', space=smem, size = 0x4, offset = 0x4, fixed_abs, tag = 'smem constant byte address 0x4 - core index']
  #allocation1 [shape = 'u32[144,128]{1,0:T(1,128)}', space=vmem, size = 0x12000, scoped, tag = 'internal scratch']
  #allocation2 [shape = 'f32[159,128]{1,0:T(8,128)}', space=vmem, size = 0x14000, scoped, tag = 'scratch operand']
  #allocation3 [shape = 'f32[30,128]{1,0:T(8,128)}', space=vmem, size = 0x4000, scoped, tag = 'scratch operand']
  %s0 = inlined_call_operand.vmem [shape: f32[2,801,40], index: 0, kind: input, shape index: {}]
  %s1 = inlined_call_operand.vmem [shape: bf16[10,40,128], index: 1, kind: input, shape index: {}]
  %s2 = inlined_call_operand.vmem [shape: bf16[10,128,128], index: 2, kind: input, shape index: {}]
  %s3 = inlined_call_operand.vmem [shape: bf16[10,128,128], index: 3, kind: input, shape index: {}]
  %s4 = inlined_call_operand.vmem [shape: bf16[5,128,128], index: 4, kind: input, shape index: {}]
  %s5 = inlined_call_operand.vmem [shape: bf16[128,128], index: 5, kind: input, shape index: {}]
  %s6 = inlined_call_operand.vmem [shape: f32[11,128], index: 6, kind: input, shape index: {}]
  %s7 = inlined_call_operand.hbm [shape: f32[2,1,128], index: 7, kind: output, shape index: {}]
  %s8 = sld [smem:[#allocation0]]
  $region61: #{forward.1} parent=0
    _
  %s10 = ssub.s32 1, %s8
  %s11 = scalar_select 0, %s10, %s8
  $region1: #{forward.1} parent=0
    #allocation4 [shape = 'u8[1024]{0}', space=vmem, size = 0x400, scoped, tag = 'output window, operand 0']
    #allocation5 [shape = 's32[2]{0}', space=sflag, size = 0x8, scoped, tag = 'scoped memory for forward.1']
    %12 = vsyncpa [#allocation5], 0
    %s13 = scalar_lea.sflag [#allocation5], 1
    %14 = vsyncpa %s13, 0
    loop: start=0, step=1, limit=4
    $region2: #{forward.1} parent=1 // loop_pre_header
      _
    $region3: #{forward.1} parent=1 // loop_header
      %s16 = sphi 0, %s20
      %p17 = scmp.ge.s32.totalorder %s16, 4
      %s26 = sphi 0, %s28
      %s29 = sphi 0, %s26
      %s30 = sphi 0, %s29
      %s46 = sphi 0, %s30
      %s50 = sphi 0, %s50
      %s52 = sphi 0, %s50
      %s53 = sphi 0, %s52
      %s67 = sphi 0, %s53
      %s71 = sphi 0, %s71
      %s73 = sphi 0, %s71
      %s74 = sphi 0, %s73
      %s88 = sphi 0, %s74
      %s92 = sphi 0, %s92
      %s94 = sphi 0, %s92
      %s95 = sphi 0, %s94
      %s109 = sphi 0, %s95
      %s113 = sphi 0, %s113
      %s115 = sphi 0, %s113
      %s116 = sphi 0, %s115
      %s130 = sphi 0, %s116
      %s134 = sphi 0, %s134
      %s136 = sphi 0, %s134
      %s137 = sphi 0, %s136
      %s151 = sphi 0, %s137
      %s155 = sphi 0, %s155
      %s157 = sphi 0, %s155
      %s158 = sphi 0, %s157
      %s172 = sphi 0, %s158
      %s178 = sphi 0, %s180
      %s181 = sphi 0, %s178
      %s182 = sphi 0, %s181
      %s198 = sphi 0, %s182
    $region4: #{forward.1} parent=1 // loop_header_branch
      %19 = sbr.rel (%p17) target = $region8
    $region5: #{forward.1} parent=1 // loop_body
      %s21 = ssub.s32 %s16, 1
      %s22 = ssub.s32 %s16, 2
      %s23 = sadd.s32 %s16, 1
      %s24 = ssub.s32 %s16, %s23
      %p25 = scmp.eq.s32.totalorder %s24, 0
      %s27 = sadd.s32 %s26, 1
      %s28 = scalar_select %p25, %s26, %s27
      %p31 = pneg %p25
      %p32 = scmp.eq.s32.totalorder %s16, 1
      %p33 = por %p31, %p32
      %p34 = scmp.ne.s32.totalorder %s26, %s29
      %p35 = scmp.eq.s32.totalorder %s16, 0
      %p36 = por %p34, %p35
      %p37 = scmp.ne.s32.totalorder %s26, %s29
      %p38 = scmp.eq.s32.totalorder %s21, 1
      %p39 = por %p37, %p38
      %p40 = scmp.ne.s32.totalorder %s29, %s30
      %p41 = scmp.eq.s32.totalorder %s21, 0
      %p42 = por %p40, %p41
      %p43 = scmp.ne.s32.totalorder %s29, %s30
      %p44 = scmp.eq.s32.totalorder %s22, 1
      %p45 = por %p43, %p44
      %p47 = scmp.ne.s32.totalorder %s30, %s46
      %p48 = scmp.eq.s32.totalorder %s22, 0
      %p49 = por %p47, %p48
      %s51 = sadd.s32 %s50, 1
      %p54 = scmp.eq.s32.totalorder %s16, 1
      %p55 = scmp.ne.s32.totalorder %s50, %s52
      %p56 = scmp.eq.s32.totalorder %s16, 0
      %p57 = por %p55, %p56
      %p58 = scmp.ne.s32.totalorder %s50, %s52
      %p59 = scmp.eq.s32.totalorder %s21, 1
      %p60 = por %p58, %p59
      %p61 = scmp.ne.s32.totalorder %s52, %s53
      %p62 = scmp.eq.s32.totalorder %s21, 0
      %p63 = por %p61, %p62
      %p64 = scmp.ne.s32.totalorder %s52, %s53
      %p65 = scmp.eq.s32.totalorder %s22, 1
      %p66 = por %p64, %p65
      %p68 = scmp.ne.s32.totalorder %s53, %s67
      %p69 = scmp.eq.s32.totalorder %s22, 0
      %p70 = por %p68, %p69
      %s72 = sadd.s32 %s71, 1
      %p75 = scmp.eq.s32.totalorder %s16, 1
      %p76 = scmp.ne.s32.totalorder %s71, %s73
      %p77 = scmp.eq.s32.totalorder %s16, 0
      %p78 = por %p76, %p77
      %p79 = scmp.ne.s32.totalorder %s71, %s73
      %p80 = scmp.eq.s32.totalorder %s21, 1
      %p81 = por %p79, %p80
      %p82 = scmp.ne.s32.totalorder %s73, %s74
      %p83 = scmp.eq.s32.totalorder %s21, 0
      %p84 = por %p82, %p83
      %p85 = scmp.ne.s32.totalorder %s73, %s74
      %p86 = scmp.eq.s32.totalorder %s22, 1
      %p87 = por %p85, %p86
      %p89 = scmp.ne.s32.totalorder %s74, %s88
      %p90 = scmp.eq.s32.totalorder %s22, 0
      %p91 = por %p89, %p90
      %s93 = sadd.s32 %s92, 1
      %p96 = scmp.eq.s32.totalorder %s16, 1
      %p97 = scmp.ne.s32.totalorder %s92, %s94
      %p98 = scmp.eq.s32.totalorder %s16, 0
      %p99 = por %p97, %p98
      %p100 = scmp.ne.s32.totalorder %s92, %s94
      %p101 = scmp.eq.s32.totalorder %s21, 1
      %p102 = por %p100, %p101
      %p103 = scmp.ne.s32.totalorder %s94, %s95
      %p104 = scmp.eq.s32.totalorder %s21, 0
      %p105 = por %p103, %p104
      %p106 = scmp.ne.s32.totalorder %s94, %s95
      %p107 = scmp.eq.s32.totalorder %s22, 1
      %p108 = por %p106, %p107
      %p110 = scmp.ne.s32.totalorder %s95, %s109
      %p111 = scmp.eq.s32.totalorder %s22, 0
      %p112 = por %p110, %p111
      %s114 = sadd.s32 %s113, 1
      %p117 = scmp.eq.s32.totalorder %s16, 1
      %p118 = scmp.ne.s32.totalorder %s113, %s115
      %p119 = scmp.eq.s32.totalorder %s16, 0
      %p120 = por %p118, %p119
      %p121 = scmp.ne.s32.totalorder %s113, %s115
      %p122 = scmp.eq.s32.totalorder %s21, 1
      %p123 = por %p121, %p122
      %p124 = scmp.ne.s32.totalorder %s115, %s116
      %p125 = scmp.eq.s32.totalorder %s21, 0
      %p126 = por %p124, %p125
      %p127 = scmp.ne.s32.totalorder %s115, %s116
      %p128 = scmp.eq.s32.totalorder %s22, 1
      %p129 = por %p127, %p128
      %p131 = scmp.ne.s32.totalorder %s116, %s130
      %p132 = scmp.eq.s32.totalorder %s22, 0
      %p133 = por %p131, %p132
      %s135 = sadd.s32 %s134, 1
      %p138 = scmp.eq.s32.totalorder %s16, 1
      %p139 = scmp.ne.s32.totalorder %s134, %s136
      %p140 = scmp.eq.s32.totalorder %s16, 0
      %p141 = por %p139, %p140
      %p142 = scmp.ne.s32.totalorder %s134, %s136
      %p143 = scmp.eq.s32.totalorder %s21, 1
      %p144 = por %p142, %p143
      %p145 = scmp.ne.s32.totalorder %s136, %s137
      %p146 = scmp.eq.s32.totalorder %s21, 0
      %p147 = por %p145, %p146
      %p148 = scmp.ne.s32.totalorder %s136, %s137
      %p149 = scmp.eq.s32.totalorder %s22, 1
      %p150 = por %p148, %p149
      %p152 = scmp.ne.s32.totalorder %s137, %s151
      %p153 = scmp.eq.s32.totalorder %s22, 0
      %p154 = por %p152, %p153
      %s156 = sadd.s32 %s155, 1
      %p159 = scmp.eq.s32.totalorder %s16, 1
      %p160 = scmp.ne.s32.totalorder %s155, %s157
      %p161 = scmp.eq.s32.totalorder %s16, 0
      %p162 = por %p160, %p161
      %p163 = scmp.ne.s32.totalorder %s155, %s157
      %p164 = scmp.eq.s32.totalorder %s21, 1
      %p165 = por %p163, %p164
      %p166 = scmp.ne.s32.totalorder %s157, %s158
      %p167 = scmp.eq.s32.totalorder %s21, 0
      %p168 = por %p166, %p167
      %p169 = scmp.ne.s32.totalorder %s157, %s158
      %p170 = scmp.eq.s32.totalorder %s22, 1
      %p171 = por %p169, %p170
      %p173 = scmp.ne.s32.totalorder %s158, %s172
      %p174 = scmp.eq.s32.totalorder %s22, 0
      %p175 = por %p173, %p174
      %s176 = ssub.s32 %s16, %s23
      %p177 = scmp.eq.s32.totalorder %s176, 0
      %s179 = sadd.s32 %s178, 1
      %s180 = scalar_select %p177, %s178, %s179
      %p183 = pneg %p177
      %p184 = scmp.eq.s32.totalorder %s16, 1
      %p185 = por %p183, %p184
      %p186 = scmp.ne.s32.totalorder %s178, %s181
      %p187 = scmp.eq.s32.totalorder %s16, 0
      %p188 = por %p186, %p187
      %p189 = scmp.ne.s32.totalorder %s178, %s181
      %p190 = scmp.eq.s32.totalorder %s21, 1
      %p191 = por %p189, %p190
      %p192 = scmp.ne.s32.totalorder %s181, %s182
      %p193 = scmp.eq.s32.totalorder %s21, 0
      %p194 = por %p192, %p193
      %p195 = scmp.ne.s32.totalorder %s181, %s182
      %p196 = scmp.eq.s32.totalorder %s22, 1
      %p197 = por %p195, %p196
      %p199 = scmp.ne.s32.totalorder %s182, %s198
      %p200 = scmp.eq.s32.totalorder %s22, 0
      %p201 = por %p199, %p200
      %p202 = scmp.le.s32.totalorder 1, %s16
      %p203 = scmp.lt.s32.totalorder %s16, 3
      %p204 = pnand %p202, %p203
      %p205 = pneg %p204
      // Predicated region
      $region9: #{forward.1} parent=5 // pred_check
        _
      $region10: #{forward.1} parent=5 // pred_check_branch
        %207 = sbr.rel (%p204) target = $region12
      $region11: #{forward.1} parent=5 // pred_region
        %s208 = ssub.s32 %s16, 1
        // Predicated region
        $region13: #{forward.1} parent=11 // pred_check
          %p209 = pneg %p63
        $region14: #{forward.1} parent=11 // pred_check_branch
          %211 = sbr.rel (%p209) target = $region16
        $region15: #{forward.1} parent=11 // pred_region
          _
        $region16: #{forward.1} parent=11 // pred_fallthru
          _
        // Predicated region
        $region17: #{forward.1} parent=11 // pred_check
          %p212 = pneg %p84
        $region18: #{forward.1} parent=11 // pred_check_branch
          %214 = sbr.rel (%p212) target = $region20
        $region19: #{forward.1} parent=11 // pred_region
          _
        $region20: #{forward.1} parent=11 // pred_fallthru
          _
        // Predicated region
        $region21: #{forward.1} parent=11 // pred_check
          %p215 = pneg %p105
        $region22: #{forward.1} parent=11 // pred_check_branch
          %217 = sbr.rel (%p215) target = $region24
        $region23: #{forward.1} parent=11 // pred_region
          _
        $region24: #{forward.1} parent=11 // pred_fallthru
          _
        // Predicated region
        $region25: #{forward.1} parent=11 // pred_check
          %p218 = pneg %p126
        $region26: #{forward.1} parent=11 // pred_check_branch
          %220 = sbr.rel (%p218) target = $region28
        $region27: #{forward.1} parent=11 // pred_region
          _
        $region28: #{forward.1} parent=11 // pred_fallthru
          _
        // Predicated region
        $region29: #{forward.1} parent=11 // pred_check
          %p221 = pneg %p147
        $region30: #{forward.1} parent=11 // pred_check_branch
          %223 = sbr.rel (%p221) target = $region32
        $region31: #{forward.1} parent=11 // pred_region
          _
        $region32: #{forward.1} parent=11 // pred_fallthru
          _
        // Predicated region
        $region33: #{forward.1} parent=11 // pred_check
          %p224 = pneg %p168
        $region34: #{forward.1} parent=11 // pred_check_branch
          %226 = sbr.rel (%p224) target = $region36
        $region35: #{forward.1} parent=11 // pred_region
          _
        $region36: #{forward.1} parent=11 // pred_fallthru
          _
      $region12: #{forward.1} parent=5 // pred_fallthru
        _
      %p227 = scmp.lt.s32.totalorder %s16, 2
      // Predicated region
      $region37: #{forward.1} parent=5 // pred_check
        %p228 = pneg %p227
      $region38: #{forward.1} parent=5 // pred_check_branch
        %230 = sbr.rel (%p228) target = $region40
      $region39: #{forward.1} parent=5 // pred_region
        // Predicated region
        $region41: #{forward.1} parent=39 // pred_check
          %p231 = pneg %p36
        $region42: #{forward.1} parent=39 // pred_check_branch
          %233 = sbr.rel (%p231) target = $region44
        $region43: #{forward.1} parent=39 // pred_region
          %p234 = scmp.lt.s32.totalorder %s16, 1
          %s235 = scalar_select %p234, %s16, 1
          %s236 = smul.addr %s235, 101
          %s237 = smul.addr %s236, 8
          %s238 = scalar_lea.vmem %s0, %s237
        $region44: #{forward.1} parent=39 // pred_fallthru
          _
      $region40: #{forward.1} parent=5 // pred_fallthru
        _
      %p239 = scmp.le.s32.totalorder 1, %s16
      %p240 = scmp.lt.s32.totalorder %s16, 3
      %p241 = pnand %p239, %p240
      %p242 = pneg %p241
      // Predicated region
      $region45: #{forward.1} parent=5 // pred_check
        _
      $region46: #{forward.1} parent=5 // pred_check_branch
        %244 = sbr.rel (%p241) target = $region48
      $region47: #{forward.1} parent=5 // pred_region
        %s245 = ssub.s32 %s16, 1
        %p246 = scmp.lt.s32.totalorder %s21, 1
        %s247 = scalar_select %p246, %s21, 1
        %s248 = smul.addr %s247, 101
        %s249 = smul.addr %s248, 8
        %s250 = scalar_lea.vmem %s0, %s249
        %p251 = pneg %p42
        %p252 = pneg %p39
        %p253 = pneg %p63
        %p254 = pneg %p60
        %p255 = pneg %p84
        %p256 = pneg %p81
        %p257 = pneg %p105
        %p258 = pneg %p102
        %p259 = pneg %p126
        %p260 = pneg %p123
        %p261 = pneg %p147
        %p262 = pneg %p144
        %p263 = pneg %p168
        %p264 = pneg %p165
        %p265 = pneg %p194
        %p266 = pneg %p191
        %s267 = sand.u32 %s181, 1
        %s268 = scalar_lea.sflag [#allocation5], %s267
        %s269 = sand.u32 %s181, 1
        %s270 = scalar_lea.vmem [#allocation4], %s269
        %p271 = scmp.lt.s32.totalorder %s21, 1
        %s272 = scalar_select %p271, %s21, 1
        %s273 = smul.addr %s272, 101
        %s274 = smul.addr %s273, 8
        %s275 = scalar_lea.vmem %s0, %s274
        %v277 = vld [vmem:[%s275] ss:$5 sm:$0xff]
        %s278 = scalar_lea.vmem %s275, 40
        %v279 = vld [vmem:[%s278] ss:$5 sm:$0xff]
        %s280 = scalar_lea.vmem %s275, 80
        %v281 = vld [vmem:[%s280] ss:$5 sm:$0xff]
        %s282 = scalar_lea.vmem %s275, 120
        %v283 = vld [vmem:[%s282] ss:$5 sm:$0xff]
        %s284 = scalar_lea.vmem %s275, 160
        %v285 = vld [vmem:[%s284] ss:$5 sm:$0xff]
        %s286 = scalar_lea.vmem %s275, 200
        %v287 = vld [vmem:[%s286] ss:$5 sm:$0xff]
        %s288 = scalar_lea.vmem %s275, 240
        %v289 = vld [vmem:[%s288] ss:$5 sm:$0xff]
        %s290 = scalar_lea.vmem %s275, 280
        %v291 = vld [vmem:[%s290] ss:$5 sm:$0xff]
        %s292 = scalar_lea.vmem %s275, 320
        %v293 = vld [vmem:[%s292] ss:$5 sm:$0xff]
        %s294 = scalar_lea.vmem %s275, 360
        %v295 = vld [vmem:[%s294] ss:$5 sm:$0xff]
        %s296 = scalar_lea.vmem %s275, 400
        %v297 = vld [vmem:[%s296] ss:$5 sm:$0xff]
        %s298 = scalar_lea.vmem %s275, 440
        %v299 = vld [vmem:[%s298] ss:$5 sm:$0xff]
        %s300 = scalar_lea.vmem %s275, 480
        %v301 = vld [vmem:[%s300] ss:$5 sm:$0xff]
        %s302 = scalar_lea.vmem %s275, 520
        %v303 = vld [vmem:[%s302] ss:$5 sm:$0xff]
        %s304 = scalar_lea.vmem %s275, 560
        %v305 = vld [vmem:[%s304] ss:$5 sm:$0xff]
        %s306 = scalar_lea.vmem %s275, 600
        %v307 = vld [vmem:[%s306] ss:$5 sm:$0xff]
        %s308 = scalar_lea.vmem %s275, 640
        %v309 = vld [vmem:[%s308] ss:$5 sm:$0xff]
        %s310 = scalar_lea.vmem %s275, 680
        %v311 = vld [vmem:[%s310] ss:$5 sm:$0xff]
        %s312 = scalar_lea.vmem %s275, 720
        %v313 = vld [vmem:[%s312] ss:$5 sm:$0xff]
        %s314 = scalar_lea.vmem %s275, 760
        %v315 = vld [vmem:[%s314] ss:$5 sm:$0x7f]
        %v316 = vpack.c.bf16 %v279, %v277
        %v317 = vpack.c.bf16 %v283, %v281
        %v318 = vpack.c.bf16 %v287, %v285
        %v319 = vpack.c.bf16 %v291, %v289
        %v320 = vpack.c.bf16 %v295, %v293
        %v321 = vpack.c.bf16 %v299, %v297
        %v322 = vpack.c.bf16 %v303, %v301
        %v323 = vpack.c.bf16 %v307, %v305
        %v324 = vpack.c.bf16 %v311, %v309
        %v325 = vpack.c.bf16 %v315, %v313
        %v326 = vld [vmem:[%s1] sm:$0xf]
        %v327 = vld [vmem:[%s1 + $0x4] sm:$0xf]
        %v328 = vld [vmem:[%s1 + $0x8] sm:$0xf]
        %v329 = vld [vmem:[%s1 + $0xc] sm:$0xf]
        %v330 = vld [vmem:[%s1 + $0x10] sm:$0xf]
        %s331 = scalar_lea.vmem %s275, 1
        %v332 = vld [vmem:[%s331] ss:$5 sm:$0xff]
        %s333 = scalar_lea.vmem %s275, 41
        %v334 = vld [vmem:[%s333] ss:$5 sm:$0xff]
        %s335 = scalar_lea.vmem %s275, 81
        %v336 = vld [vmem:[%s335] ss:$5 sm:$0xff]
        %s337 = scalar_lea.vmem %s275, 121
        %v338 = vld [vmem:[%s337] ss:$5 sm:$0xff]
        %s339 = scalar_lea.vmem %s275, 161
        %v340 = vld [vmem:[%s339] ss:$5 sm:$0xff]
        %s341 = scalar_lea.vmem %s275, 201
        %v342 = vld [vmem:[%s341] ss:$5 sm:$0xff]
        %s343 = scalar_lea.vmem %s275, 241
        %v344 = vld [vmem:[%s343] ss:$5 sm:$0xff]
        %s345 = scalar_lea.vmem %s275, 281
        %v346 = vld [vmem:[%s345] ss:$5 sm:$0xff]
        %s347 = scalar_lea.vmem %s275, 321
        %v348 = vld [vmem:[%s347] ss:$5 sm:$0xff]
        %s349 = scalar_lea.vmem %s275, 361
        %v350 = vld [vmem:[%s349] ss:$5 sm:$0xff]
        %s351 = scalar_lea.vmem %s275, 401
        %v352 = vld [vmem:[%s351] ss:$5 sm:$0xff]
        %s353 = scalar_lea.vmem %s275, 441
        %v354 = vld [vmem:[%s353] ss:$5 sm:$0xff]
        %s355 = scalar_lea.vmem %s275, 481
        %v356 = vld [vmem:[%s355] ss:$5 sm:$0xff]
        %s357 = scalar_lea.vmem %s275, 521
        %v358 = vld [vmem:[%s357] ss:$5 sm:$0xff]
        %s359 = scalar_lea.vmem %s275, 561
        %v360 = vld [vmem:[%s359] ss:$5 sm:$0xff]
        %s361 = scalar_lea.vmem %s275, 601
        %v362 = vld [vmem:[%s361] ss:$5 sm:$0xff]
        %s363 = scalar_lea.vmem %s275, 641
        %v364 = vld [vmem:[%s363] ss:$5 sm:$0xff]
        %s365 = scalar_lea.vmem %s275, 681
        %v366 = vld [vmem:[%s365] ss:$5 sm:$0xff]
        %s367 = scalar_lea.vmem %s275, 721
        %v368 = vld [vmem:[%s367] ss:$5 sm:$0xff]
        %s369 = scalar_lea.vmem %s275, 761
        %v370 = vld [vmem:[%s369] ss:$5 sm:$0x7f]
        %v371 = vpack.c.bf16 %v334, %v332
        %v372 = vpack.c.bf16 %v338, %v336
        %v373 = vpack.c.bf16 %v342, %v340
        %v374 = vpack.c.bf16 %v346, %v344
        %v375 = vpack.c.bf16 %v350, %v348
        %v376 = vpack.c.bf16 %v354, %v352
        %v377 = vpack.c.bf16 %v358, %v356
        %v378 = vpack.c.bf16 %v362, %v360
        %v379 = vpack.c.bf16 %v366, %v364
        %v380 = vpack.c.bf16 %v370, %v368
        %s381 = scalar_lea.vmem %s1, 20
        %v382 = vld [vmem:[%s381] sm:$0xf]
        %v383 = vld [vmem:[%s381 + $0x4] sm:$0xf]
        %v384 = vld [vmem:[%s381 + $0x8] sm:$0xf]
        %v385 = vld [vmem:[%s381 + $0xc] sm:$0xf]
        %v386 = vld [vmem:[%s381 + $0x10] sm:$0xf]
        %v392 = vunpack.c.l.b16 %v382
        %v393 = vunpack.c.l.b16 %v383
        %v394 = vunpack.c.l.b16 %v384
        %v395 = vunpack.c.l.b16 %v385
        %v396 = vunpack.c.l.b16 %v386
        %v397 = vpack.c.b16 %v393, %v392
        %v398 = vpack.c.b16 %v395, %v394
        %v399 = vpack.c.b16 %v396, %v396
        %vm402 = vcmask 326656
        %v404 = vsel %vm402, %v371, 0
        %v407 = vsel %vm402, %v372, 0
        %v410 = vsel %vm402, %v373, 0
        %v413 = vsel %vm402, %v374, 0
        %v416 = vsel %vm402, %v375, 0
        %v419 = vsel %vm402, %v376, 0
        %v422 = vsel %vm402, %v377, 0
        %v425 = vsel %vm402, %v378, 0
        %v428 = vsel %vm402, %v379, 0
        %v431 = vsel %vm402, %v380, 0
        %vm433 = vcmask 1043456
        %v435 = vsel %vm433, %v399, 0
        %437 = vmatprep.subr.bf16.mxu0 0
        %438 = vmatpush1.bf16.msra.mxu0 0
        %439 = vmatprep.subr.bf16.mxu0 0
        %440 = vmatpush1.bf16.msra.mxu0 0
        %441 = vmatprep.subr.bf16.mxu0 0
        %442 = vmatpush1.bf16.msra.mxu0 0
        %443 = vmatprep.subr.bf16.mxu0 0
        %444 = vmatpush1.bf16.msra.mxu0 0
        %445 = vmatprep.subr.bf16.mxu0 0
        %446 = vmatpush1.bf16.msra.mxu0 0
        %447 = vmatprep.subr.bf16.mxu0 0
        %448 = vmatpush1.bf16.msra.mxu0 %v435
        %449 = vmatprep.subr.bf16.mxu0 0
        %450 = vmatpush1.bf16.msra.mxu0 %v398
        %451 = vmatprep.subr.bf16.mxu0 0
        %452 = vmatpush1.bf16.msra.mxu0 %v397
        %453 = vmatprep.subr.bf16.mxu0 0
        %454 = vmatpush2.bf16.msra.mxu0 0
        %455 = vmatprep.subr.bf16.mxu0 0
        %456 = vmatpush2.bf16.msra.mxu0 0
        %457 = vmatprep.subr.bf16.mxu0 0
        %458 = vmatpush2.bf16.msra.mxu0 0
        %459 = vmatprep.subr.bf16.mxu0 0
        %460 = vmatpush2.bf16.msra.mxu0 0
        %461 = vmatprep.subr.bf16.mxu0 0
        %462 = vmatpush2.bf16.msra.mxu0 0
        %463 = vmatprep.subr.bf16.mxu0 0
        %464 = vmatpush2.bf16.msra.mxu0 0
        %465 = vmatprep.subr.bf16.mxu0 0
        %466 = vmatpush2.bf16.msra.mxu0 0
        %467 = vmatprep.subr.bf16.mxu0 0
        %468 = vmatpush2.bf16.msra.mxu0 0
        %469 = vmatprep.mubr.bf16.mxu0 0
        %470 = vmatmul.mubr.bf16.gmra.mxu0 %v404
        %v471 = vpop.f32.mrf.mxu0
        %v472 = vadd.f32 0.0, %v471
        %v473 = vpop.f32.mrf.mxu0
        %v474 = vpop.f32.mrf.mxu0
        %v475 = vadd.f32 0.0, %v474
        %v476 = vpop.f32.mrf.mxu0
        %477 = vmatprep.mubr.bf16.mxu0 0
        %478 = vmatmul.mubr.bf16.gmra.mxu0 %v407
        %v479 = vpop.f32.mrf.mxu0
        %v480 = vadd.f32 0.0, %v479
        %v481 = vpop.f32.mrf.mxu0
        %v482 = vpop.f32.mrf.mxu0
        %v483 = vadd.f32 0.0, %v482
        %v484 = vpop.f32.mrf.mxu0
        %485 = vmatprep.mubr.bf16.mxu0 0
        %486 = vmatmul.mubr.bf16.gmra.mxu0 %v410
        %v487 = vpop.f32.mrf.mxu0
        %v488 = vadd.f32 0.0, %v487
        %v489 = vpop.f32.mrf.mxu0
        %v490 = vpop.f32.mrf.mxu0
        %v491 = vadd.f32 0.0, %v490
        %v492 = vpop.f32.mrf.mxu0
        %493 = vmatprep.mubr.bf16.mxu0 0
        %494 = vmatmul.mubr.bf16.gmra.mxu0 %v413
        %v495 = vpop.f32.mrf.mxu0
        %v496 = vadd.f32 0.0, %v495
        %v497 = vpop.f32.mrf.mxu0
        %v498 = vpop.f32.mrf.mxu0
        %v499 = vadd.f32 0.0, %v498
        %v500 = vpop.f32.mrf.mxu0
        %501 = vmatprep.mubr.bf16.mxu0 0
        %502 = vmatmul.mubr.bf16.gmra.mxu0 %v416
        %v503 = vpop.f32.mrf.mxu0
        %v504 = vadd.f32 0.0, %v503
        %v505 = vpop.f32.mrf.mxu0
        %v506 = vpop.f32.mrf.mxu0
        %v507 = vadd.f32 0.0, %v506
        %v508 = vpop.f32.mrf.mxu0
        %509 = vmatprep.mubr.bf16.mxu0 0
        %510 = vmatmul.mubr.bf16.gmra.mxu0 %v419
        %v511 = vpop.f32.mrf.mxu0
        %v512 = vadd.f32 0.0, %v511
        %v513 = vpop.f32.mrf.mxu0
        %v514 = vpop.f32.mrf.mxu0
        %v515 = vadd.f32 0.0, %v514
        %v516 = vpop.f32.mrf.mxu0
        %517 = vmatprep.mubr.bf16.mxu0 0
        %518 = vmatmul.mubr.bf16.gmra.mxu0 %v422
        %v519 = vpop.f32.mrf.mxu0
        %v520 = vadd.f32 0.0, %v519
        %v521 = vpop.f32.mrf.mxu0
        %v522 = vpop.f32.mrf.mxu0
        %v523 = vadd.f32 0.0, %v522
        %v524 = vpop.f32.mrf.mxu0
        %525 = vmatprep.mubr.bf16.mxu0 0
        %526 = vmatmul.mubr.bf16.gmra.mxu0 %v425
        %v527 = vpop.f32.mrf.mxu0
        %v528 = vadd.f32 0.0, %v527
        %v529 = vpop.f32.mrf.mxu0
        %v530 = vpop.f32.mrf.mxu0
        %v531 = vadd.f32 0.0, %v530
        %v532 = vpop.f32.mrf.mxu0
        %533 = vmatprep.mubr.bf16.mxu0 0
        %534 = vmatmul.mubr.bf16.gmra.mxu0 %v428
        %v535 = vpop.f32.mrf.mxu0
        %v536 = vadd.f32 0.0, %v535
        %v537 = vpop.f32.mrf.mxu0
        %v538 = vpop.f32.mrf.mxu0
        %v539 = vadd.f32 0.0, %v538
        %v540 = vpop.f32.mrf.mxu0
        %541 = vmatprep.mubr.bf16.mxu0 0
        %542 = vmatmul.mubr.bf16.gmra.mxu0 %v431
        %v543 = vpop.f32.mrf.mxu0
        %v544 = vadd.f32 0.0, %v543
        %v545 = vpop.f32.mrf.mxu0
        %v546 = vpop.f32.mrf.mxu0
        %v547 = vadd.f32 0.0, %v546
        %v548 = vpop.f32.mrf.mxu0
        %549 = vdwg.mxu0
        %v555 = vunpack.c.l.b16 %v326
        %v556 = vunpack.c.l.b16 %v327
        %v557 = vunpack.c.l.b16 %v328
        %v558 = vunpack.c.l.b16 %v329
        %v559 = vunpack.c.l.b16 %v330
        %v560 = vpack.c.b16 %v556, %v555
        %v561 = vpack.c.b16 %v558, %v557
        %v562 = vpack.c.b16 %v559, %v559
        %v566 = vsel %vm402, %v316, 0
        %v569 = vsel %vm402, %v317, 0
        %v572 = vsel %vm402, %v318, 0
        %v575 = vsel %vm402, %v319, 0
        %v578 = vsel %vm402, %v320, 0
        %v581 = vsel %vm402, %v321, 0
        %v584 = vsel %vm402, %v322, 0
        %v587 = vsel %vm402, %v323, 0
        %v590 = vsel %vm402, %v324, 0
        %v593 = vsel %vm402, %v325, 0
        %v596 = vsel %vm433, %v562, 0
        %598 = vmatprep.subr.bf16.mxu0 0
        %599 = vmatpush1.bf16.msra.mxu0 0
        %600 = vmatprep.subr.bf16.mxu0 0
        %601 = vmatpush1.bf16.msra.mxu0 0
        %602 = vmatprep.subr.bf16.mxu0 0
        %603 = vmatpush1.bf16.msra.mxu0 0
        %604 = vmatprep.subr.bf16.mxu0 0
        %605 = vmatpush1.bf16.msra.mxu0 0
        %606 = vmatprep.subr.bf16.mxu0 0
        %607 = vmatpush1.bf16.msra.mxu0 0
        %608 = vmatprep.subr.bf16.mxu0 0
        %609 = vmatpush1.bf16.msra.mxu0 %v596
        %610 = vmatprep.subr.bf16.mxu0 0
        %611 = vmatpush1.bf16.msra.mxu0 %v561
        %612 = vmatprep.subr.bf16.mxu0 0
        %613 = vmatpush1.bf16.msra.mxu0 %v560
        %614 = vmatprep.subr.bf16.mxu0 0
        %615 = vmatpush2.bf16.msra.mxu0 0
        %616 = vmatprep.subr.bf16.mxu0 0
        %617 = vmatpush2.bf16.msra.mxu0 0
        %618 = vmatprep.subr.bf16.mxu0 0
        %619 = vmatpush2.bf16.msra.mxu0 0
        %620 = vmatprep.subr.bf16.mxu0 0
        %621 = vmatpush2.bf16.msra.mxu0 0
        %622 = vmatprep.subr.bf16.mxu0 0
        %623 = vmatpush2.bf16.msra.mxu0 0
        %624 = vmatprep.subr.bf16.mxu0 0
        %625 = vmatpush2.bf16.msra.mxu0 0
        %626 = vmatprep.subr.bf16.mxu0 0
        %627 = vmatpush2.bf16.msra.mxu0 0
        %628 = vmatprep.subr.bf16.mxu0 0
        %629 = vmatpush2.bf16.msra.mxu0 0
        %630 = vmatprep.mubr.bf16.mxu0 0
        %631 = vmatmul.mubr.bf16.gmra.mxu0 %v566
        %v632 = vpop.f32.mrf.mxu0
        %v633 = vadd.f32 %v472, %v632
        %v634 = vpop.f32.mrf.mxu0
        %v635 = vpop.f32.mrf.mxu0
        %v636 = vadd.f32 %v475, %v635
        %v637 = vpop.f32.mrf.mxu0
        %638 = vmatprep.mubr.bf16.mxu0 0
        %639 = vmatmul.mubr.bf16.gmra.mxu0 %v569
        %v640 = vpop.f32.mrf.mxu0
        %v641 = vadd.f32 %v480, %v640
        %v642 = vpop.f32.mrf.mxu0
        %v643 = vpop.f32.mrf.mxu0
        %v644 = vadd.f32 %v483, %v643
        %v645 = vpop.f32.mrf.mxu0
        %646 = vmatprep.mubr.bf16.mxu0 0
        %647 = vmatmul.mubr.bf16.gmra.mxu0 %v572
        %v648 = vpop.f32.mrf.mxu0
        %v649 = vadd.f32 %v488, %v648
        %v650 = vpop.f32.mrf.mxu0
        %v651 = vpop.f32.mrf.mxu0
        %v652 = vadd.f32 %v491, %v651
        %v653 = vpop.f32.mrf.mxu0
        %654 = vmatprep.mubr.bf16.mxu0 0
        %655 = vmatmul.mubr.bf16.gmra.mxu0 %v575
        %v656 = vpop.f32.mrf.mxu0
        %v657 = vadd.f32 %v496, %v656
        %v658 = vpop.f32.mrf.mxu0
        %v659 = vpop.f32.mrf.mxu0
        %v660 = vadd.f32 %v499, %v659
        %v661 = vpop.f32.mrf.mxu0
        %662 = vmatprep.mubr.bf16.mxu0 0
        %663 = vmatmul.mubr.bf16.gmra.mxu0 %v578
        %v664 = vpop.f32.mrf.mxu0
        %v665 = vadd.f32 %v504, %v664
        %v666 = vpop.f32.mrf.mxu0
        %v667 = vpop.f32.mrf.mxu0
        %v668 = vadd.f32 %v507, %v667
        %v669 = vpop.f32.mrf.mxu0
        %670 = vmatprep.mubr.bf16.mxu0 0
        %671 = vmatmul.mubr.bf16.gmra.mxu0 %v581
        %v672 = vpop.f32.mrf.mxu0
        %v673 = vadd.f32 %v512, %v672
        %v674 = vpop.f32.mrf.mxu0
        %v675 = vpop.f32.mrf.mxu0
        %v676 = vadd.f32 %v515, %v675
        %v677 = vpop.f32.mrf.mxu0
        %678 = vmatprep.mubr.bf16.mxu0 0
        %679 = vmatmul.mubr.bf16.gmra.mxu0 %v584
        %v680 = vpop.f32.mrf.mxu0
        %v681 = vadd.f32 %v520, %v680
        %v682 = vpop.f32.mrf.mxu0
        %v683 = vpop.f32.mrf.mxu0
        %v684 = vadd.f32 %v523, %v683
        %v685 = vpop.f32.mrf.mxu0
        %686 = vmatprep.mubr.bf16.mxu0 0
        %687 = vmatmul.mubr.bf16.gmra.mxu0 %v587
        %v688 = vpop.f32.mrf.mxu0
        %v689 = vadd.f32 %v528, %v688
        %v690 = vpop.f32.mrf.mxu0
        %v691 = vpop.f32.mrf.mxu0
        %v692 = vadd.f32 %v531, %v691
        %v693 = vpop.f32.mrf.mxu0
        %694 = vmatprep.mubr.bf16.mxu0 0
        %695 = vmatmul.mubr.bf16.gmra.mxu0 %v590
        %v696 = vpop.f32.mrf.mxu0
        %v697 = vadd.f32 %v536, %v696
        %v698 = vpop.f32.mrf.mxu0
        %v699 = vpop.f32.mrf.mxu0
        %v700 = vadd.f32 %v539, %v699
        %v701 = vpop.f32.mrf.mxu0
        %702 = vmatprep.mubr.bf16.mxu0 0
        %703 = vmatmul.mubr.bf16.gmra.mxu0 %v593
        %v704 = vpop.f32.mrf.mxu0
        %v705 = vadd.f32 %v544, %v704
        %v706 = vpop.f32.mrf.mxu0
        %v707 = vpop.f32.mrf.mxu0
        %v708 = vadd.f32 %v547, %v707
        %v709 = vpop.f32.mrf.mxu0
        %710 = vdwg.mxu0
        %s711 = scalar_lea.vmem %s275, 2
        %v712 = vld [vmem:[%s711] ss:$5 sm:$0xff]
        %s713 = scalar_lea.vmem %s275, 42
        %v714 = vld [vmem:[%s713] ss:$5 sm:$0xff]
        %s715 = scalar_lea.vmem %s275, 82
        %v716 = vld [vmem:[%s715] ss:$5 sm:$0xff]
        %s717 = scalar_lea.vmem %s275, 122
        %v718 = vld [vmem:[%s717] ss:$5 sm:$0xff]
        %s719 = scalar_lea.vmem %s275, 162
        %v720 = vld [vmem:[%s719] ss:$5 sm:$0xff]
        %s721 = scalar_lea.vmem %s275, 202
        %v722 = vld [vmem:[%s721] ss:$5 sm:$0xff]
        %s723 = scalar_lea.vmem %s275, 242
        %v724 = vld [vmem:[%s723] ss:$5 sm:$0xff]
        %s725 = scalar_lea.vmem %s275, 282
        %v726 = vld [vmem:[%s725] ss:$5 sm:$0xff]
        %s727 = scalar_lea.vmem %s275, 322
        %v728 = vld [vmem:[%s727] ss:$5 sm:$0xff]
        %s729 = scalar_lea.vmem %s275, 362
        %v730 = vld [vmem:[%s729] ss:$5 sm:$0xff]
        %s731 = scalar_lea.vmem %s275, 402
        %v732 = vld [vmem:[%s731] ss:$5 sm:$0xff]
        %s733 = scalar_lea.vmem %s275, 442
        %v734 = vld [vmem:[%s733] ss:$5 sm:$0xff]
        %s735 = scalar_lea.vmem %s275, 482
        %v736 = vld [vmem:[%s735] ss:$5 sm:$0xff]
        %s737 = scalar_lea.vmem %s275, 522
        %v738 = vld [vmem:[%s737] ss:$5 sm:$0xff]
        %s739 = scalar_lea.vmem %s275, 562
        %v740 = vld [vmem:[%s739] ss:$5 sm:$0xff]
        %s741 = scalar_lea.vmem %s275, 602
        %v742 = vld [vmem:[%s741] ss:$5 sm:$0xff]
        %s743 = scalar_lea.vmem %s275, 642
        %v744 = vld [vmem:[%s743] ss:$5 sm:$0xff]
        %s745 = scalar_lea.vmem %s275, 682
        %v746 = vld [vmem:[%s745] ss:$5 sm:$0xff]
        %s747 = scalar_lea.vmem %s275, 722
        %v748 = vld [vmem:[%s747] ss:$5 sm:$0xff]
        %s749 = scalar_lea.vmem %s275, 762
        %v750 = vld [vmem:[%s749] ss:$5 sm:$0x7f]
        %v751 = vpack.c.bf16 %v714, %v712
        %v752 = vpack.c.bf16 %v718, %v716
        %v753 = vpack.c.bf16 %v722, %v720
        %v754 = vpack.c.bf16 %v726, %v724
        %v755 = vpack.c.bf16 %v730, %v728
        %v756 = vpack.c.bf16 %v734, %v732
        %v757 = vpack.c.bf16 %v738, %v736
        %v758 = vpack.c.bf16 %v742, %v740
        %v759 = vpack.c.bf16 %v746, %v744
        %v760 = vpack.c.bf16 %v750, %v748
        %s761 = scalar_lea.vmem %s1, 40
        %v762 = vld [vmem:[%s761] sm:$0xf]
        %v763 = vld [vmem:[%s761 + $0x4] sm:$0xf]
        %v764 = vld [vmem:[%s761 + $0x8] sm:$0xf]
        %v765 = vld [vmem:[%s761 + $0xc] sm:$0xf]
        %v766 = vld [vmem:[%s761 + $0x10] sm:$0xf]
        %v772 = vunpack.c.l.b16 %v762
        %v773 = vunpack.c.l.b16 %v763
        %v774 = vunpack.c.l.b16 %v764
        %v775 = vunpack.c.l.b16 %v765
        %v776 = vunpack.c.l.b16 %v766
        %v777 = vpack.c.b16 %v773, %v772
        %v778 = vpack.c.b16 %v775, %v774
        %v779 = vpack.c.b16 %v776, %v776
        %v783 = vsel %vm402, %v751, 0
        %v786 = vsel %vm402, %v752, 0
        %v789 = vsel %vm402, %v753, 0
        %v792 = vsel %vm402, %v754, 0
        %v795 = vsel %vm402, %v755, 0
        %v798 = vsel %vm402, %v756, 0
        %v801 = vsel %vm402, %v757, 0
        %v804 = vsel %vm402, %v758, 0
        %v807 = vsel %vm402, %v759, 0
        %v810 = vsel %vm402, %v760, 0
        %v813 = vsel %vm433, %v779, 0
        %815 = vmatprep.subr.bf16.mxu0 0
        %816 = vmatpush1.bf16.msra.mxu0 0
        %817 = vmatprep.subr.bf16.mxu0 0
        %818 = vmatpush1.bf16.msra.mxu0 0
        %819 = vmatprep.subr.bf16.mxu0 0
        %820 = vmatpush1.bf16.msra.mxu0 0
        %821 = vmatprep.subr.bf16.mxu0 0
        %822 = vmatpush1.bf16.msra.mxu0 0
        %823 = vmatprep.subr.bf16.mxu0 0
        %824 = vmatpush1.bf16.msra.mxu0 0
        %825 = vmatprep.subr.bf16.mxu0 0
        %826 = vmatpush1.bf16.msra.mxu0 %v813
        %827 = vmatprep.subr.bf16.mxu0 0
        %828 = vmatpush1.bf16.msra.mxu0 %v778
        %829 = vmatprep.subr.bf16.mxu0 0
        %830 = vmatpush1.bf16.msra.mxu0 %v777
        %831 = vmatprep.subr.bf16.mxu0 0
        %832 = vmatpush2.bf16.msra.mxu0 0
        %833 = vmatprep.subr.bf16.mxu0 0
        %834 = vmatpush2.bf16.msra.mxu0 0
        %835 = vmatprep.subr.bf16.mxu0 0
        %836 = vmatpush2.bf16.msra.mxu0 0
        %837 = vmatprep.subr.bf16.mxu0 0
        %838 = vmatpush2.bf16.msra.mxu0 0
        %839 = vmatprep.subr.bf16.mxu0 0
        %840 = vmatpush2.bf16.msra.mxu0 0
        %841 = vmatprep.subr.bf16.mxu0 0
        %842 = vmatpush2.bf16.msra.mxu0 0
        %843 = vmatprep.subr.bf16.mxu0 0
        %844 = vmatpush2.bf16.msra.mxu0 0
        %845 = vmatprep.subr.bf16.mxu0 0
        %846 = vmatpush2.bf16.msra.mxu0 0
        %847 = vmatprep.mubr.bf16.mxu0 0
        %848 = vmatmul.mubr.bf16.gmra.mxu0 %v783
        %v849 = vpop.f32.mrf.mxu0
        %v850 = vadd.f32 0.0, %v849
        %v851 = vpop.f32.mrf.mxu0
        %v852 = vpop.f32.mrf.mxu0
        %v853 = vadd.f32 0.0, %v852
        %v854 = vpop.f32.mrf.mxu0
        %855 = vmatprep.mubr.bf16.mxu0 0
        %856 = vmatmul.mubr.bf16.gmra.mxu0 %v786
        %v857 = vpop.f32.mrf.mxu0
        %v858 = vadd.f32 0.0, %v857
        %v859 = vpop.f32.mrf.mxu0
        %v860 = vpop.f32.mrf.mxu0
        %v861 = vadd.f32 0.0, %v860
        %v862 = vpop.f32.mrf.mxu0
        %863 = vmatprep.mubr.bf16.mxu0 0
        %864 = vmatmul.mubr.bf16.gmra.mxu0 %v789
        %v865 = vpop.f32.mrf.mxu0
        %v866 = vadd.f32 0.0, %v865
        %v867 = vpop.f32.mrf.mxu0
        %v868 = vpop.f32.mrf.mxu0
        %v869 = vadd.f32 0.0, %v868
        %v870 = vpop.f32.mrf.mxu0
        %871 = vmatprep.mubr.bf16.mxu0 0
        %872 = vmatmul.mubr.bf16.gmra.mxu0 %v792
        %v873 = vpop.f32.mrf.mxu0
        %v874 = vadd.f32 0.0, %v873
        %v875 = vpop.f32.mrf.mxu0
        %v876 = vpop.f32.mrf.mxu0
        %v877 = vadd.f32 0.0, %v876
        %v878 = vpop.f32.mrf.mxu0
        %879 = vmatprep.mubr.bf16.mxu0 0
        %880 = vmatmul.mubr.bf16.gmra.mxu0 %v795
        %v881 = vpop.f32.mrf.mxu0
        %v882 = vadd.f32 0.0, %v881
        %v883 = vpop.f32.mrf.mxu0
        %v884 = vpop.f32.mrf.mxu0
        %v885 = vadd.f32 0.0, %v884
        %v886 = vpop.f32.mrf.mxu0
        %887 = vmatprep.mubr.bf16.mxu0 0
        %888 = vmatmul.mubr.bf16.gmra.mxu0 %v798
        %v889 = vpop.f32.mrf.mxu0
        %v890 = vadd.f32 0.0, %v889
        %v891 = vpop.f32.mrf.mxu0
        %v892 = vpop.f32.mrf.mxu0
        %v893 = vadd.f32 0.0, %v892
        %v894 = vpop.f32.mrf.mxu0
        %895 = vmatprep.mubr.bf16.mxu0 0
        %896 = vmatmul.mubr.bf16.gmra.mxu0 %v801
        %v897 = vpop.f32.mrf.mxu0
        %v898 = vadd.f32 0.0, %v897
        %v899 = vpop.f32.mrf.mxu0
        %v900 = vpop.f32.mrf.mxu0
        %v901 = vadd.f32 0.0, %v900
        %v902 = vpop.f32.mrf.mxu0
        %903 = vmatprep.mubr.bf16.mxu0 0
        %904 = vmatmul.mubr.bf16.gmra.mxu0 %v804
        %v905 = vpop.f32.mrf.mxu0
        %v906 = vadd.f32 0.0, %v905
        %v907 = vpop.f32.mrf.mxu0
        %v908 = vpop.f32.mrf.mxu0
        %v909 = vadd.f32 0.0, %v908
        %v910 = vpop.f32.mrf.mxu0
        %911 = vmatprep.mubr.bf16.mxu0 0
        %912 = vmatmul.mubr.bf16.gmra.mxu0 %v807
        %v913 = vpop.f32.mrf.mxu0
        %v914 = vadd.f32 0.0, %v913
        %v915 = vpop.f32.mrf.mxu0
        %v916 = vpop.f32.mrf.mxu0
        %v917 = vadd.f32 0.0, %v916
        %v918 = vpop.f32.mrf.mxu0
        %919 = vmatprep.mubr.bf16.mxu0 0
        %920 = vmatmul.mubr.bf16.gmra.mxu0 %v810
        %v921 = vpop.f32.mrf.mxu0
        %v922 = vadd.f32 0.0, %v921
        %v923 = vpop.f32.mrf.mxu0
        %v924 = vpop.f32.mrf.mxu0
        %v925 = vadd.f32 0.0, %v924
        %v926 = vpop.f32.mrf.mxu0
        %927 = vdwg.mxu0
        %v928 = vadd.f32 %v633, %v850
        %v929 = vadd.f32 %v636, %v853
        %v930 = vadd.f32 %v641, %v858
        %v931 = vadd.f32 %v644, %v861
        %v932 = vadd.f32 %v649, %v866
        %v933 = vadd.f32 %v652, %v869
        %v934 = vadd.f32 %v657, %v874
        %v935 = vadd.f32 %v660, %v877
        %v936 = vadd.f32 %v665, %v882
        %v937 = vadd.f32 %v668, %v885
        %v938 = vadd.f32 %v673, %v890
        %v939 = vadd.f32 %v676, %v893
        %v940 = vadd.f32 %v681, %v898
        %v941 = vadd.f32 %v684, %v901
        %v942 = vadd.f32 %v689, %v906
        %v943 = vadd.f32 %v692, %v909
        %v944 = vadd.f32 %v697, %v914
        %v945 = vadd.f32 %v700, %v917
        %v946 = vadd.f32 %v705, %v922
        %v947 = vadd.f32 %v708, %v925
        %s948 = scalar_lea.vmem %s275, 3
        %v949 = vld [vmem:[%s948] ss:$5 sm:$0xff]
        %s950 = scalar_lea.vmem %s275, 43
        %v951 = vld [vmem:[%s950] ss:$5 sm:$0xff]
        %s952 = scalar_lea.vmem %s275, 83
        %v953 = vld [vmem:[%s952] ss:$5 sm:$0xff]
        %s954 = scalar_lea.vmem %s275, 123
        %v955 = vld [vmem:[%s954] ss:$5 sm:$0xff]
        %s956 = scalar_lea.vmem %s275, 163
        %v957 = vld [vmem:[%s956] ss:$5 sm:$0xff]
        %s958 = scalar_lea.vmem %s275, 203
        %v959 = vld [vmem:[%s958] ss:$5 sm:$0xff]
        %s960 = scalar_lea.vmem %s275, 243
        %v961 = vld [vmem:[%s960] ss:$5 sm:$0xff]
        %s962 = scalar_lea.vmem %s275, 283
        %v963 = vld [vmem:[%s962] ss:$5 sm:$0xff]
        %s964 = scalar_lea.vmem %s275, 323
        %v965 = vld [vmem:[%s964] ss:$5 sm:$0xff]
        %s966 = scalar_lea.vmem %s275, 363
        %v967 = vld [vmem:[%s966] ss:$5 sm:$0xff]
        %s968 = scalar_lea.vmem %s275, 403
        %v969 = vld [vmem:[%s968] ss:$5 sm:$0xff]
        %s970 = scalar_lea.vmem %s275, 443
        %v971 = vld [vmem:[%s970] ss:$5 sm:$0xff]
        %s972 = scalar_lea.vmem %s275, 483
        %v973 = vld [vmem:[%s972] ss:$5 sm:$0xff]
        %s974 = scalar_lea.vmem %s275, 523
        %v975 = vld [vmem:[%s974] ss:$5 sm:$0xff]
        %s976 = scalar_lea.vmem %s275, 563
        %v977 = vld [vmem:[%s976] ss:$5 sm:$0xff]
        %s978 = scalar_lea.vmem %s275, 603
        %v979 = vld [vmem:[%s978] ss:$5 sm:$0xff]
        %s980 = scalar_lea.vmem %s275, 643
        %v981 = vld [vmem:[%s980] ss:$5 sm:$0xff]
        %s982 = scalar_lea.vmem %s275, 683
        %v983 = vld [vmem:[%s982] ss:$5 sm:$0xff]
        %s984 = scalar_lea.vmem %s275, 723
        %v985 = vld [vmem:[%s984] ss:$5 sm:$0xff]
        %s986 = scalar_lea.vmem %s275, 763
        %v987 = vld [vmem:[%s986] ss:$5 sm:$0x7f]
        %v988 = vpack.c.bf16 %v951, %v949
        %v989 = vpack.c.bf16 %v955, %v953
        %v990 = vpack.c.bf16 %v959, %v957
        %v991 = vpack.c.bf16 %v963, %v961
        %v992 = vpack.c.bf16 %v967, %v965
        %v993 = vpack.c.bf16 %v971, %v969
        %v994 = vpack.c.bf16 %v975, %v973
        %v995 = vpack.c.bf16 %v979, %v977
        %v996 = vpack.c.bf16 %v983, %v981
        %v997 = vpack.c.bf16 %v987, %v985
        %s998 = scalar_lea.vmem %s1, 60
        %v999 = vld [vmem:[%s998] sm:$0xf]
        %v1000 = vld [vmem:[%s998 + $0x4] sm:$0xf]
        %v1001 = vld [vmem:[%s998 + $0x8] sm:$0xf]
        %v1002 = vld [vmem:[%s998 + $0xc] sm:$0xf]
        %v1003 = vld [vmem:[%s998 + $0x10] sm:$0xf]
        %v1009 = vunpack.c.l.b16 %v999
        %v1010 = vunpack.c.l.b16 %v1000
        %v1011 = vunpack.c.l.b16 %v1001
        %v1012 = vunpack.c.l.b16 %v1002
        %v1013 = vunpack.c.l.b16 %v1003
        %v1014 = vpack.c.b16 %v1010, %v1009
        %v1015 = vpack.c.b16 %v1012, %v1011
        %v1016 = vpack.c.b16 %v1013, %v1013
        %v1020 = vsel %vm402, %v988, 0
        %v1023 = vsel %vm402, %v989, 0
        %v1026 = vsel %vm402, %v990, 0
        %v1029 = vsel %vm402, %v991, 0
        %v1032 = vsel %vm402, %v992, 0
        %v1035 = vsel %vm402, %v993, 0
        %v1038 = vsel %vm402, %v994, 0
        %v1041 = vsel %vm402, %v995, 0
        %v1044 = vsel %vm402, %v996, 0
        %v1047 = vsel %vm402, %v997, 0
        %v1050 = vsel %vm433, %v1016, 0
        %1052 = vmatprep.subr.bf16.mxu0 0
        %1053 = vmatpush1.bf16.msra.mxu0 0
        %1054 = vmatprep.subr.bf16.mxu0 0
        %1055 = vmatpush1.bf16.msra.mxu0 0
        %1056 = vmatprep.subr.bf16.mxu0 0
        %1057 = vmatpush1.bf16.msra.mxu0 0
        %1058 = vmatprep.subr.bf16.mxu0 0
        %1059 = vmatpush1.bf16.msra.mxu0 0
        %1060 = vmatprep.subr.bf16.mxu0 0
        %1061 = vmatpush1.bf16.msra.mxu0 0
        %1062 = vmatprep.subr.bf16.mxu0 0
        %1063 = vmatpush1.bf16.msra.mxu0 %v1050
        %1064 = vmatprep.subr.bf16.mxu0 0
        %1065 = vmatpush1.bf16.msra.mxu0 %v1015
        %1066 = vmatprep.subr.bf16.mxu0 0
        %1067 = vmatpush1.bf16.msra.mxu0 %v1014
        %1068 = vmatprep.subr.bf16.mxu0 0
        %1069 = vmatpush2.bf16.msra.mxu0 0
        %1070 = vmatprep.subr.bf16.mxu0 0
        %1071 = vmatpush2.bf16.msra.mxu0 0
        %1072 = vmatprep.subr.bf16.mxu0 0
        %1073 = vmatpush2.bf16.msra.mxu0 0
        %1074 = vmatprep.subr.bf16.mxu0 0
        %1075 = vmatpush2.bf16.msra.mxu0 0
        %1076 = vmatprep.subr.bf16.mxu0 0
        %1077 = vmatpush2.bf16.msra.mxu0 0
        %1078 = vmatprep.subr.bf16.mxu0 0
        %1079 = vmatpush2.bf16.msra.mxu0 0
        %1080 = vmatprep.subr.bf16.mxu0 0
        %1081 = vmatpush2.bf16.msra.mxu0 0
        %1082 = vmatprep.subr.bf16.mxu0 0
        %1083 = vmatpush2.bf16.msra.mxu0 0
        %1084 = vmatprep.mubr.bf16.mxu0 0
        %1085 = vmatmul.mubr.bf16.gmra.mxu0 %v1020
        %v1086 = vpop.f32.mrf.mxu0
        %v1087 = vadd.f32 0.0, %v1086
        %v1088 = vpop.f32.mrf.mxu0
        %v1089 = vpop.f32.mrf.mxu0
        %v1090 = vadd.f32 0.0, %v1089
        %v1091 = vpop.f32.mrf.mxu0
        %1092 = vmatprep.mubr.bf16.mxu0 0
        %1093 = vmatmul.mubr.bf16.gmra.mxu0 %v1023
        %v1094 = vpop.f32.mrf.mxu0
        %v1095 = vadd.f32 0.0, %v1094
        %v1096 = vpop.f32.mrf.mxu0
        %v1097 = vpop.f32.mrf.mxu0
        %v1098 = vadd.f32 0.0, %v1097
        %v1099 = vpop.f32.mrf.mxu0
        %1100 = vmatprep.mubr.bf16.mxu0 0
        %1101 = vmatmul.mubr.bf16.gmra.mxu0 %v1026
        %v1102 = vpop.f32.mrf.mxu0
        %v1103 = vadd.f32 0.0, %v1102
        %v1104 = vpop.f32.mrf.mxu0
        %v1105 = vpop.f32.mrf.mxu0
        %v1106 = vadd.f32 0.0, %v1105
        %v1107 = vpop.f32.mrf.mxu0
        %1108 = vmatprep.mubr.bf16.mxu0 0
        %1109 = vmatmul.mubr.bf16.gmra.mxu0 %v1029
        %v1110 = vpop.f32.mrf.mxu0
        %v1111 = vadd.f32 0.0, %v1110
        %v1112 = vpop.f32.mrf.mxu0
        %v1113 = vpop.f32.mrf.mxu0
        %v1114 = vadd.f32 0.0, %v1113
        %v1115 = vpop.f32.mrf.mxu0
        %1116 = vmatprep.mubr.bf16.mxu0 0
        %1117 = vmatmul.mubr.bf16.gmra.mxu0 %v1032
        %v1118 = vpop.f32.mrf.mxu0
        %v1119 = vadd.f32 0.0, %v1118
        %v1120 = vpop.f32.mrf.mxu0
        %v1121 = vpop.f32.mrf.mxu0
        %v1122 = vadd.f32 0.0, %v1121
        %v1123 = vpop.f32.mrf.mxu0
        %1124 = vmatprep.mubr.bf16.mxu0 0
        %1125 = vmatmul.mubr.bf16.gmra.mxu0 %v1035
        %v1126 = vpop.f32.mrf.mxu0
        %v1127 = vadd.f32 0.0, %v1126
        %v1128 = vpop.f32.mrf.mxu0
        %v1129 = vpop.f32.mrf.mxu0
        %v1130 = vadd.f32 0.0, %v1129
        %v1131 = vpop.f32.mrf.mxu0
        %1132 = vmatprep.mubr.bf16.mxu0 0
        %1133 = vmatmul.mubr.bf16.gmra.mxu0 %v1038
        %v1134 = vpop.f32.mrf.mxu0
        %v1135 = vadd.f32 0.0, %v1134
        %v1136 = vpop.f32.mrf.mxu0
        %v1137 = vpop.f32.mrf.mxu0
        %v1138 = vadd.f32 0.0, %v1137
        %v1139 = vpop.f32.mrf.mxu0
        %1140 = vmatprep.mubr.bf16.mxu0 0
        %1141 = vmatmul.mubr.bf16.gmra.mxu0 %v1041
        %v1142 = vpop.f32.mrf.mxu0
        %v1143 = vadd.f32 0.0, %v1142
        %v1144 = vpop.f32.mrf.mxu0
        %v1145 = vpop.f32.mrf.mxu0
        %v1146 = vadd.f32 0.0, %v1145
        %v1147 = vpop.f32.mrf.mxu0
        %1148 = vmatprep.mubr.bf16.mxu0 0
        %1149 = vmatmul.mubr.bf16.gmra.mxu0 %v1044
        %v1150 = vpop.f32.mrf.mxu0
        %v1151 = vadd.f32 0.0, %v1150
        %v1152 = vpop.f32.mrf.mxu0
        %v1153 = vpop.f32.mrf.mxu0
        %v1154 = vadd.f32 0.0, %v1153
        %v1155 = vpop.f32.mrf.mxu0
        %1156 = vmatprep.mubr.bf16.mxu0 0
        %1157 = vmatmul.mubr.bf16.gmra.mxu0 %v1047
        %v1158 = vpop.f32.mrf.mxu0
        %v1159 = vadd.f32 0.0, %v1158
        %v1160 = vpop.f32.mrf.mxu0
        %v1161 = vpop.f32.mrf.mxu0
        %v1162 = vadd.f32 0.0, %v1161
        %v1163 = vpop.f32.mrf.mxu0
        %1164 = vdwg.mxu0
        %v1165 = vadd.f32 %v928, %v1087
        %v1166 = vadd.f32 %v929, %v1090
        %v1167 = vadd.f32 %v930, %v1095
        %v1168 = vadd.f32 %v931, %v1098
        %v1169 = vadd.f32 %v932, %v1103
        %v1170 = vadd.f32 %v933, %v1106
        %v1171 = vadd.f32 %v934, %v1111
        %v1172 = vadd.f32 %v935, %v1114
        %v1173 = vadd.f32 %v936, %v1119
        %v1174 = vadd.f32 %v937, %v1122
        %v1175 = vadd.f32 %v938, %v1127
        %v1176 = vadd.f32 %v939, %v1130
        %v1177 = vadd.f32 %v940, %v1135
        %v1178 = vadd.f32 %v941, %v1138
        %v1179 = vadd.f32 %v942, %v1143
        %v1180 = vadd.f32 %v943, %v1146
        %v1181 = vadd.f32 %v944, %v1151
        %v1182 = vadd.f32 %v945, %v1154
        %v1183 = vadd.f32 %v946, %v1159
        %v1184 = vadd.f32 %v947, %v1162
        %s1185 = scalar_lea.vmem %s275, 4
        %v1186 = vld [vmem:[%s1185] ss:$5 sm:$0xff]
        %s1187 = scalar_lea.vmem %s275, 44
        %v1188 = vld [vmem:[%s1187] ss:$5 sm:$0xff]
        %s1189 = scalar_lea.vmem %s275, 84
        %v1190 = vld [vmem:[%s1189] ss:$5 sm:$0xff]
        %s1191 = scalar_lea.vmem %s275, 124
        %v1192 = vld [vmem:[%s1191] ss:$5 sm:$0xff]
        %s1193 = scalar_lea.vmem %s275, 164
        %v1194 = vld [vmem:[%s1193] ss:$5 sm:$0xff]
        %s1195 = scalar_lea.vmem %s275, 204
        %v1196 = vld [vmem:[%s1195] ss:$5 sm:$0xff]
        %s1197 = scalar_lea.vmem %s275, 244
        %v1198 = vld [vmem:[%s1197] ss:$5 sm:$0xff]
        %s1199 = scalar_lea.vmem %s275, 284
        %v1200 = vld [vmem:[%s1199] ss:$5 sm:$0xff]
        %s1201 = scalar_lea.vmem %s275, 324
        %v1202 = vld [vmem:[%s1201] ss:$5 sm:$0xff]
        %s1203 = scalar_lea.vmem %s275, 364
        %v1204 = vld [vmem:[%s1203] ss:$5 sm:$0xff]
        %s1205 = scalar_lea.vmem %s275, 404
        %v1206 = vld [vmem:[%s1205] ss:$5 sm:$0xff]
        %s1207 = scalar_lea.vmem %s275, 444
        %v1208 = vld [vmem:[%s1207] ss:$5 sm:$0xff]
        %s1209 = scalar_lea.vmem %s275, 484
        %v1210 = vld [vmem:[%s1209] ss:$5 sm:$0xff]
        %s1211 = scalar_lea.vmem %s275, 524
        %v1212 = vld [vmem:[%s1211] ss:$5 sm:$0xff]
        %s1213 = scalar_lea.vmem %s275, 564
        %v1214 = vld [vmem:[%s1213] ss:$5 sm:$0xff]
        %s1215 = scalar_lea.vmem %s275, 604
        %v1216 = vld [vmem:[%s1215] ss:$5 sm:$0xff]
        %s1217 = scalar_lea.vmem %s275, 644
        %v1218 = vld [vmem:[%s1217] ss:$5 sm:$0xff]
        %s1219 = scalar_lea.vmem %s275, 684
        %v1220 = vld [vmem:[%s1219] ss:$5 sm:$0xff]
        %s1221 = scalar_lea.vmem %s275, 724
        %v1222 = vld [vmem:[%s1221] ss:$5 sm:$0xff]
        %s1223 = scalar_lea.vmem %s275, 764
        %v1224 = vld [vmem:[%s1223] ss:$5 sm:$0x7f]
        %v1225 = vpack.c.bf16 %v1188, %v1186
        %v1226 = vpack.c.bf16 %v1192, %v1190
        %v1227 = vpack.c.bf16 %v1196, %v1194
        %v1228 = vpack.c.bf16 %v1200, %v1198
        %v1229 = vpack.c.bf16 %v1204, %v1202
        %v1230 = vpack.c.bf16 %v1208, %v1206
        %v1231 = vpack.c.bf16 %v1212, %v1210
        %v1232 = vpack.c.bf16 %v1216, %v1214
        %v1233 = vpack.c.bf16 %v1220, %v1218
        %v1234 = vpack.c.bf16 %v1224, %v1222
        %s1235 = scalar_lea.vmem %s1, 80
        %v1236 = vld [vmem:[%s1235] sm:$0xf]
        %v1237 = vld [vmem:[%s1235 + $0x4] sm:$0xf]
        %v1238 = vld [vmem:[%s1235 + $0x8] sm:$0xf]
        %v1239 = vld [vmem:[%s1235 + $0xc] sm:$0xf]
        %v1240 = vld [vmem:[%s1235 + $0x10] sm:$0xf]
        %v1246 = vunpack.c.l.b16 %v1236
        %v1247 = vunpack.c.l.b16 %v1237
        %v1248 = vunpack.c.l.b16 %v1238
        %v1249 = vunpack.c.l.b16 %v1239
        %v1250 = vunpack.c.l.b16 %v1240
        %v1251 = vpack.c.b16 %v1247, %v1246
        %v1252 = vpack.c.b16 %v1249, %v1248
        %v1253 = vpack.c.b16 %v1250, %v1250
        %v1257 = vsel %vm402, %v1225, 0
        %v1260 = vsel %vm402, %v1226, 0
        %v1263 = vsel %vm402, %v1227, 0
        %v1266 = vsel %vm402, %v1228, 0
        %v1269 = vsel %vm402, %v1229, 0
        %v1272 = vsel %vm402, %v1230, 0
        %v1275 = vsel %vm402, %v1231, 0
        %v1278 = vsel %vm402, %v1232, 0
        %v1281 = vsel %vm402, %v1233, 0
        %v1284 = vsel %vm402, %v1234, 0
        %v1287 = vsel %vm433, %v1253, 0
        %1289 = vmatprep.subr.bf16.mxu0 0
        %1290 = vmatpush1.bf16.msra.mxu0 0
        %1291 = vmatprep.subr.bf16.mxu0 0
        %1292 = vmatpush1.bf16.msra.mxu0 0
        %1293 = vmatprep.subr.bf16.mxu0 0
        %1294 = vmatpush1.bf16.msra.mxu0 0
        %1295 = vmatprep.subr.bf16.mxu0 0
        %1296 = vmatpush1.bf16.msra.mxu0 0
        %1297 = vmatprep.subr.bf16.mxu0 0
        %1298 = vmatpush1.bf16.msra.mxu0 0
        %1299 = vmatprep.subr.bf16.mxu0 0
        %1300 = vmatpush1.bf16.msra.mxu0 %v1287
        %1301 = vmatprep.subr.bf16.mxu0 0
        %1302 = vmatpush1.bf16.msra.mxu0 %v1252
        %1303 = vmatprep.subr.bf16.mxu0 0
        %1304 = vmatpush1.bf16.msra.mxu0 %v1251
        %1305 = vmatprep.subr.bf16.mxu0 0
        %1306 = vmatpush2.bf16.msra.mxu0 0
        %1307 = vmatprep.subr.bf16.mxu0 0
        %1308 = vmatpush2.bf16.msra.mxu0 0
        %1309 = vmatprep.subr.bf16.mxu0 0
        %1310 = vmatpush2.bf16.msra.mxu0 0
        %1311 = vmatprep.subr.bf16.mxu0 0
        %1312 = vmatpush2.bf16.msra.mxu0 0
        %1313 = vmatprep.subr.bf16.mxu0 0
        %1314 = vmatpush2.bf16.msra.mxu0 0
        %1315 = vmatprep.subr.bf16.mxu0 0
        %1316 = vmatpush2.bf16.msra.mxu0 0
        %1317 = vmatprep.subr.bf16.mxu0 0
        %1318 = vmatpush2.bf16.msra.mxu0 0
        %1319 = vmatprep.subr.bf16.mxu0 0
        %1320 = vmatpush2.bf16.msra.mxu0 0
        %1321 = vmatprep.mubr.bf16.mxu0 0
        %1322 = vmatmul.mubr.bf16.gmra.mxu0 %v1257
        %v1323 = vpop.f32.mrf.mxu0
        %v1324 = vadd.f32 0.0, %v1323
        %v1325 = vpop.f32.mrf.mxu0
        %v1326 = vpop.f32.mrf.mxu0
        %v1327 = vadd.f32 0.0, %v1326
        %v1328 = vpop.f32.mrf.mxu0
        %1329 = vmatprep.mubr.bf16.mxu0 0
        %1330 = vmatmul.mubr.bf16.gmra.mxu0 %v1260
        %v1331 = vpop.f32.mrf.mxu0
        %v1332 = vadd.f32 0.0, %v1331
        %v1333 = vpop.f32.mrf.mxu0
        %v1334 = vpop.f32.mrf.mxu0
        %v1335 = vadd.f32 0.0, %v1334
        %v1336 = vpop.f32.mrf.mxu0
        %1337 = vmatprep.mubr.bf16.mxu0 0
        %1338 = vmatmul.mubr.bf16.gmra.mxu0 %v1263
        %v1339 = vpop.f32.mrf.mxu0
        %v1340 = vadd.f32 0.0, %v1339
        %v1341 = vpop.f32.mrf.mxu0
        %v1342 = vpop.f32.mrf.mxu0
        %v1343 = vadd.f32 0.0, %v1342
        %v1344 = vpop.f32.mrf.mxu0
        %1345 = vmatprep.mubr.bf16.mxu0 0
        %1346 = vmatmul.mubr.bf16.gmra.mxu0 %v1266
        %v1347 = vpop.f32.mrf.mxu0
        %v1348 = vadd.f32 0.0, %v1347
        %v1349 = vpop.f32.mrf.mxu0
        %v1350 = vpop.f32.mrf.mxu0
        %v1351 = vadd.f32 0.0, %v1350
        %v1352 = vpop.f32.mrf.mxu0
        %1353 = vmatprep.mubr.bf16.mxu0 0
        %1354 = vmatmul.mubr.bf16.gmra.mxu0 %v1269
        %v1355 = vpop.f32.mrf.mxu0
        %v1356 = vadd.f32 0.0, %v1355
        %v1357 = vpop.f32.mrf.mxu0
        %v1358 = vpop.f32.mrf.mxu0
        %v1359 = vadd.f32 0.0, %v1358
        %v1360 = vpop.f32.mrf.mxu0
        %1361 = vmatprep.mubr.bf16.mxu0 0
        %1362 = vmatmul.mubr.bf16.gmra.mxu0 %v1272
        %v1363 = vpop.f32.mrf.mxu0
        %v1364 = vadd.f32 0.0, %v1363
        %v1365 = vpop.f32.mrf.mxu0
        %v1366 = vpop.f32.mrf.mxu0
        %v1367 = vadd.f32 0.0, %v1366
        %v1368 = vpop.f32.mrf.mxu0
        %1369 = vmatprep.mubr.bf16.mxu0 0
        %1370 = vmatmul.mubr.bf16.gmra.mxu0 %v1275
        %v1371 = vpop.f32.mrf.mxu0
        %v1372 = vadd.f32 0.0, %v1371
        %v1373 = vpop.f32.mrf.mxu0
        %v1374 = vpop.f32.mrf.mxu0
        %v1375 = vadd.f32 0.0, %v1374
        %v1376 = vpop.f32.mrf.mxu0
        %1377 = vmatprep.mubr.bf16.mxu0 0
        %1378 = vmatmul.mubr.bf16.gmra.mxu0 %v1278
        %v1379 = vpop.f32.mrf.mxu0
        %v1380 = vadd.f32 0.0, %v1379
        %v1381 = vpop.f32.mrf.mxu0
        %v1382 = vpop.f32.mrf.mxu0
        %v1383 = vadd.f32 0.0, %v1382
        %v1384 = vpop.f32.mrf.mxu0
        %1385 = vmatprep.mubr.bf16.mxu0 0
        %1386 = vmatmul.mubr.bf16.gmra.mxu0 %v1281
        %v1387 = vpop.f32.mrf.mxu0
        %v1388 = vadd.f32 0.0, %v1387
        %v1389 = vpop.f32.mrf.mxu0
        %v1390 = vpop.f32.mrf.mxu0
        %v1391 = vadd.f32 0.0, %v1390
        %v1392 = vpop.f32.mrf.mxu0
        %1393 = vmatprep.mubr.bf16.mxu0 0
        %1394 = vmatmul.mubr.bf16.gmra.mxu0 %v1284
        %v1395 = vpop.f32.mrf.mxu0
        %v1396 = vadd.f32 0.0, %v1395
        %v1397 = vpop.f32.mrf.mxu0
        %v1398 = vpop.f32.mrf.mxu0
        %v1399 = vadd.f32 0.0, %v1398
        %v1400 = vpop.f32.mrf.mxu0
        %1401 = vdwg.mxu0
        %v1402 = vadd.f32 %v1165, %v1324
        %v1403 = vadd.f32 %v1166, %v1327
        %v1404 = vadd.f32 %v1167, %v1332
        %v1405 = vadd.f32 %v1168, %v1335
        %v1406 = vadd.f32 %v1169, %v1340
        %v1407 = vadd.f32 %v1170, %v1343
        %v1408 = vadd.f32 %v1171, %v1348
        %v1409 = vadd.f32 %v1172, %v1351
        %v1410 = vadd.f32 %v1173, %v1356
        %v1411 = vadd.f32 %v1174, %v1359
        %v1412 = vadd.f32 %v1175, %v1364
        %v1413 = vadd.f32 %v1176, %v1367
        %v1414 = vadd.f32 %v1177, %v1372
        %v1415 = vadd.f32 %v1178, %v1375
        %v1416 = vadd.f32 %v1179, %v1380
        %v1417 = vadd.f32 %v1180, %v1383
        %v1418 = vadd.f32 %v1181, %v1388
        %v1419 = vadd.f32 %v1182, %v1391
        %v1420 = vadd.f32 %v1183, %v1396
        %v1421 = vadd.f32 %v1184, %v1399
        %s1422 = scalar_lea.vmem %s275, 5
        %v1423 = vld [vmem:[%s1422] ss:$5 sm:$0xff]
        %s1424 = scalar_lea.vmem %s275, 45
        %v1425 = vld [vmem:[%s1424] ss:$5 sm:$0xff]
        %s1426 = scalar_lea.vmem %s275, 85
        %v1427 = vld [vmem:[%s1426] ss:$5 sm:$0xff]
        %s1428 = scalar_lea.vmem %s275, 125
        %v1429 = vld [vmem:[%s1428] ss:$5 sm:$0xff]
        %s1430 = scalar_lea.vmem %s275, 165
        %v1431 = vld [vmem:[%s1430] ss:$5 sm:$0xff]
        %s1432 = scalar_lea.vmem %s275, 205
        %v1433 = vld [vmem:[%s1432] ss:$5 sm:$0xff]
        %s1434 = scalar_lea.vmem %s275, 245
        %v1435 = vld [vmem:[%s1434] ss:$5 sm:$0xff]
        %s1436 = scalar_lea.vmem %s275, 285
        %v1437 = vld [vmem:[%s1436] ss:$5 sm:$0xff]
        %s1438 = scalar_lea.vmem %s275, 325
        %v1439 = vld [vmem:[%s1438] ss:$5 sm:$0xff]
        %s1440 = scalar_lea.vmem %s275, 365
        %v1441 = vld [vmem:[%s1440] ss:$5 sm:$0xff]
        %s1442 = scalar_lea.vmem %s275, 405
        %v1443 = vld [vmem:[%s1442] ss:$5 sm:$0xff]
        %s1444 = scalar_lea.vmem %s275, 445
        %v1445 = vld [vmem:[%s1444] ss:$5 sm:$0xff]
        %s1446 = scalar_lea.vmem %s275, 485
        %v1447 = vld [vmem:[%s1446] ss:$5 sm:$0xff]
        %s1448 = scalar_lea.vmem %s275, 525
        %v1449 = vld [vmem:[%s1448] ss:$5 sm:$0xff]
        %s1450 = scalar_lea.vmem %s275, 565
        %v1451 = vld [vmem:[%s1450] ss:$5 sm:$0xff]
        %s1452 = scalar_lea.vmem %s275, 605
        %v1453 = vld [vmem:[%s1452] ss:$5 sm:$0xff]
        %s1454 = scalar_lea.vmem %s275, 645
        %v1455 = vld [vmem:[%s1454] ss:$5 sm:$0xff]
        %s1456 = scalar_lea.vmem %s275, 685
        %v1457 = vld [vmem:[%s1456] ss:$5 sm:$0xff]
        %s1458 = scalar_lea.vmem %s275, 725
        %v1459 = vld [vmem:[%s1458] ss:$5 sm:$0xff]
        %s1460 = scalar_lea.vmem %s275, 765
        %v1461 = vld [vmem:[%s1460] ss:$5 sm:$0x7f]
        %v1462 = vpack.c.bf16 %v1425, %v1423
        %v1463 = vpack.c.bf16 %v1429, %v1427
        %v1464 = vpack.c.bf16 %v1433, %v1431
        %v1465 = vpack.c.bf16 %v1437, %v1435
        %v1466 = vpack.c.bf16 %v1441, %v1439
        %v1467 = vpack.c.bf16 %v1445, %v1443
        %v1468 = vpack.c.bf16 %v1449, %v1447
        %v1469 = vpack.c.bf16 %v1453, %v1451
        %v1470 = vpack.c.bf16 %v1457, %v1455
        %v1471 = vpack.c.bf16 %v1461, %v1459
        %s1472 = scalar_lea.vmem %s1, 100
        %v1473 = vld [vmem:[%s1472] sm:$0xf]
        %v1474 = vld [vmem:[%s1472 + $0x4] sm:$0xf]
        %v1475 = vld [vmem:[%s1472 + $0x8] sm:$0xf]
        %v1476 = vld [vmem:[%s1472 + $0xc] sm:$0xf]
        %v1477 = vld [vmem:[%s1472 + $0x10] sm:$0xf]
        %v1483 = vunpack.c.l.b16 %v1473
        %v1484 = vunpack.c.l.b16 %v1474
        %v1485 = vunpack.c.l.b16 %v1475
        %v1486 = vunpack.c.l.b16 %v1476
        %v1487 = vunpack.c.l.b16 %v1477
        %v1488 = vpack.c.b16 %v1484, %v1483
        %v1489 = vpack.c.b16 %v1486, %v1485
        %v1490 = vpack.c.b16 %v1487, %v1487
        %v1494 = vsel %vm402, %v1462, 0
        %v1497 = vsel %vm402, %v1463, 0
        %v1500 = vsel %vm402, %v1464, 0
        %v1503 = vsel %vm402, %v1465, 0
        %v1506 = vsel %vm402, %v1466, 0
        %v1509 = vsel %vm402, %v1467, 0
        %v1512 = vsel %vm402, %v1468, 0
        %v1515 = vsel %vm402, %v1469, 0
        %v1518 = vsel %vm402, %v1470, 0
        %v1521 = vsel %vm402, %v1471, 0
        %v1524 = vsel %vm433, %v1490, 0
        %1526 = vmatprep.subr.bf16.mxu0 0
        %1527 = vmatpush1.bf16.msra.mxu0 0
        %1528 = vmatprep.subr.bf16.mxu0 0
        %1529 = vmatpush1.bf16.msra.mxu0 0
        %1530 = vmatprep.subr.bf16.mxu0 0
        %1531 = vmatpush1.bf16.msra.mxu0 0
        %1532 = vmatprep.subr.bf16.mxu0 0
        %1533 = vmatpush1.bf16.msra.mxu0 0
        %1534 = vmatprep.subr.bf16.mxu0 0
        %1535 = vmatpush1.bf16.msra.mxu0 0
        %1536 = vmatprep.subr.bf16.mxu0 0
        %1537 = vmatpush1.bf16.msra.mxu0 %v1524
        %1538 = vmatprep.subr.bf16.mxu0 0
        %1539 = vmatpush1.bf16.msra.mxu0 %v1489
        %1540 = vmatprep.subr.bf16.mxu0 0
        %1541 = vmatpush1.bf16.msra.mxu0 %v1488
        %1542 = vmatprep.subr.bf16.mxu0 0
        %1543 = vmatpush2.bf16.msra.mxu0 0
        %1544 = vmatprep.subr.bf16.mxu0 0
        %1545 = vmatpush2.bf16.msra.mxu0 0
        %1546 = vmatprep.subr.bf16.mxu0 0
        %1547 = vmatpush2.bf16.msra.mxu0 0
        %1548 = vmatprep.subr.bf16.mxu0 0
        %1549 = vmatpush2.bf16.msra.mxu0 0
        %1550 = vmatprep.subr.bf16.mxu0 0
        %1551 = vmatpush2.bf16.msra.mxu0 0
        %1552 = vmatprep.subr.bf16.mxu0 0
        %1553 = vmatpush2.bf16.msra.mxu0 0
        %1554 = vmatprep.subr.bf16.mxu0 0
        %1555 = vmatpush2.bf16.msra.mxu0 0
        %1556 = vmatprep.subr.bf16.mxu0 0
        %1557 = vmatpush2.bf16.msra.mxu0 0
        %1558 = vmatprep.mubr.bf16.mxu0 0
        %1559 = vmatmul.mubr.bf16.gmra.mxu0 %v1494
        %v1560 = vpop.f32.mrf.mxu0
        %v1561 = vadd.f32 0.0, %v1560
        %v1562 = vpop.f32.mrf.mxu0
        %v1563 = vpop.f32.mrf.mxu0
        %v1564 = vadd.f32 0.0, %v1563
        %v1565 = vpop.f32.mrf.mxu0
        %1566 = vmatprep.mubr.bf16.mxu0 0
        %1567 = vmatmul.mubr.bf16.gmra.mxu0 %v1497
        %v1568 = vpop.f32.mrf.mxu0
        %v1569 = vadd.f32 0.0, %v1568
        %v1570 = vpop.f32.mrf.mxu0
        %v1571 = vpop.f32.mrf.mxu0
        %v1572 = vadd.f32 0.0, %v1571
        %v1573 = vpop.f32.mrf.mxu0
        %1574 = vmatprep.mubr.bf16.mxu0 0
        %1575 = vmatmul.mubr.bf16.gmra.mxu0 %v1500
        %v1576 = vpop.f32.mrf.mxu0
        %v1577 = vadd.f32 0.0, %v1576
        %v1578 = vpop.f32.mrf.mxu0
        %v1579 = vpop.f32.mrf.mxu0
        %v1580 = vadd.f32 0.0, %v1579
        %v1581 = vpop.f32.mrf.mxu0
        %1582 = vmatprep.mubr.bf16.mxu0 0
        %1583 = vmatmul.mubr.bf16.gmra.mxu0 %v1503
        %v1584 = vpop.f32.mrf.mxu0
        %v1585 = vadd.f32 0.0, %v1584
        %v1586 = vpop.f32.mrf.mxu0
        %v1587 = vpop.f32.mrf.mxu0
        %v1588 = vadd.f32 0.0, %v1587
        %v1589 = vpop.f32.mrf.mxu0
        %1590 = vmatprep.mubr.bf16.mxu0 0
        %1591 = vmatmul.mubr.bf16.gmra.mxu0 %v1506
        %v1592 = vpop.f32.mrf.mxu0
        %v1593 = vadd.f32 0.0, %v1592
        %v1594 = vpop.f32.mrf.mxu0
        %v1595 = vpop.f32.mrf.mxu0
        %v1596 = vadd.f32 0.0, %v1595
        %v1597 = vpop.f32.mrf.mxu0
        %1598 = vmatprep.mubr.bf16.mxu0 0
        %1599 = vmatmul.mubr.bf16.gmra.mxu0 %v1509
        %v1600 = vpop.f32.mrf.mxu0
        %v1601 = vadd.f32 0.0, %v1600
        %v1602 = vpop.f32.mrf.mxu0
        %v1603 = vpop.f32.mrf.mxu0
        %v1604 = vadd.f32 0.0, %v1603
        %v1605 = vpop.f32.mrf.mxu0
        %1606 = vmatprep.mubr.bf16.mxu0 0
        %1607 = vmatmul.mubr.bf16.gmra.mxu0 %v1512
        %v1608 = vpop.f32.mrf.mxu0
        %v1609 = vadd.f32 0.0, %v1608
        %v1610 = vpop.f32.mrf.mxu0
        %v1611 = vpop.f32.mrf.mxu0
        %v1612 = vadd.f32 0.0, %v1611
        %v1613 = vpop.f32.mrf.mxu0
        %1614 = vmatprep.mubr.bf16.mxu0 0
        %1615 = vmatmul.mubr.bf16.gmra.mxu0 %v1515
        %v1616 = vpop.f32.mrf.mxu0
        %v1617 = vadd.f32 0.0, %v1616
        %v1618 = vpop.f32.mrf.mxu0
        %v1619 = vpop.f32.mrf.mxu0
        %v1620 = vadd.f32 0.0, %v1619
        %v1621 = vpop.f32.mrf.mxu0
        %1622 = vmatprep.mubr.bf16.mxu0 0
        %1623 = vmatmul.mubr.bf16.gmra.mxu0 %v1518
        %v1624 = vpop.f32.mrf.mxu0
        %v1625 = vadd.f32 0.0, %v1624
        %v1626 = vpop.f32.mrf.mxu0
        %v1627 = vpop.f32.mrf.mxu0
        %v1628 = vadd.f32 0.0, %v1627
        %v1629 = vpop.f32.mrf.mxu0
        %1630 = vmatprep.mubr.bf16.mxu0 0
        %1631 = vmatmul.mubr.bf16.gmra.mxu0 %v1521
        %v1632 = vpop.f32.mrf.mxu0
        %v1633 = vadd.f32 0.0, %v1632
        %v1634 = vpop.f32.mrf.mxu0
        %v1635 = vpop.f32.mrf.mxu0
        %v1636 = vadd.f32 0.0, %v1635
        %v1637 = vpop.f32.mrf.mxu0
        %1638 = vdwg.mxu0
        %v1639 = vadd.f32 %v1402, %v1561
        %v1640 = vadd.f32 %v1403, %v1564
        %v1641 = vadd.f32 %v1404, %v1569
        %v1642 = vadd.f32 %v1405, %v1572
        %v1643 = vadd.f32 %v1406, %v1577
        %v1644 = vadd.f32 %v1407, %v1580
        %v1645 = vadd.f32 %v1408, %v1585
        %v1646 = vadd.f32 %v1409, %v1588
        %v1647 = vadd.f32 %v1410, %v1593
        %v1648 = vadd.f32 %v1411, %v1596
        %v1649 = vadd.f32 %v1412, %v1601
        %v1650 = vadd.f32 %v1413, %v1604
        %v1651 = vadd.f32 %v1414, %v1609
        %v1652 = vadd.f32 %v1415, %v1612
        %v1653 = vadd.f32 %v1416, %v1617
        %v1654 = vadd.f32 %v1417, %v1620
        %v1655 = vadd.f32 %v1418, %v1625
        %v1656 = vadd.f32 %v1419, %v1628
        %v1657 = vadd.f32 %v1420, %v1633
        %v1658 = vadd.f32 %v1421, %v1636
        %s1659 = scalar_lea.vmem %s275, 6
        %v1660 = vld [vmem:[%s1659] ss:$5 sm:$0xff]
        %s1661 = scalar_lea.vmem %s275, 46
        %v1662 = vld [vmem:[%s1661] ss:$5 sm:$0xff]
        %s1663 = scalar_lea.vmem %s275, 86
        %v1664 = vld [vmem:[%s1663] ss:$5 sm:$0xff]
        %s1665 = scalar_lea.vmem %s275, 126
        %v1666 = vld [vmem:[%s1665] ss:$5 sm:$0xff]
        %s1667 = scalar_lea.vmem %s275, 166
        %v1668 = vld [vmem:[%s1667] ss:$5 sm:$0xff]
        %s1669 = scalar_lea.vmem %s275, 206
        %v1670 = vld [vmem:[%s1669] ss:$5 sm:$0xff]
        %s1671 = scalar_lea.vmem %s275, 246
        %v1672 = vld [vmem:[%s1671] ss:$5 sm:$0xff]
        %s1673 = scalar_lea.vmem %s275, 286
        %v1674 = vld [vmem:[%s1673] ss:$5 sm:$0xff]
        %s1675 = scalar_lea.vmem %s275, 326
        %v1676 = vld [vmem:[%s1675] ss:$5 sm:$0xff]
        %s1677 = scalar_lea.vmem %s275, 366
        %v1678 = vld [vmem:[%s1677] ss:$5 sm:$0xff]
        %s1679 = scalar_lea.vmem %s275, 406
        %v1680 = vld [vmem:[%s1679] ss:$5 sm:$0xff]
        %s1681 = scalar_lea.vmem %s275, 446
        %v1682 = vld [vmem:[%s1681] ss:$5 sm:$0xff]
        %s1683 = scalar_lea.vmem %s275, 486
        %v1684 = vld [vmem:[%s1683] ss:$5 sm:$0xff]
        %s1685 = scalar_lea.vmem %s275, 526
        %v1686 = vld [vmem:[%s1685] ss:$5 sm:$0xff]
        %s1687 = scalar_lea.vmem %s275, 566
        %v1688 = vld [vmem:[%s1687] ss:$5 sm:$0xff]
        %s1689 = scalar_lea.vmem %s275, 606
        %v1690 = vld [vmem:[%s1689] ss:$5 sm:$0xff]
        %s1691 = scalar_lea.vmem %s275, 646
        %v1692 = vld [vmem:[%s1691] ss:$5 sm:$0xff]
        %s1693 = scalar_lea.vmem %s275, 686
        %v1694 = vld [vmem:[%s1693] ss:$5 sm:$0xff]
        %s1695 = scalar_lea.vmem %s275, 726
        %v1696 = vld [vmem:[%s1695] ss:$5 sm:$0xff]
        %s1697 = scalar_lea.vmem %s275, 766
        %v1698 = vld [vmem:[%s1697] ss:$5 sm:$0x7f]
        %v1699 = vpack.c.bf16 %v1662, %v1660
        %v1700 = vpack.c.bf16 %v1666, %v1664
        %v1701 = vpack.c.bf16 %v1670, %v1668
        %v1702 = vpack.c.bf16 %v1674, %v1672
        %v1703 = vpack.c.bf16 %v1678, %v1676
        %v1704 = vpack.c.bf16 %v1682, %v1680
        %v1705 = vpack.c.bf16 %v1686, %v1684
        %v1706 = vpack.c.bf16 %v1690, %v1688
        %v1707 = vpack.c.bf16 %v1694, %v1692
        %v1708 = vpack.c.bf16 %v1698, %v1696
        %s1709 = scalar_lea.vmem %s1, 120
        %v1710 = vld [vmem:[%s1709] sm:$0xf]
        %v1711 = vld [vmem:[%s1709 + $0x4] sm:$0xf]
        %v1712 = vld [vmem:[%s1709 + $0x8] sm:$0xf]
        %v1713 = vld [vmem:[%s1709 + $0xc] sm:$0xf]
        %v1714 = vld [vmem:[%s1709 + $0x10] sm:$0xf]
        %v1720 = vunpack.c.l.b16 %v1710
        %v1721 = vunpack.c.l.b16 %v1711
        %v1722 = vunpack.c.l.b16 %v1712
        %v1723 = vunpack.c.l.b16 %v1713
        %v1724 = vunpack.c.l.b16 %v1714
        %v1725 = vpack.c.b16 %v1721, %v1720
        %v1726 = vpack.c.b16 %v1723, %v1722
        %v1727 = vpack.c.b16 %v1724, %v1724
        %v1731 = vsel %vm402, %v1699, 0
        %v1734 = vsel %vm402, %v1700, 0
        %v1737 = vsel %vm402, %v1701, 0
        %v1740 = vsel %vm402, %v1702, 0
        %v1743 = vsel %vm402, %v1703, 0
        %v1746 = vsel %vm402, %v1704, 0
        %v1749 = vsel %vm402, %v1705, 0
        %v1752 = vsel %vm402, %v1706, 0
        %v1755 = vsel %vm402, %v1707, 0
        %v1758 = vsel %vm402, %v1708, 0
        %v1761 = vsel %vm433, %v1727, 0
        %1763 = vmatprep.subr.bf16.mxu0 0
        %1764 = vmatpush1.bf16.msra.mxu0 0
        %1765 = vmatprep.subr.bf16.mxu0 0
        %1766 = vmatpush1.bf16.msra.mxu0 0
        %1767 = vmatprep.subr.bf16.mxu0 0
        %1768 = vmatpush1.bf16.msra.mxu0 0
        %1769 = vmatprep.subr.bf16.mxu0 0
        %1770 = vmatpush1.bf16.msra.mxu0 0
        %1771 = vmatprep.subr.bf16.mxu0 0
        %1772 = vmatpush1.bf16.msra.mxu0 0
        %1773 = vmatprep.subr.bf16.mxu0 0
        %1774 = vmatpush1.bf16.msra.mxu0 %v1761
        %1775 = vmatprep.subr.bf16.mxu0 0
        %1776 = vmatpush1.bf16.msra.mxu0 %v1726
        %1777 = vmatprep.subr.bf16.mxu0 0
        %1778 = vmatpush1.bf16.msra.mxu0 %v1725
        %1779 = vmatprep.subr.bf16.mxu0 0
        %1780 = vmatpush2.bf16.msra.mxu0 0
        %1781 = vmatprep.subr.bf16.mxu0 0
        %1782 = vmatpush2.bf16.msra.mxu0 0
        %1783 = vmatprep.subr.bf16.mxu0 0
        %1784 = vmatpush2.bf16.msra.mxu0 0
        %1785 = vmatprep.subr.bf16.mxu0 0
        %1786 = vmatpush2.bf16.msra.mxu0 0
        %1787 = vmatprep.subr.bf16.mxu0 0
        %1788 = vmatpush2.bf16.msra.mxu0 0
        %1789 = vmatprep.subr.bf16.mxu0 0
        %1790 = vmatpush2.bf16.msra.mxu0 0
        %1791 = vmatprep.subr.bf16.mxu0 0
        %1792 = vmatpush2.bf16.msra.mxu0 0
        %1793 = vmatprep.subr.bf16.mxu0 0
        %1794 = vmatpush2.bf16.msra.mxu0 0
        %1795 = vmatprep.mubr.bf16.mxu0 0
        %1796 = vmatmul.mubr.bf16.gmra.mxu0 %v1731
        %v1797 = vpop.f32.mrf.mxu0
        %v1798 = vadd.f32 0.0, %v1797
        %v1799 = vpop.f32.mrf.mxu0
        %v1800 = vpop.f32.mrf.mxu0
        %v1801 = vadd.f32 0.0, %v1800
        %v1802 = vpop.f32.mrf.mxu0
        %1803 = vmatprep.mubr.bf16.mxu0 0
        %1804 = vmatmul.mubr.bf16.gmra.mxu0 %v1734
        %v1805 = vpop.f32.mrf.mxu0
        %v1806 = vadd.f32 0.0, %v1805
        %v1807 = vpop.f32.mrf.mxu0
        %v1808 = vpop.f32.mrf.mxu0
        %v1809 = vadd.f32 0.0, %v1808
        %v1810 = vpop.f32.mrf.mxu0
        %1811 = vmatprep.mubr.bf16.mxu0 0
        %1812 = vmatmul.mubr.bf16.gmra.mxu0 %v1737
        %v1813 = vpop.f32.mrf.mxu0
        %v1814 = vadd.f32 0.0, %v1813
        %v1815 = vpop.f32.mrf.mxu0
        %v1816 = vpop.f32.mrf.mxu0
        %v1817 = vadd.f32 0.0, %v1816
        %v1818 = vpop.f32.mrf.mxu0
        %1819 = vmatprep.mubr.bf16.mxu0 0
        %1820 = vmatmul.mubr.bf16.gmra.mxu0 %v1740
        %v1821 = vpop.f32.mrf.mxu0
        %v1822 = vadd.f32 0.0, %v1821
        %v1823 = vpop.f32.mrf.mxu0
        %v1824 = vpop.f32.mrf.mxu0
        %v1825 = vadd.f32 0.0, %v1824
        %v1826 = vpop.f32.mrf.mxu0
        %1827 = vmatprep.mubr.bf16.mxu0 0
        %1828 = vmatmul.mubr.bf16.gmra.mxu0 %v1743
        %v1829 = vpop.f32.mrf.mxu0
        %v1830 = vadd.f32 0.0, %v1829
        %v1831 = vpop.f32.mrf.mxu0
        %v1832 = vpop.f32.mrf.mxu0
        %v1833 = vadd.f32 0.0, %v1832
        %v1834 = vpop.f32.mrf.mxu0
        %1835 = vmatprep.mubr.bf16.mxu0 0
        %1836 = vmatmul.mubr.bf16.gmra.mxu0 %v1746
        %v1837 = vpop.f32.mrf.mxu0
        %v1838 = vadd.f32 0.0, %v1837
        %v1839 = vpop.f32.mrf.mxu0
        %v1840 = vpop.f32.mrf.mxu0
        %v1841 = vadd.f32 0.0, %v1840
        %v1842 = vpop.f32.mrf.mxu0
        %1843 = vmatprep.mubr.bf16.mxu0 0
        %1844 = vmatmul.mubr.bf16.gmra.mxu0 %v1749
        %v1845 = vpop.f32.mrf.mxu0
        %v1846 = vadd.f32 0.0, %v1845
        %v1847 = vpop.f32.mrf.mxu0
        %v1848 = vpop.f32.mrf.mxu0
        %v1849 = vadd.f32 0.0, %v1848
        %v1850 = vpop.f32.mrf.mxu0
        %1851 = vmatprep.mubr.bf16.mxu0 0
        %1852 = vmatmul.mubr.bf16.gmra.mxu0 %v1752
        %v1853 = vpop.f32.mrf.mxu0
        %v1854 = vadd.f32 0.0, %v1853
        %v1855 = vpop.f32.mrf.mxu0
        %v1856 = vpop.f32.mrf.mxu0
        %v1857 = vadd.f32 0.0, %v1856
        %v1858 = vpop.f32.mrf.mxu0
        %1859 = vmatprep.mubr.bf16.mxu0 0
        %1860 = vmatmul.mubr.bf16.gmra.mxu0 %v1755
        %v1861 = vpop.f32.mrf.mxu0
        %v1862 = vadd.f32 0.0, %v1861
        %v1863 = vpop.f32.mrf.mxu0
        %v1864 = vpop.f32.mrf.mxu0
        %v1865 = vadd.f32 0.0, %v1864
        %v1866 = vpop.f32.mrf.mxu0
        %1867 = vmatprep.mubr.bf16.mxu0 0
        %1868 = vmatmul.mubr.bf16.gmra.mxu0 %v1758
        %v1869 = vpop.f32.mrf.mxu0
        %v1870 = vadd.f32 0.0, %v1869
        %v1871 = vpop.f32.mrf.mxu0
        %v1872 = vpop.f32.mrf.mxu0
        %v1873 = vadd.f32 0.0, %v1872
        %v1874 = vpop.f32.mrf.mxu0
        %1875 = vdwg.mxu0
        %v1876 = vadd.f32 %v1639, %v1798
        %v1877 = vadd.f32 %v1640, %v1801
        %v1878 = vadd.f32 %v1641, %v1806
        %v1879 = vadd.f32 %v1642, %v1809
        %v1880 = vadd.f32 %v1643, %v1814
        %v1881 = vadd.f32 %v1644, %v1817
        %v1882 = vadd.f32 %v1645, %v1822
        %v1883 = vadd.f32 %v1646, %v1825
        %v1884 = vadd.f32 %v1647, %v1830
        %v1885 = vadd.f32 %v1648, %v1833
        %v1886 = vadd.f32 %v1649, %v1838
        %v1887 = vadd.f32 %v1650, %v1841
        %v1888 = vadd.f32 %v1651, %v1846
        %v1889 = vadd.f32 %v1652, %v1849
        %v1890 = vadd.f32 %v1653, %v1854
        %v1891 = vadd.f32 %v1654, %v1857
        %v1892 = vadd.f32 %v1655, %v1862
        %v1893 = vadd.f32 %v1656, %v1865
        %v1894 = vadd.f32 %v1657, %v1870
        %v1895 = vadd.f32 %v1658, %v1873
        %s1896 = scalar_lea.vmem %s275, 7
        %v1897 = vld [vmem:[%s1896] ss:$5 sm:$0xff]
        %s1898 = scalar_lea.vmem %s275, 47
        %v1899 = vld [vmem:[%s1898] ss:$5 sm:$0xff]
        %s1900 = scalar_lea.vmem %s275, 87
        %v1901 = vld [vmem:[%s1900] ss:$5 sm:$0xff]
        %s1902 = scalar_lea.vmem %s275, 127
        %v1903 = vld [vmem:[%s1902] ss:$5 sm:$0xff]
        %s1904 = scalar_lea.vmem %s275, 167
        %v1905 = vld [vmem:[%s1904] ss:$5 sm:$0xff]
        %s1906 = scalar_lea.vmem %s275, 207
        %v1907 = vld [vmem:[%s1906] ss:$5 sm:$0xff]
        %s1908 = scalar_lea.vmem %s275, 247
        %v1909 = vld [vmem:[%s1908] ss:$5 sm:$0xff]
        %s1910 = scalar_lea.vmem %s275, 287
        %v1911 = vld [vmem:[%s1910] ss:$5 sm:$0xff]
        %s1912 = scalar_lea.vmem %s275, 327
        %v1913 = vld [vmem:[%s1912] ss:$5 sm:$0xff]
        %s1914 = scalar_lea.vmem %s275, 367
        %v1915 = vld [vmem:[%s1914] ss:$5 sm:$0xff]
        %s1916 = scalar_lea.vmem %s275, 407
        %v1917 = vld [vmem:[%s1916] ss:$5 sm:$0xff]
        %s1918 = scalar_lea.vmem %s275, 447
        %v1919 = vld [vmem:[%s1918] ss:$5 sm:$0xff]
        %s1920 = scalar_lea.vmem %s275, 487
        %v1921 = vld [vmem:[%s1920] ss:$5 sm:$0xff]
        %s1922 = scalar_lea.vmem %s275, 527
        %v1923 = vld [vmem:[%s1922] ss:$5 sm:$0xff]
        %s1924 = scalar_lea.vmem %s275, 567
        %v1925 = vld [vmem:[%s1924] ss:$5 sm:$0xff]
        %s1926 = scalar_lea.vmem %s275, 607
        %v1927 = vld [vmem:[%s1926] ss:$5 sm:$0xff]
        %s1928 = scalar_lea.vmem %s275, 647
        %v1929 = vld [vmem:[%s1928] ss:$5 sm:$0xff]
        %s1930 = scalar_lea.vmem %s275, 687
        %v1931 = vld [vmem:[%s1930] ss:$5 sm:$0xff]
        %s1932 = scalar_lea.vmem %s275, 727
        %v1933 = vld [vmem:[%s1932] ss:$5 sm:$0xff]
        %s1934 = scalar_lea.vmem %s275, 767
        %v1935 = vld [vmem:[%s1934] ss:$5 sm:$0x7f]
        %v1936 = vpack.c.bf16 %v1899, %v1897
        %v1937 = vpack.c.bf16 %v1903, %v1901
        %v1938 = vpack.c.bf16 %v1907, %v1905
        %v1939 = vpack.c.bf16 %v1911, %v1909
        %v1940 = vpack.c.bf16 %v1915, %v1913
        %v1941 = vpack.c.bf16 %v1919, %v1917
        %v1942 = vpack.c.bf16 %v1923, %v1921
        %v1943 = vpack.c.bf16 %v1927, %v1925
        %v1944 = vpack.c.bf16 %v1931, %v1929
        %v1945 = vpack.c.bf16 %v1935, %v1933
        %s1946 = scalar_lea.vmem %s1, 140
        %v1947 = vld [vmem:[%s1946] sm:$0xf]
        %v1948 = vld [vmem:[%s1946 + $0x4] sm:$0xf]
        %v1949 = vld [vmem:[%s1946 + $0x8] sm:$0xf]
        %v1950 = vld [vmem:[%s1946 + $0xc] sm:$0xf]
        %v1951 = vld [vmem:[%s1946 + $0x10] sm:$0xf]
        %v1957 = vunpack.c.l.b16 %v1947
        %v1958 = vunpack.c.l.b16 %v1948
        %v1959 = vunpack.c.l.b16 %v1949
        %v1960 = vunpack.c.l.b16 %v1950
        %v1961 = vunpack.c.l.b16 %v1951
        %v1962 = vpack.c.b16 %v1958, %v1957
        %v1963 = vpack.c.b16 %v1960, %v1959
        %v1964 = vpack.c.b16 %v1961, %v1961
        %v1968 = vsel %vm402, %v1936, 0
        %v1971 = vsel %vm402, %v1937, 0
        %v1974 = vsel %vm402, %v1938, 0
        %v1977 = vsel %vm402, %v1939, 0
        %v1980 = vsel %vm402, %v1940, 0
        %v1983 = vsel %vm402, %v1941, 0
        %v1986 = vsel %vm402, %v1942, 0
        %v1989 = vsel %vm402, %v1943, 0
        %v1992 = vsel %vm402, %v1944, 0
        %v1995 = vsel %vm402, %v1945, 0
        %v1998 = vsel %vm433, %v1964, 0
        %2000 = vmatprep.subr.bf16.mxu0 0
        %2001 = vmatpush1.bf16.msra.mxu0 0
        %2002 = vmatprep.subr.bf16.mxu0 0
        %2003 = vmatpush1.bf16.msra.mxu0 0
        %2004 = vmatprep.subr.bf16.mxu0 0
        %2005 = vmatpush1.bf16.msra.mxu0 0
        %2006 = vmatprep.subr.bf16.mxu0 0
        %2007 = vmatpush1.bf16.msra.mxu0 0
        %2008 = vmatprep.subr.bf16.mxu0 0
        %2009 = vmatpush1.bf16.msra.mxu0 0
        %2010 = vmatprep.subr.bf16.mxu0 0
        %2011 = vmatpush1.bf16.msra.mxu0 %v1998
        %2012 = vmatprep.subr.bf16.mxu0 0
        %2013 = vmatpush1.bf16.msra.mxu0 %v1963
        %2014 = vmatprep.subr.bf16.mxu0 0
        %2015 = vmatpush1.bf16.msra.mxu0 %v1962
        %2016 = vmatprep.subr.bf16.mxu0 0
        %2017 = vmatpush2.bf16.msra.mxu0 0
        %2018 = vmatprep.subr.bf16.mxu0 0
        %2019 = vmatpush2.bf16.msra.mxu0 0
        %2020 = vmatprep.subr.bf16.mxu0 0
        %2021 = vmatpush2.bf16.msra.mxu0 0
        %2022 = vmatprep.subr.bf16.mxu0 0
        %2023 = vmatpush2.bf16.msra.mxu0 0
        %2024 = vmatprep.subr.bf16.mxu0 0
        %2025 = vmatpush2.bf16.msra.mxu0 0
        %2026 = vmatprep.subr.bf16.mxu0 0
        %2027 = vmatpush2.bf16.msra.mxu0 0
        %2028 = vmatprep.subr.bf16.mxu0 0
        %2029 = vmatpush2.bf16.msra.mxu0 0
        %2030 = vmatprep.subr.bf16.mxu0 0
        %2031 = vmatpush2.bf16.msra.mxu0 0
        %2032 = vmatprep.mubr.bf16.mxu0 0
        %2033 = vmatmul.mubr.bf16.gmra.mxu0 %v1968
        %v2034 = vpop.f32.mrf.mxu0
        %v2035 = vadd.f32 0.0, %v2034
        %v2036 = vpop.f32.mrf.mxu0
        %v2037 = vpop.f32.mrf.mxu0
        %v2038 = vadd.f32 0.0, %v2037
        %v2039 = vpop.f32.mrf.mxu0
        %2040 = vmatprep.mubr.bf16.mxu0 0
        %2041 = vmatmul.mubr.bf16.gmra.mxu0 %v1971
        %v2042 = vpop.f32.mrf.mxu0
        %v2043 = vadd.f32 0.0, %v2042
        %v2044 = vpop.f32.mrf.mxu0
        %v2045 = vpop.f32.mrf.mxu0
        %v2046 = vadd.f32 0.0, %v2045
        %v2047 = vpop.f32.mrf.mxu0
        %2048 = vmatprep.mubr.bf16.mxu0 0
        %2049 = vmatmul.mubr.bf16.gmra.mxu0 %v1974
        %v2050 = vpop.f32.mrf.mxu0
        %v2051 = vadd.f32 0.0, %v2050
        %v2052 = vpop.f32.mrf.mxu0
        %v2053 = vpop.f32.mrf.mxu0
        %v2054 = vadd.f32 0.0, %v2053
        %v2055 = vpop.f32.mrf.mxu0
        %2056 = vmatprep.mubr.bf16.mxu0 0
        %2057 = vmatmul.mubr.bf16.gmra.mxu0 %v1977
        %v2058 = vpop.f32.mrf.mxu0
        %v2059 = vadd.f32 0.0, %v2058
        %v2060 = vpop.f32.mrf.mxu0
        %v2061 = vpop.f32.mrf.mxu0
        %v2062 = vadd.f32 0.0, %v2061
        %v2063 = vpop.f32.mrf.mxu0
        %2064 = vmatprep.mubr.bf16.mxu0 0
        %2065 = vmatmul.mubr.bf16.gmra.mxu0 %v1980
        %v2066 = vpop.f32.mrf.mxu0
        %v2067 = vadd.f32 0.0, %v2066
        %v2068 = vpop.f32.mrf.mxu0
        %v2069 = vpop.f32.mrf.mxu0
        %v2070 = vadd.f32 0.0, %v2069
        %v2071 = vpop.f32.mrf.mxu0
        %2072 = vmatprep.mubr.bf16.mxu0 0
        %2073 = vmatmul.mubr.bf16.gmra.mxu0 %v1983
        %v2074 = vpop.f32.mrf.mxu0
        %v2075 = vadd.f32 0.0, %v2074
        %v2076 = vpop.f32.mrf.mxu0
        %v2077 = vpop.f32.mrf.mxu0
        %v2078 = vadd.f32 0.0, %v2077
        %v2079 = vpop.f32.mrf.mxu0
        %2080 = vmatprep.mubr.bf16.mxu0 0
        %2081 = vmatmul.mubr.bf16.gmra.mxu0 %v1986
        %v2082 = vpop.f32.mrf.mxu0
        %v2083 = vadd.f32 0.0, %v2082
        %v2084 = vpop.f32.mrf.mxu0
        %v2085 = vpop.f32.mrf.mxu0
        %v2086 = vadd.f32 0.0, %v2085
        %v2087 = vpop.f32.mrf.mxu0
        %2088 = vmatprep.mubr.bf16.mxu0 0
        %2089 = vmatmul.mubr.bf16.gmra.mxu0 %v1989
        %v2090 = vpop.f32.mrf.mxu0
        %v2091 = vadd.f32 0.0, %v2090
        %v2092 = vpop.f32.mrf.mxu0
        %v2093 = vpop.f32.mrf.mxu0
        %v2094 = vadd.f32 0.0, %v2093
        %v2095 = vpop.f32.mrf.mxu0
        %2096 = vmatprep.mubr.bf16.mxu0 0
        %2097 = vmatmul.mubr.bf16.gmra.mxu0 %v1992
        %v2098 = vpop.f32.mrf.mxu0
        %v2099 = vadd.f32 0.0, %v2098
        %v2100 = vpop.f32.mrf.mxu0
        %v2101 = vpop.f32.mrf.mxu0
        %v2102 = vadd.f32 0.0, %v2101
        %v2103 = vpop.f32.mrf.mxu0
        %2104 = vmatprep.mubr.bf16.mxu0 0
        %2105 = vmatmul.mubr.bf16.gmra.mxu0 %v1995
        %v2106 = vpop.f32.mrf.mxu0
        %v2107 = vadd.f32 0.0, %v2106
        %v2108 = vpop.f32.mrf.mxu0
        %v2109 = vpop.f32.mrf.mxu0
        %v2110 = vadd.f32 0.0, %v2109
        %v2111 = vpop.f32.mrf.mxu0
        %2112 = vdwg.mxu0
        %v2113 = vadd.f32 %v1876, %v2035
        %v2114 = vadd.f32 %v1877, %v2038
        %v2115 = vadd.f32 %v1878, %v2043
        %v2116 = vadd.f32 %v1879, %v2046
        %v2117 = vadd.f32 %v1880, %v2051
        %v2118 = vadd.f32 %v1881, %v2054
        %v2119 = vadd.f32 %v1882, %v2059
        %v2120 = vadd.f32 %v1883, %v2062
        %v2121 = vadd.f32 %v1884, %v2067
        %v2122 = vadd.f32 %v1885, %v2070
        %v2123 = vadd.f32 %v1886, %v2075
        %v2124 = vadd.f32 %v1887, %v2078
        %v2125 = vadd.f32 %v1888, %v2083
        %v2126 = vadd.f32 %v1889, %v2086
        %v2127 = vadd.f32 %v1890, %v2091
        %v2128 = vadd.f32 %v1891, %v2094
        %v2129 = vadd.f32 %v1892, %v2099
        %v2130 = vadd.f32 %v1893, %v2102
        %v2131 = vadd.f32 %v1894, %v2107
        %v2132 = vadd.f32 %v1895, %v2110
        %s2133 = scalar_lea.vmem %s275, 8
        %v2134 = vld [vmem:[%s2133] ss:$5 sm:$0xff]
        %s2135 = scalar_lea.vmem %s275, 48
        %v2136 = vld [vmem:[%s2135] ss:$5 sm:$0xff]
        %s2137 = scalar_lea.vmem %s275, 88
        %v2138 = vld [vmem:[%s2137] ss:$5 sm:$0xff]
        %s2139 = scalar_lea.vmem %s275, 128
        %v2140 = vld [vmem:[%s2139] ss:$5 sm:$0xff]
        %s2141 = scalar_lea.vmem %s275, 168
        %v2142 = vld [vmem:[%s2141] ss:$5 sm:$0xff]
        %s2143 = scalar_lea.vmem %s275, 208
        %v2144 = vld [vmem:[%s2143] ss:$5 sm:$0xff]
        %s2145 = scalar_lea.vmem %s275, 248
        %v2146 = vld [vmem:[%s2145] ss:$5 sm:$0xff]
        %s2147 = scalar_lea.vmem %s275, 288
        %v2148 = vld [vmem:[%s2147] ss:$5 sm:$0xff]
        %s2149 = scalar_lea.vmem %s275, 328
        %v2150 = vld [vmem:[%s2149] ss:$5 sm:$0xff]
        %s2151 = scalar_lea.vmem %s275, 368
        %v2152 = vld [vmem:[%s2151] ss:$5 sm:$0xff]
        %s2153 = scalar_lea.vmem %s275, 408
        %v2154 = vld [vmem:[%s2153] ss:$5 sm:$0xff]
        %s2155 = scalar_lea.vmem %s275, 448
        %v2156 = vld [vmem:[%s2155] ss:$5 sm:$0xff]
        %s2157 = scalar_lea.vmem %s275, 488
        %v2158 = vld [vmem:[%s2157] ss:$5 sm:$0xff]
        %s2159 = scalar_lea.vmem %s275, 528
        %v2160 = vld [vmem:[%s2159] ss:$5 sm:$0xff]
        %s2161 = scalar_lea.vmem %s275, 568
        %v2162 = vld [vmem:[%s2161] ss:$5 sm:$0xff]
        %s2163 = scalar_lea.vmem %s275, 608
        %v2164 = vld [vmem:[%s2163] ss:$5 sm:$0xff]
        %s2165 = scalar_lea.vmem %s275, 648
        %v2166 = vld [vmem:[%s2165] ss:$5 sm:$0xff]
        %s2167 = scalar_lea.vmem %s275, 688
        %v2168 = vld [vmem:[%s2167] ss:$5 sm:$0xff]
        %s2169 = scalar_lea.vmem %s275, 728
        %v2170 = vld [vmem:[%s2169] ss:$5 sm:$0xff]
        %s2171 = scalar_lea.vmem %s275, 768
        %v2172 = vld [vmem:[%s2171] ss:$5 sm:$0x7f]
        %v2173 = vpack.c.bf16 %v2136, %v2134
        %v2174 = vpack.c.bf16 %v2140, %v2138
        %v2175 = vpack.c.bf16 %v2144, %v2142
        %v2176 = vpack.c.bf16 %v2148, %v2146
        %v2177 = vpack.c.bf16 %v2152, %v2150
        %v2178 = vpack.c.bf16 %v2156, %v2154
        %v2179 = vpack.c.bf16 %v2160, %v2158
        %v2180 = vpack.c.bf16 %v2164, %v2162
        %v2181 = vpack.c.bf16 %v2168, %v2166
        %v2182 = vpack.c.bf16 %v2172, %v2170
        %s2183 = scalar_lea.vmem %s1, 160
        %v2184 = vld [vmem:[%s2183] sm:$0xf]
        %v2185 = vld [vmem:[%s2183 + $0x4] sm:$0xf]
        %v2186 = vld [vmem:[%s2183 + $0x8] sm:$0xf]
        %v2187 = vld [vmem:[%s2183 + $0xc] sm:$0xf]
        %v2188 = vld [vmem:[%s2183 + $0x10] sm:$0xf]
        %v2194 = vunpack.c.l.b16 %v2184
        %v2195 = vunpack.c.l.b16 %v2185
        %v2196 = vunpack.c.l.b16 %v2186
        %v2197 = vunpack.c.l.b16 %v2187
        %v2198 = vunpack.c.l.b16 %v2188
        %v2199 = vpack.c.b16 %v2195, %v2194
        %v2200 = vpack.c.b16 %v2197, %v2196
        %v2201 = vpack.c.b16 %v2198, %v2198
        %v2205 = vsel %vm402, %v2173, 0
        %v2208 = vsel %vm402, %v2174, 0
        %v2211 = vsel %vm402, %v2175, 0
        %v2214 = vsel %vm402, %v2176, 0
        %v2217 = vsel %vm402, %v2177, 0
        %v2220 = vsel %vm402, %v2178, 0
        %v2223 = vsel %vm402, %v2179, 0
        %v2226 = vsel %vm402, %v2180, 0
        %v2229 = vsel %vm402, %v2181, 0
        %v2232 = vsel %vm402, %v2182, 0
        %v2235 = vsel %vm433, %v2201, 0
        %2237 = vmatprep.subr.bf16.mxu0 0
        %2238 = vmatpush1.bf16.msra.mxu0 0
        %2239 = vmatprep.subr.bf16.mxu0 0
        %2240 = vmatpush1.bf16.msra.mxu0 0
        %2241 = vmatprep.subr.bf16.mxu0 0
        %2242 = vmatpush1.bf16.msra.mxu0 0
        %2243 = vmatprep.subr.bf16.mxu0 0
        %2244 = vmatpush1.bf16.msra.mxu0 0
        %2245 = vmatprep.subr.bf16.mxu0 0
        %2246 = vmatpush1.bf16.msra.mxu0 0
        %2247 = vmatprep.subr.bf16.mxu0 0
        %2248 = vmatpush1.bf16.msra.mxu0 %v2235
        %2249 = vmatprep.subr.bf16.mxu0 0
        %2250 = vmatpush1.bf16.msra.mxu0 %v2200
        %2251 = vmatprep.subr.bf16.mxu0 0
        %2252 = vmatpush1.bf16.msra.mxu0 %v2199
        %2253 = vmatprep.subr.bf16.mxu0 0
        %2254 = vmatpush2.bf16.msra.mxu0 0
        %2255 = vmatprep.subr.bf16.mxu0 0
        %2256 = vmatpush2.bf16.msra.mxu0 0
        %2257 = vmatprep.subr.bf16.mxu0 0
        %2258 = vmatpush2.bf16.msra.mxu0 0
        %2259 = vmatprep.subr.bf16.mxu0 0
        %2260 = vmatpush2.bf16.msra.mxu0 0
        %2261 = vmatprep.subr.bf16.mxu0 0
        %2262 = vmatpush2.bf16.msra.mxu0 0
        %2263 = vmatprep.subr.bf16.mxu0 0
        %2264 = vmatpush2.bf16.msra.mxu0 0
        %2265 = vmatprep.subr.bf16.mxu0 0
        %2266 = vmatpush2.bf16.msra.mxu0 0
        %2267 = vmatprep.subr.bf16.mxu0 0
        %2268 = vmatpush2.bf16.msra.mxu0 0
        %2269 = vmatprep.mubr.bf16.mxu0 0
        %2270 = vmatmul.mubr.bf16.gmra.mxu0 %v2205
        %v2271 = vpop.f32.mrf.mxu0
        %v2272 = vadd.f32 0.0, %v2271
        %v2273 = vpop.f32.mrf.mxu0
        %v2274 = vpop.f32.mrf.mxu0
        %v2275 = vadd.f32 0.0, %v2274
        %v2276 = vpop.f32.mrf.mxu0
        %2277 = vmatprep.mubr.bf16.mxu0 0
        %2278 = vmatmul.mubr.bf16.gmra.mxu0 %v2208
        %v2279 = vpop.f32.mrf.mxu0
        %v2280 = vadd.f32 0.0, %v2279
        %v2281 = vpop.f32.mrf.mxu0
        %v2282 = vpop.f32.mrf.mxu0
        %v2283 = vadd.f32 0.0, %v2282
        %v2284 = vpop.f32.mrf.mxu0
        %2285 = vmatprep.mubr.bf16.mxu0 0
        %2286 = vmatmul.mubr.bf16.gmra.mxu0 %v2211
        %v2287 = vpop.f32.mrf.mxu0
        %v2288 = vadd.f32 0.0, %v2287
        %v2289 = vpop.f32.mrf.mxu0
        %v2290 = vpop.f32.mrf.mxu0
        %v2291 = vadd.f32 0.0, %v2290
        %v2292 = vpop.f32.mrf.mxu0
        %2293 = vmatprep.mubr.bf16.mxu0 0
        %2294 = vmatmul.mubr.bf16.gmra.mxu0 %v2214
        %v2295 = vpop.f32.mrf.mxu0
        %v2296 = vadd.f32 0.0, %v2295
        %v2297 = vpop.f32.mrf.mxu0
        %v2298 = vpop.f32.mrf.mxu0
        %v2299 = vadd.f32 0.0, %v2298
        %v2300 = vpop.f32.mrf.mxu0
        %2301 = vmatprep.mubr.bf16.mxu0 0
        %2302 = vmatmul.mubr.bf16.gmra.mxu0 %v2217
        %v2303 = vpop.f32.mrf.mxu0
        %v2304 = vadd.f32 0.0, %v2303
        %v2305 = vpop.f32.mrf.mxu0
        %v2306 = vpop.f32.mrf.mxu0
        %v2307 = vadd.f32 0.0, %v2306
        %v2308 = vpop.f32.mrf.mxu0
        %2309 = vmatprep.mubr.bf16.mxu0 0
        %2310 = vmatmul.mubr.bf16.gmra.mxu0 %v2220
        %v2311 = vpop.f32.mrf.mxu0
        %v2312 = vadd.f32 0.0, %v2311
        %v2313 = vpop.f32.mrf.mxu0
        %v2314 = vpop.f32.mrf.mxu0
        %v2315 = vadd.f32 0.0, %v2314
        %v2316 = vpop.f32.mrf.mxu0
        %2317 = vmatprep.mubr.bf16.mxu0 0
        %2318 = vmatmul.mubr.bf16.gmra.mxu0 %v2223
        %v2319 = vpop.f32.mrf.mxu0
        %v2320 = vadd.f32 0.0, %v2319
        %v2321 = vpop.f32.mrf.mxu0
        %v2322 = vpop.f32.mrf.mxu0
        %v2323 = vadd.f32 0.0, %v2322
        %v2324 = vpop.f32.mrf.mxu0
        %2325 = vmatprep.mubr.bf16.mxu0 0
        %2326 = vmatmul.mubr.bf16.gmra.mxu0 %v2226
        %v2327 = vpop.f32.mrf.mxu0
        %v2328 = vadd.f32 0.0, %v2327
        %v2329 = vpop.f32.mrf.mxu0
        %v2330 = vpop.f32.mrf.mxu0
        %v2331 = vadd.f32 0.0, %v2330
        %v2332 = vpop.f32.mrf.mxu0
        %2333 = vmatprep.mubr.bf16.mxu0 0
        %2334 = vmatmul.mubr.bf16.gmra.mxu0 %v2229
        %v2335 = vpop.f32.mrf.mxu0
        %v2336 = vadd.f32 0.0, %v2335
        %v2337 = vpop.f32.mrf.mxu0
        %v2338 = vpop.f32.mrf.mxu0
        %v2339 = vadd.f32 0.0, %v2338
        %v2340 = vpop.f32.mrf.mxu0
        %2341 = vmatprep.mubr.bf16.mxu0 0
        %2342 = vmatmul.mubr.bf16.gmra.mxu0 %v2232
        %v2343 = vpop.f32.mrf.mxu0
        %v2344 = vadd.f32 0.0, %v2343
        %v2345 = vpop.f32.mrf.mxu0
        %v2346 = vpop.f32.mrf.mxu0
        %v2347 = vadd.f32 0.0, %v2346
        %v2348 = vpop.f32.mrf.mxu0
        %2349 = vdwg.mxu0
        %v2350 = vadd.f32 %v2113, %v2272
        %v2351 = vadd.f32 %v2114, %v2275
        %v2352 = vadd.f32 %v2115, %v2280
        %v2353 = vadd.f32 %v2116, %v2283
        %v2354 = vadd.f32 %v2117, %v2288
        %v2355 = vadd.f32 %v2118, %v2291
        %v2356 = vadd.f32 %v2119, %v2296
        %v2357 = vadd.f32 %v2120, %v2299
        %v2358 = vadd.f32 %v2121, %v2304
        %v2359 = vadd.f32 %v2122, %v2307
        %v2360 = vadd.f32 %v2123, %v2312
        %v2361 = vadd.f32 %v2124, %v2315
        %v2362 = vadd.f32 %v2125, %v2320
        %v2363 = vadd.f32 %v2126, %v2323
        %v2364 = vadd.f32 %v2127, %v2328
        %v2365 = vadd.f32 %v2128, %v2331
        %v2366 = vadd.f32 %v2129, %v2336
        %v2367 = vadd.f32 %v2130, %v2339
        %v2368 = vadd.f32 %v2131, %v2344
        %v2369 = vadd.f32 %v2132, %v2347
        %s2370 = scalar_lea.vmem %s275, 9
        %v2371 = vld [vmem:[%s2370] ss:$5 sm:$0xff]
        %s2372 = scalar_lea.vmem %s275, 49
        %v2373 = vld [vmem:[%s2372] ss:$5 sm:$0xff]
        %s2374 = scalar_lea.vmem %s275, 89
        %v2375 = vld [vmem:[%s2374] ss:$5 sm:$0xff]
        %s2376 = scalar_lea.vmem %s275, 129
        %v2377 = vld [vmem:[%s2376] ss:$5 sm:$0xff]
        %s2378 = scalar_lea.vmem %s275, 169
        %v2379 = vld [vmem:[%s2378] ss:$5 sm:$0xff]
        %s2380 = scalar_lea.vmem %s275, 209
        %v2381 = vld [vmem:[%s2380] ss:$5 sm:$0xff]
        %s2382 = scalar_lea.vmem %s275, 249
        %v2383 = vld [vmem:[%s2382] ss:$5 sm:$0xff]
        %s2384 = scalar_lea.vmem %s275, 289
        %v2385 = vld [vmem:[%s2384] ss:$5 sm:$0xff]
        %s2386 = scalar_lea.vmem %s275, 329
        %v2387 = vld [vmem:[%s2386] ss:$5 sm:$0xff]
        %s2388 = scalar_lea.vmem %s275, 369
        %v2389 = vld [vmem:[%s2388] ss:$5 sm:$0xff]
        %s2390 = scalar_lea.vmem %s275, 409
        %v2391 = vld [vmem:[%s2390] ss:$5 sm:$0xff]
        %s2392 = scalar_lea.vmem %s275, 449
        %v2393 = vld [vmem:[%s2392] ss:$5 sm:$0xff]
        %s2394 = scalar_lea.vmem %s275, 489
        %v2395 = vld [vmem:[%s2394] ss:$5 sm:$0xff]
        %s2396 = scalar_lea.vmem %s275, 529
        %v2397 = vld [vmem:[%s2396] ss:$5 sm:$0xff]
        %s2398 = scalar_lea.vmem %s275, 569
        %v2399 = vld [vmem:[%s2398] ss:$5 sm:$0xff]
        %s2400 = scalar_lea.vmem %s275, 609
        %v2401 = vld [vmem:[%s2400] ss:$5 sm:$0xff]
        %s2402 = scalar_lea.vmem %s275, 649
        %v2403 = vld [vmem:[%s2402] ss:$5 sm:$0xff]
        %s2404 = scalar_lea.vmem %s275, 689
        %v2405 = vld [vmem:[%s2404] ss:$5 sm:$0xff]
        %s2406 = scalar_lea.vmem %s275, 729
        %v2407 = vld [vmem:[%s2406] ss:$5 sm:$0xff]
        %s2408 = scalar_lea.vmem %s275, 769
        %v2409 = vld [vmem:[%s2408] ss:$5 sm:$0x7f]
        %v2410 = vpack.c.bf16 %v2373, %v2371
        %v2411 = vpack.c.bf16 %v2377, %v2375
        %v2412 = vpack.c.bf16 %v2381, %v2379
        %v2413 = vpack.c.bf16 %v2385, %v2383
        %v2414 = vpack.c.bf16 %v2389, %v2387
        %v2415 = vpack.c.bf16 %v2393, %v2391
        %v2416 = vpack.c.bf16 %v2397, %v2395
        %v2417 = vpack.c.bf16 %v2401, %v2399
        %v2418 = vpack.c.bf16 %v2405, %v2403
        %v2419 = vpack.c.bf16 %v2409, %v2407
        %s2420 = scalar_lea.vmem %s1, 180
        %v2421 = vld [vmem:[%s2420] sm:$0xf]
        %v2422 = vld [vmem:[%s2420 + $0x4] sm:$0xf]
        %v2423 = vld [vmem:[%s2420 + $0x8] sm:$0xf]
        %v2424 = vld [vmem:[%s2420 + $0xc] sm:$0xf]
        %v2425 = vld [vmem:[%s2420 + $0x10] sm:$0xf]
        %v2431 = vunpack.c.l.b16 %v2421
        %v2432 = vunpack.c.l.b16 %v2422
        %v2433 = vunpack.c.l.b16 %v2423
        %v2434 = vunpack.c.l.b16 %v2424
        %v2435 = vunpack.c.l.b16 %v2425
        %v2436 = vpack.c.b16 %v2432, %v2431
        %v2437 = vpack.c.b16 %v2434, %v2433
        %v2438 = vpack.c.b16 %v2435, %v2435
        %v2442 = vsel %vm402, %v2410, 0
        %v2445 = vsel %vm402, %v2411, 0
        %v2448 = vsel %vm402, %v2412, 0
        %v2451 = vsel %vm402, %v2413, 0
        %v2454 = vsel %vm402, %v2414, 0
        %v2457 = vsel %vm402, %v2415, 0
        %v2460 = vsel %vm402, %v2416, 0
        %v2463 = vsel %vm402, %v2417, 0
        %v2466 = vsel %vm402, %v2418, 0
        %v2469 = vsel %vm402, %v2419, 0
        %v2472 = vsel %vm433, %v2438, 0
        %2474 = vmatprep.subr.bf16.mxu0 0
        %2475 = vmatpush1.bf16.msra.mxu0 0
        %2476 = vmatprep.subr.bf16.mxu0 0
        %2477 = vmatpush1.bf16.msra.mxu0 0
        %2478 = vmatprep.subr.bf16.mxu0 0
        %2479 = vmatpush1.bf16.msra.mxu0 0
        %2480 = vmatprep.subr.bf16.mxu0 0
        %2481 = vmatpush1.bf16.msra.mxu0 0
        %2482 = vmatprep.subr.bf16.mxu0 0
        %2483 = vmatpush1.bf16.msra.mxu0 0
        %2484 = vmatprep.subr.bf16.mxu0 0
        %2485 = vmatpush1.bf16.msra.mxu0 %v2472
        %2486 = vmatprep.subr.bf16.mxu0 0
        %2487 = vmatpush1.bf16.msra.mxu0 %v2437
        %2488 = vmatprep.subr.bf16.mxu0 0
        %2489 = vmatpush1.bf16.msra.mxu0 %v2436
        %2490 = vmatprep.subr.bf16.mxu0 0
        %2491 = vmatpush2.bf16.msra.mxu0 0
        %2492 = vmatprep.subr.bf16.mxu0 0
        %2493 = vmatpush2.bf16.msra.mxu0 0
        %2494 = vmatprep.subr.bf16.mxu0 0
        %2495 = vmatpush2.bf16.msra.mxu0 0
        %2496 = vmatprep.subr.bf16.mxu0 0
        %2497 = vmatpush2.bf16.msra.mxu0 0
        %2498 = vmatprep.subr.bf16.mxu0 0
        %2499 = vmatpush2.bf16.msra.mxu0 0
        %2500 = vmatprep.subr.bf16.mxu0 0
        %2501 = vmatpush2.bf16.msra.mxu0 0
        %2502 = vmatprep.subr.bf16.mxu0 0
        %2503 = vmatpush2.bf16.msra.mxu0 0
        %2504 = vmatprep.subr.bf16.mxu0 0
        %2505 = vmatpush2.bf16.msra.mxu0 0
        %2506 = vmatprep.mubr.bf16.mxu0 0
        %2507 = vmatmul.mubr.bf16.gmra.mxu0 %v2442
        %v2508 = vpop.f32.mrf.mxu0
        %v2509 = vadd.f32 0.0, %v2508
        %v2510 = vpop.f32.mrf.mxu0
        %v2511 = vpop.f32.mrf.mxu0
        %v2512 = vadd.f32 0.0, %v2511
        %v2513 = vpop.f32.mrf.mxu0
        %2514 = vmatprep.mubr.bf16.mxu0 0
        %2515 = vmatmul.mubr.bf16.gmra.mxu0 %v2445
        %v2516 = vpop.f32.mrf.mxu0
        %v2517 = vadd.f32 0.0, %v2516
        %v2518 = vpop.f32.mrf.mxu0
        %v2519 = vpop.f32.mrf.mxu0
        %v2520 = vadd.f32 0.0, %v2519
        %v2521 = vpop.f32.mrf.mxu0
        %2522 = vmatprep.mubr.bf16.mxu0 0
        %2523 = vmatmul.mubr.bf16.gmra.mxu0 %v2448
        %v2524 = vpop.f32.mrf.mxu0
        %v2525 = vadd.f32 0.0, %v2524
        %v2526 = vpop.f32.mrf.mxu0
        %v2527 = vpop.f32.mrf.mxu0
        %v2528 = vadd.f32 0.0, %v2527
        %v2529 = vpop.f32.mrf.mxu0
        %2530 = vmatprep.mubr.bf16.mxu0 0
        %2531 = vmatmul.mubr.bf16.gmra.mxu0 %v2451
        %v2532 = vpop.f32.mrf.mxu0
        %v2533 = vadd.f32 0.0, %v2532
        %v2534 = vpop.f32.mrf.mxu0
        %v2535 = vpop.f32.mrf.mxu0
        %v2536 = vadd.f32 0.0, %v2535
        %v2537 = vpop.f32.mrf.mxu0
        %2538 = vmatprep.mubr.bf16.mxu0 0
        %2539 = vmatmul.mubr.bf16.gmra.mxu0 %v2454
        %v2540 = vpop.f32.mrf.mxu0
        %v2541 = vadd.f32 0.0, %v2540
        %v2542 = vpop.f32.mrf.mxu0
        %v2543 = vpop.f32.mrf.mxu0
        %v2544 = vadd.f32 0.0, %v2543
        %v2545 = vpop.f32.mrf.mxu0
        %2546 = vmatprep.mubr.bf16.mxu0 0
        %2547 = vmatmul.mubr.bf16.gmra.mxu0 %v2457
        %v2548 = vpop.f32.mrf.mxu0
        %v2549 = vadd.f32 0.0, %v2548
        %v2550 = vpop.f32.mrf.mxu0
        %v2551 = vpop.f32.mrf.mxu0
        %v2552 = vadd.f32 0.0, %v2551
        %v2553 = vpop.f32.mrf.mxu0
        %2554 = vmatprep.mubr.bf16.mxu0 0
        %2555 = vmatmul.mubr.bf16.gmra.mxu0 %v2460
        %v2556 = vpop.f32.mrf.mxu0
        %v2557 = vadd.f32 0.0, %v2556
        %v2558 = vpop.f32.mrf.mxu0
        %v2559 = vpop.f32.mrf.mxu0
        %v2560 = vadd.f32 0.0, %v2559
        %v2561 = vpop.f32.mrf.mxu0
        %2562 = vmatprep.mubr.bf16.mxu0 0
        %2563 = vmatmul.mubr.bf16.gmra.mxu0 %v2463
        %v2564 = vpop.f32.mrf.mxu0
        %v2565 = vadd.f32 0.0, %v2564
        %v2566 = vpop.f32.mrf.mxu0
        %v2567 = vpop.f32.mrf.mxu0
        %v2568 = vadd.f32 0.0, %v2567
        %v2569 = vpop.f32.mrf.mxu0
        %2570 = vmatprep.mubr.bf16.mxu0 0
        %2571 = vmatmul.mubr.bf16.gmra.mxu0 %v2466
        %v2572 = vpop.f32.mrf.mxu0
        %v2573 = vadd.f32 0.0, %v2572
        %v2574 = vpop.f32.mrf.mxu0
        %v2575 = vpop.f32.mrf.mxu0
        %v2576 = vadd.f32 0.0, %v2575
        %v2577 = vpop.f32.mrf.mxu0
        %2578 = vmatprep.mubr.bf16.mxu0 0
        %2579 = vmatmul.mubr.bf16.gmra.mxu0 %v2469
        %v2580 = vpop.f32.mrf.mxu0
        %v2581 = vadd.f32 0.0, %v2580
        %v2582 = vpop.f32.mrf.mxu0
        %v2583 = vpop.f32.mrf.mxu0
        %v2584 = vadd.f32 0.0, %v2583
        %v2585 = vpop.f32.mrf.mxu0
        %2586 = vdwg.mxu0
        %v2587 = vadd.f32 %v2350, %v2509
        %v2588 = vadd.f32 %v2351, %v2512
        %v2589 = vadd.f32 %v2352, %v2517
        %v2590 = vadd.f32 %v2353, %v2520
        %v2591 = vadd.f32 %v2354, %v2525
        %v2592 = vadd.f32 %v2355, %v2528
        %v2593 = vadd.f32 %v2356, %v2533
        %v2594 = vadd.f32 %v2357, %v2536
        %v2595 = vadd.f32 %v2358, %v2541
        %v2596 = vadd.f32 %v2359, %v2544
        %v2597 = vadd.f32 %v2360, %v2549
        %v2598 = vadd.f32 %v2361, %v2552
        %v2599 = vadd.f32 %v2362, %v2557
        %v2600 = vadd.f32 %v2363, %v2560
        %v2601 = vadd.f32 %v2364, %v2565
        %v2602 = vadd.f32 %v2365, %v2568
        %v2603 = vadd.f32 %v2366, %v2573
        %v2604 = vadd.f32 %v2367, %v2576
        %v2605 = vadd.f32 %v2368, %v2581
        %v2606 = vadd.f32 %v2369, %v2584
        %v2607 = vld [vmem:[%s6] sm:$0x1]
        %v2608 = vlaneseq
        %v2609 = vshrl.u32 %v2608, 7
        %v2610 = vsub.s32 0, %v2609
        %v2611 = vrot.slane %v2607, %v2610
        %v2612 = vadd.f32 %v2587, %v2611
        %v2613 = vadd.f32 %v2588, %v2611
        %v2614 = vadd.f32 %v2589, %v2611
        %v2615 = vadd.f32 %v2590, %v2611
        %v2616 = vadd.f32 %v2591, %v2611
        %v2617 = vadd.f32 %v2592, %v2611
        %v2618 = vadd.f32 %v2593, %v2611
        %v2619 = vadd.f32 %v2594, %v2611
        %v2620 = vadd.f32 %v2595, %v2611
        %v2621 = vadd.f32 %v2596, %v2611
        %v2622 = vadd.f32 %v2597, %v2611
        %v2623 = vadd.f32 %v2598, %v2611
        %v2624 = vadd.f32 %v2599, %v2611
        %v2625 = vadd.f32 %v2600, %v2611
        %v2626 = vadd.f32 %v2601, %v2611
        %v2627 = vadd.f32 %v2602, %v2611
        %v2628 = vadd.f32 %v2603, %v2611
        %v2629 = vadd.f32 %v2604, %v2611
        %v2630 = vadd.f32 %v2605, %v2611
        %v2631 = vadd.f32 %v2606, %v2611
        %v2632 = vmax.f32 %v2612, 0.0
        %v2633 = vmax.f32 %v2613, 0.0
        %v2634 = vmax.f32 %v2614, 0.0
        %v2635 = vmax.f32 %v2615, 0.0
        %v2636 = vmax.f32 %v2616, 0.0
        %v2637 = vmax.f32 %v2617, 0.0
        %v2638 = vmax.f32 %v2618, 0.0
        %v2639 = vmax.f32 %v2619, 0.0
        %v2640 = vmax.f32 %v2620, 0.0
        %v2641 = vmax.f32 %v2621, 0.0
        %v2642 = vmax.f32 %v2622, 0.0
        %v2643 = vmax.f32 %v2623, 0.0
        %v2644 = vmax.f32 %v2624, 0.0
        %v2645 = vmax.f32 %v2625, 0.0
        %v2646 = vmax.f32 %v2626, 0.0
        %v2647 = vmax.f32 %v2627, 0.0
        %v2648 = vmax.f32 %v2628, 0.0
        %v2649 = vmax.f32 %v2629, 0.0
        %v2650 = vmax.f32 %v2630, 0.0
        %v2651 = vmax.f32 %v2631, 0.0
        %v2652 = vld [vmem:[%s6 + $0x1] sm:$0x1]
        %v2653 = vlaneseq
        %v2654 = vshrl.u32 %v2653, 7
        %v2655 = vsub.s32 0, %v2654
        %v2656 = vrot.slane %v2652, %v2655
        %v2657 = vmul.f32 %v2632, %v2656
        %v2658 = vmul.f32 %v2633, %v2656
        %v2659 = vmul.f32 %v2634, %v2656
        %v2660 = vmul.f32 %v2635, %v2656
        %v2661 = vmul.f32 %v2636, %v2656
        %v2662 = vmul.f32 %v2637, %v2656
        %v2663 = vmul.f32 %v2638, %v2656
        %v2664 = vmul.f32 %v2639, %v2656
        %v2665 = vmul.f32 %v2640, %v2656
        %v2666 = vmul.f32 %v2641, %v2656
        %v2667 = vmul.f32 %v2642, %v2656
        %v2668 = vmul.f32 %v2643, %v2656
        %v2669 = vmul.f32 %v2644, %v2656
        %v2670 = vmul.f32 %v2645, %v2656
        %v2671 = vmul.f32 %v2646, %v2656
        %v2672 = vmul.f32 %v2647, %v2656
        %v2673 = vmul.f32 %v2648, %v2656
        %v2674 = vmul.f32 %v2649, %v2656
        %v2675 = vmul.f32 %v2650, %v2656
        %v2676 = vmul.f32 %v2651, %v2656
        %v2677 = vld [vmem:[%s6 + $0x2] sm:$0x1]
        %v2678 = vlaneseq
        %v2679 = vshrl.u32 %v2678, 7
        %v2680 = vsub.s32 0, %v2679
        %v2681 = vrot.slane %v2677, %v2680
        %v2682 = vadd.f32 %v2657, %v2681
        %v2683 = vadd.f32 %v2658, %v2681
        %v2684 = vadd.f32 %v2659, %v2681
        %v2685 = vadd.f32 %v2660, %v2681
        %v2686 = vadd.f32 %v2661, %v2681
        %v2687 = vadd.f32 %v2662, %v2681
        %v2688 = vadd.f32 %v2663, %v2681
        %v2689 = vadd.f32 %v2664, %v2681
        %v2690 = vadd.f32 %v2665, %v2681
        %v2691 = vadd.f32 %v2666, %v2681
        %v2692 = vadd.f32 %v2667, %v2681
        %v2693 = vadd.f32 %v2668, %v2681
        %v2694 = vadd.f32 %v2669, %v2681
        %v2695 = vadd.f32 %v2670, %v2681
        %v2696 = vadd.f32 %v2671, %v2681
        %v2697 = vadd.f32 %v2672, %v2681
        %v2698 = vadd.f32 %v2673, %v2681
        %v2699 = vadd.f32 %v2674, %v2681
        %v2700 = vadd.f32 %v2675, %v2681
        %v2701 = vadd.f32 %v2676, %v2681
        %2702 = vst [vmem:[#allocation2] sm:$0xff] %v2682
        %2703 = vst [vmem:[#allocation2 + $0x8] sm:$0xff] %v2683
        %2704 = vst [vmem:[#allocation2 + $0x10] sm:$0xff] %v2684
        %2705 = vst [vmem:[#allocation2 + $0x18] sm:$0xff] %v2685
        %2706 = vst [vmem:[#allocation2 + $0x20] sm:$0xff] %v2686
        %2707 = vst [vmem:[#allocation2 + $0x28] sm:$0xff] %v2687
        %2708 = vst [vmem:[#allocation2 + $0x30] sm:$0xff] %v2688
        %2709 = vst [vmem:[#allocation2 + $0x38] sm:$0xff] %v2689
        %2710 = vst [vmem:[#allocation2 + $0x40] sm:$0xff] %v2690
        %2711 = vst [vmem:[#allocation2 + $0x48] sm:$0xff] %v2691
        %2712 = vst [vmem:[#allocation2 + $0x50] sm:$0xff] %v2692
        %2713 = vst [vmem:[#allocation2 + $0x58] sm:$0xff] %v2693
        %2714 = vst [vmem:[#allocation2 + $0x60] sm:$0xff] %v2694
        %2715 = vst [vmem:[#allocation2 + $0x68] sm:$0xff] %v2695
        %2716 = vst [vmem:[#allocation2 + $0x70] sm:$0xff] %v2696
        %2717 = vst [vmem:[#allocation2 + $0x78] sm:$0xff] %v2697
        %2718 = vst [vmem:[#allocation2 + $0x80] sm:$0xff] %v2698
        %2719 = vst [vmem:[#allocation2 + $0x88] sm:$0xff] %v2699
        %2720 = vst [vmem:[#allocation2 + $0x90] sm:$0xff] %v2700
        %2721 = vst [vmem:[#allocation2 + $0x98] sm:$0x7f] %v2701
        %v2722 = vld [vmem:[#allocation2] ss:$5 sm:$0xff]
        %s2723 = scalar_lea.vmem [#allocation2], 40
        %v2724 = vld [vmem:[%s2723] ss:$5 sm:$0xff]
        %s2725 = scalar_lea.vmem [#allocation2], 80
        %v2726 = vld [vmem:[%s2725] ss:$5 sm:$0xff]
        %s2727 = scalar_lea.vmem [#allocation2], 120
        %v2728 = vld [vmem:[%s2727] ss:$5 sm:$0x3f]
        %v2729 = vpack.c.bf16 %v2724, %v2722
        %v2730 = vpack.c.bf16 %v2728, %v2726
        %v2731 = vld [vmem:[%s2] sm:$0xf]
        %v2732 = vld [vmem:[%s2 + $0x4] sm:$0xf]
        %v2733 = vld [vmem:[%s2 + $0x8] sm:$0xf]
        %v2734 = vld [vmem:[%s2 + $0xc] sm:$0xf]
        %v2735 = vld [vmem:[%s2 + $0x10] sm:$0xf]
        %v2736 = vld [vmem:[%s2 + $0x14] sm:$0xf]
        %v2737 = vld [vmem:[%s2 + $0x18] sm:$0xf]
        %v2738 = vld [vmem:[%s2 + $0x1c] sm:$0xf]
        %v2739 = vld [vmem:[%s2 + $0x20] sm:$0xf]
        %v2740 = vld [vmem:[%s2 + $0x24] sm:$0xf]
        %v2741 = vld [vmem:[%s2 + $0x28] sm:$0xf]
        %v2742 = vld [vmem:[%s2 + $0x2c] sm:$0xf]
        %v2743 = vld [vmem:[%s2 + $0x30] sm:$0xf]
        %v2744 = vld [vmem:[%s2 + $0x34] sm:$0xf]
        %v2745 = vld [vmem:[%s2 + $0x38] sm:$0xf]
        %v2746 = vld [vmem:[%s2 + $0x3c] sm:$0xf]
        %s2747 = scalar_lea.vmem [#allocation2], 1
        %v2748 = vld [vmem:[%s2747] ss:$5 sm:$0xff]
        %s2749 = scalar_lea.vmem [#allocation2], 41
        %v2750 = vld [vmem:[%s2749] ss:$5 sm:$0xff]
        %s2751 = scalar_lea.vmem [#allocation2], 81
        %v2752 = vld [vmem:[%s2751] ss:$5 sm:$0xff]
        %s2753 = scalar_lea.vmem [#allocation2], 121
        %v2754 = vld [vmem:[%s2753] ss:$5 sm:$0x3f]
        %v2755 = vpack.c.bf16 %v2750, %v2748
        %v2756 = vpack.c.bf16 %v2754, %v2752
        %s2757 = scalar_lea.vmem %s2, 64
        %v2758 = vld [vmem:[%s2757] sm:$0xf]
        %v2759 = vld [vmem:[%s2757 + $0x4] sm:$0xf]
        %v2760 = vld [vmem:[%s2757 + $0x8] sm:$0xf]
        %v2761 = vld [vmem:[%s2757 + $0xc] sm:$0xf]
        %v2762 = vld [vmem:[%s2757 + $0x10] sm:$0xf]
        %v2763 = vld [vmem:[%s2757 + $0x14] sm:$0xf]
        %v2764 = vld [vmem:[%s2757 + $0x18] sm:$0xf]
        %v2765 = vld [vmem:[%s2757 + $0x1c] sm:$0xf]
        %v2766 = vld [vmem:[%s2757 + $0x20] sm:$0xf]
        %v2767 = vld [vmem:[%s2757 + $0x24] sm:$0xf]
        %v2768 = vld [vmem:[%s2757 + $0x28] sm:$0xf]
        %v2769 = vld [vmem:[%s2757 + $0x2c] sm:$0xf]
        %v2770 = vld [vmem:[%s2757 + $0x30] sm:$0xf]
        %v2771 = vld [vmem:[%s2757 + $0x34] sm:$0xf]
        %v2772 = vld [vmem:[%s2757 + $0x38] sm:$0xf]
        %v2773 = vld [vmem:[%s2757 + $0x3c] sm:$0xf]
        %v2790 = vunpack.c.l.b16 %v2758
        %v2791 = vunpack.c.l.b16 %v2759
        %v2792 = vunpack.c.l.b16 %v2760
        %v2793 = vunpack.c.l.b16 %v2761
        %v2794 = vunpack.c.l.b16 %v2762
        %v2795 = vunpack.c.l.b16 %v2763
        %v2796 = vunpack.c.l.b16 %v2764
        %v2797 = vunpack.c.l.b16 %v2765
        %v2798 = vunpack.c.l.b16 %v2766
        %v2799 = vunpack.c.l.b16 %v2767
        %v2800 = vunpack.c.l.b16 %v2768
        %v2801 = vunpack.c.l.b16 %v2769
        %v2802 = vunpack.c.l.b16 %v2770
        %v2803 = vunpack.c.l.b16 %v2771
        %v2804 = vunpack.c.l.b16 %v2772
        %v2805 = vunpack.c.l.b16 %v2773
        %v2806 = vpack.c.b16 %v2791, %v2790
        %v2807 = vpack.c.b16 %v2793, %v2792
        %v2808 = vpack.c.b16 %v2795, %v2794
        %v2809 = vpack.c.b16 %v2797, %v2796
        %v2810 = vpack.c.b16 %v2799, %v2798
        %v2811 = vpack.c.b16 %v2801, %v2800
        %v2812 = vpack.c.b16 %v2803, %v2802
        %v2813 = vpack.c.b16 %v2805, %v2804
        %2822 = vmatprep.subr.bf16.mxu0 0
        %2823 = vmatpush1.bf16.msra.mxu0 %v2813
        %2824 = vmatprep.subr.bf16.mxu0 0
        %2825 = vmatpush1.bf16.msra.mxu0 %v2812
        %2826 = vmatprep.subr.bf16.mxu0 0
        %2827 = vmatpush1.bf16.msra.mxu0 %v2811
        %2828 = vmatprep.subr.bf16.mxu0 0
        %2829 = vmatpush1.bf16.msra.mxu0 %v2810
        %2830 = vmatprep.subr.bf16.mxu0 0
        %2831 = vmatpush1.bf16.msra.mxu0 %v2809
        %2832 = vmatprep.subr.bf16.mxu0 0
        %2833 = vmatpush1.bf16.msra.mxu0 %v2808
        %2834 = vmatprep.subr.bf16.mxu0 0
        %2835 = vmatpush1.bf16.msra.mxu0 %v2807
        %2836 = vmatprep.subr.bf16.mxu0 0
        %2837 = vmatpush1.bf16.msra.mxu0 %v2806
        %2838 = vmatprep.subr.bf16.mxu0 0
        %2839 = vmatpush2.bf16.msra.mxu0 0
        %2840 = vmatprep.subr.bf16.mxu0 0
        %2841 = vmatpush2.bf16.msra.mxu0 0
        %2842 = vmatprep.subr.bf16.mxu0 0
        %2843 = vmatpush2.bf16.msra.mxu0 0
        %2844 = vmatprep.subr.bf16.mxu0 0
        %2845 = vmatpush2.bf16.msra.mxu0 0
        %2846 = vmatprep.subr.bf16.mxu0 0
        %2847 = vmatpush2.bf16.msra.mxu0 0
        %2848 = vmatprep.subr.bf16.mxu0 0
        %2849 = vmatpush2.bf16.msra.mxu0 0
        %2850 = vmatprep.subr.bf16.mxu0 0
        %2851 = vmatpush2.bf16.msra.mxu0 0
        %2852 = vmatprep.subr.bf16.mxu0 0
        %2853 = vmatpush2.bf16.msra.mxu0 0
        %2854 = vmatprep.mubr.bf16.mxu0 0
        %2855 = vmatmul.mubr.bf16.gmra.mxu0 %v2755
        %v2856 = vpop.f32.mrf.mxu0
        %v2857 = vadd.f32 0.0, %v2856
        %v2858 = vpop.f32.mrf.mxu0
        %v2859 = vpop.f32.mrf.mxu0
        %v2860 = vadd.f32 0.0, %v2859
        %v2861 = vpop.f32.mrf.mxu0
        %2862 = vmatprep.mubr.bf16.mxu0 0
        %2863 = vmatmul.mubr.bf16.gmra.mxu0 %v2756
        %v2864 = vpop.f32.mrf.mxu0
        %v2865 = vadd.f32 0.0, %v2864
        %v2866 = vpop.f32.mrf.mxu0
        %v2867 = vpop.f32.mrf.mxu0
        %v2868 = vadd.f32 0.0, %v2867
        %v2869 = vpop.f32.mrf.mxu0
        %2870 = vdwg.mxu0
        %v2887 = vunpack.c.l.b16 %v2731
        %v2888 = vunpack.c.l.b16 %v2732
        %v2889 = vunpack.c.l.b16 %v2733
        %v2890 = vunpack.c.l.b16 %v2734
        %v2891 = vunpack.c.l.b16 %v2735
        %v2892 = vunpack.c.l.b16 %v2736
        %v2893 = vunpack.c.l.b16 %v2737
        %v2894 = vunpack.c.l.b16 %v2738
        %v2895 = vunpack.c.l.b16 %v2739
        %v2896 = vunpack.c.l.b16 %v2740
        %v2897 = vunpack.c.l.b16 %v2741
        %v2898 = vunpack.c.l.b16 %v2742
        %v2899 = vunpack.c.l.b16 %v2743
        %v2900 = vunpack.c.l.b16 %v2744
        %v2901 = vunpack.c.l.b16 %v2745
        %v2902 = vunpack.c.l.b16 %v2746
        %v2903 = vpack.c.b16 %v2888, %v2887
        %v2904 = vpack.c.b16 %v2890, %v2889
        %v2905 = vpack.c.b16 %v2892, %v2891
        %v2906 = vpack.c.b16 %v2894, %v2893
        %v2907 = vpack.c.b16 %v2896, %v2895
        %v2908 = vpack.c.b16 %v2898, %v2897
        %v2909 = vpack.c.b16 %v2900, %v2899
        %v2910 = vpack.c.b16 %v2902, %v2901
        %2919 = vmatprep.subr.bf16.mxu0 0
        %2920 = vmatpush1.bf16.msra.mxu0 %v2910
        %2921 = vmatprep.subr.bf16.mxu0 0
        %2922 = vmatpush1.bf16.msra.mxu0 %v2909
        %2923 = vmatprep.subr.bf16.mxu0 0
        %2924 = vmatpush1.bf16.msra.mxu0 %v2908
        %2925 = vmatprep.subr.bf16.mxu0 0
        %2926 = vmatpush1.bf16.msra.mxu0 %v2907
        %2927 = vmatprep.subr.bf16.mxu0 0
        %2928 = vmatpush1.bf16.msra.mxu0 %v2906
        %2929 = vmatprep.subr.bf16.mxu0 0
        %2930 = vmatpush1.bf16.msra.mxu0 %v2905
        %2931 = vmatprep.subr.bf16.mxu0 0
        %2932 = vmatpush1.bf16.msra.mxu0 %v2904
        %2933 = vmatprep.subr.bf16.mxu0 0
        %2934 = vmatpush1.bf16.msra.mxu0 %v2903
        %2935 = vmatprep.subr.bf16.mxu0 0
        %2936 = vmatpush2.bf16.msra.mxu0 0
        %2937 = vmatprep.subr.bf16.mxu0 0
        %2938 = vmatpush2.bf16.msra.mxu0 0
        %2939 = vmatprep.subr.bf16.mxu0 0
        %2940 = vmatpush2.bf16.msra.mxu0 0
        %2941 = vmatprep.subr.bf16.mxu0 0
        %2942 = vmatpush2.bf16.msra.mxu0 0
        %2943 = vmatprep.subr.bf16.mxu0 0
        %2944 = vmatpush2.bf16.msra.mxu0 0
        %2945 = vmatprep.subr.bf16.mxu0 0
        %2946 = vmatpush2.bf16.msra.mxu0 0
        %2947 = vmatprep.subr.bf16.mxu0 0
        %2948 = vmatpush2.bf16.msra.mxu0 0
        %2949 = vmatprep.subr.bf16.mxu0 0
        %2950 = vmatpush2.bf16.msra.mxu0 0
        %2951 = vmatprep.mubr.bf16.mxu0 0
        %2952 = vmatmul.mubr.bf16.gmra.mxu0 %v2729
        %v2953 = vpop.f32.mrf.mxu0
        %v2954 = vadd.f32 %v2857, %v2953
        %v2955 = vpop.f32.mrf.mxu0
        %v2956 = vpop.f32.mrf.mxu0
        %v2957 = vadd.f32 %v2860, %v2956
        %v2958 = vpop.f32.mrf.mxu0
        %2959 = vmatprep.mubr.bf16.mxu0 0
        %2960 = vmatmul.mubr.bf16.gmra.mxu0 %v2730
        %v2961 = vpop.f32.mrf.mxu0
        %v2962 = vadd.f32 %v2865, %v2961
        %v2963 = vpop.f32.mrf.mxu0
        %v2964 = vpop.f32.mrf.mxu0
        %v2965 = vadd.f32 %v2868, %v2964
        %v2966 = vpop.f32.mrf.mxu0
        %2967 = vdwg.mxu0
        %s2968 = scalar_lea.vmem [#allocation2], 2
        %v2969 = vld [vmem:[%s2968] ss:$5 sm:$0xff]
        %s2970 = scalar_lea.vmem [#allocation2], 42
        %v2971 = vld [vmem:[%s2970] ss:$5 sm:$0xff]
        %s2972 = scalar_lea.vmem [#allocation2], 82
        %v2973 = vld [vmem:[%s2972] ss:$5 sm:$0xff]
        %s2974 = scalar_lea.vmem [#allocation2], 122
        %v2975 = vld [vmem:[%s2974] ss:$5 sm:$0x3f]
        %v2976 = vpack.c.bf16 %v2971, %v2969
        %v2977 = vpack.c.bf16 %v2975, %v2973
        %s2978 = scalar_lea.vmem %s2, 128
        %v2979 = vld [vmem:[%s2978] sm:$0xf]
        %v2980 = vld [vmem:[%s2978 + $0x4] sm:$0xf]
        %v2981 = vld [vmem:[%s2978 + $0x8] sm:$0xf]
        %v2982 = vld [vmem:[%s2978 + $0xc] sm:$0xf]
        %v2983 = vld [vmem:[%s2978 + $0x10] sm:$0xf]
        %v2984 = vld [vmem:[%s2978 + $0x14] sm:$0xf]
        %v2985 = vld [vmem:[%s2978 + $0x18] sm:$0xf]
        %v2986 = vld [vmem:[%s2978 + $0x1c] sm:$0xf]
        %v2987 = vld [vmem:[%s2978 + $0x20] sm:$0xf]
        %v2988 = vld [vmem:[%s2978 + $0x24] sm:$0xf]
        %v2989 = vld [vmem:[%s2978 + $0x28] sm:$0xf]
        %v2990 = vld [vmem:[%s2978 + $0x2c] sm:$0xf]
        %v2991 = vld [vmem:[%s2978 + $0x30] sm:$0xf]
        %v2992 = vld [vmem:[%s2978 + $0x34] sm:$0xf]
        %v2993 = vld [vmem:[%s2978 + $0x38] sm:$0xf]
        %v2994 = vld [vmem:[%s2978 + $0x3c] sm:$0xf]
        %v3011 = vunpack.c.l.b16 %v2979
        %v3012 = vunpack.c.l.b16 %v2980
        %v3013 = vunpack.c.l.b16 %v2981
        %v3014 = vunpack.c.l.b16 %v2982
        %v3015 = vunpack.c.l.b16 %v2983
        %v3016 = vunpack.c.l.b16 %v2984
        %v3017 = vunpack.c.l.b16 %v2985
        %v3018 = vunpack.c.l.b16 %v2986
        %v3019 = vunpack.c.l.b16 %v2987
        %v3020 = vunpack.c.l.b16 %v2988
        %v3021 = vunpack.c.l.b16 %v2989
        %v3022 = vunpack.c.l.b16 %v2990
        %v3023 = vunpack.c.l.b16 %v2991
        %v3024 = vunpack.c.l.b16 %v2992
        %v3025 = vunpack.c.l.b16 %v2993
        %v3026 = vunpack.c.l.b16 %v2994
        %v3027 = vpack.c.b16 %v3012, %v3011
        %v3028 = vpack.c.b16 %v3014, %v3013
        %v3029 = vpack.c.b16 %v3016, %v3015
        %v3030 = vpack.c.b16 %v3018, %v3017
        %v3031 = vpack.c.b16 %v3020, %v3019
        %v3032 = vpack.c.b16 %v3022, %v3021
        %v3033 = vpack.c.b16 %v3024, %v3023
        %v3034 = vpack.c.b16 %v3026, %v3025
        %3043 = vmatprep.subr.bf16.mxu0 0
        %3044 = vmatpush1.bf16.msra.mxu0 %v3034
        %3045 = vmatprep.subr.bf16.mxu0 0
        %3046 = vmatpush1.bf16.msra.mxu0 %v3033
        %3047 = vmatprep.subr.bf16.mxu0 0
        %3048 = vmatpush1.bf16.msra.mxu0 %v3032
        %3049 = vmatprep.subr.bf16.mxu0 0
        %3050 = vmatpush1.bf16.msra.mxu0 %v3031
        %3051 = vmatprep.subr.bf16.mxu0 0
        %3052 = vmatpush1.bf16.msra.mxu0 %v3030
        %3053 = vmatprep.subr.bf16.mxu0 0
        %3054 = vmatpush1.bf16.msra.mxu0 %v3029
        %3055 = vmatprep.subr.bf16.mxu0 0
        %3056 = vmatpush1.bf16.msra.mxu0 %v3028
        %3057 = vmatprep.subr.bf16.mxu0 0
        %3058 = vmatpush1.bf16.msra.mxu0 %v3027
        %3059 = vmatprep.subr.bf16.mxu0 0
        %3060 = vmatpush2.bf16.msra.mxu0 0
        %3061 = vmatprep.subr.bf16.mxu0 0
        %3062 = vmatpush2.bf16.msra.mxu0 0
        %3063 = vmatprep.subr.bf16.mxu0 0
        %3064 = vmatpush2.bf16.msra.mxu0 0
        %3065 = vmatprep.subr.bf16.mxu0 0
        %3066 = vmatpush2.bf16.msra.mxu0 0
        %3067 = vmatprep.subr.bf16.mxu0 0
        %3068 = vmatpush2.bf16.msra.mxu0 0
        %3069 = vmatprep.subr.bf16.mxu0 0
        %3070 = vmatpush2.bf16.msra.mxu0 0
        %3071 = vmatprep.subr.bf16.mxu0 0
        %3072 = vmatpush2.bf16.msra.mxu0 0
        %3073 = vmatprep.subr.bf16.mxu0 0
        %3074 = vmatpush2.bf16.msra.mxu0 0
        %3075 = vmatprep.mubr.bf16.mxu0 0
        %3076 = vmatmul.mubr.bf16.gmra.mxu0 %v2976
        %v3077 = vpop.f32.mrf.mxu0
        %v3078 = vadd.f32 0.0, %v3077
        %v3079 = vpop.f32.mrf.mxu0
        %v3080 = vpop.f32.mrf.mxu0
        %v3081 = vadd.f32 0.0, %v3080
        %v3082 = vpop.f32.mrf.mxu0
        %3083 = vmatprep.mubr.bf16.mxu0 0
        %3084 = vmatmul.mubr.bf16.gmra.mxu0 %v2977
        %v3085 = vpop.f32.mrf.mxu0
        %v3086 = vadd.f32 0.0, %v3085
        %v3087 = vpop.f32.mrf.mxu0
        %v3088 = vpop.f32.mrf.mxu0
        %v3089 = vadd.f32 0.0, %v3088
        %v3090 = vpop.f32.mrf.mxu0
        %3091 = vdwg.mxu0
        %v3092 = vadd.f32 %v2954, %v3078
        %v3093 = vadd.f32 %v2957, %v3081
        %v3094 = vadd.f32 %v2962, %v3086
        %v3095 = vadd.f32 %v2965, %v3089
        %s3096 = scalar_lea.vmem [#allocation2], 3
        %v3097 = vld [vmem:[%s3096] ss:$5 sm:$0xff]
        %s3098 = scalar_lea.vmem [#allocation2], 43
        %v3099 = vld [vmem:[%s3098] ss:$5 sm:$0xff]
        %s3100 = scalar_lea.vmem [#allocation2], 83
        %v3101 = vld [vmem:[%s3100] ss:$5 sm:$0xff]
        %s3102 = scalar_lea.vmem [#allocation2], 123
        %v3103 = vld [vmem:[%s3102] ss:$5 sm:$0x3f]
        %v3104 = vpack.c.bf16 %v3099, %v3097
        %v3105 = vpack.c.bf16 %v3103, %v3101
        %s3106 = scalar_lea.vmem %s2, 192
        %v3107 = vld [vmem:[%s3106] sm:$0xf]
        %v3108 = vld [vmem:[%s3106 + $0x4] sm:$0xf]
        %v3109 = vld [vmem:[%s3106 + $0x8] sm:$0xf]
        %v3110 = vld [vmem:[%s3106 + $0xc] sm:$0xf]
        %v3111 = vld [vmem:[%s3106 + $0x10] sm:$0xf]
        %v3112 = vld [vmem:[%s3106 + $0x14] sm:$0xf]
        %v3113 = vld [vmem:[%s3106 + $0x18] sm:$0xf]
        %v3114 = vld [vmem:[%s3106 + $0x1c] sm:$0xf]
        %v3115 = vld [vmem:[%s3106 + $0x20] sm:$0xf]
        %v3116 = vld [vmem:[%s3106 + $0x24] sm:$0xf]
        %v3117 = vld [vmem:[%s3106 + $0x28] sm:$0xf]
        %v3118 = vld [vmem:[%s3106 + $0x2c] sm:$0xf]
        %v3119 = vld [vmem:[%s3106 + $0x30] sm:$0xf]
        %v3120 = vld [vmem:[%s3106 + $0x34] sm:$0xf]
        %v3121 = vld [vmem:[%s3106 + $0x38] sm:$0xf]
        %v3122 = vld [vmem:[%s3106 + $0x3c] sm:$0xf]
        %v3139 = vunpack.c.l.b16 %v3107
        %v3140 = vunpack.c.l.b16 %v3108
        %v3141 = vunpack.c.l.b16 %v3109
        %v3142 = vunpack.c.l.b16 %v3110
        %v3143 = vunpack.c.l.b16 %v3111
        %v3144 = vunpack.c.l.b16 %v3112
        %v3145 = vunpack.c.l.b16 %v3113
        %v3146 = vunpack.c.l.b16 %v3114
        %v3147 = vunpack.c.l.b16 %v3115
        %v3148 = vunpack.c.l.b16 %v3116
        %v3149 = vunpack.c.l.b16 %v3117
        %v3150 = vunpack.c.l.b16 %v3118
        %v3151 = vunpack.c.l.b16 %v3119
        %v3152 = vunpack.c.l.b16 %v3120
        %v3153 = vunpack.c.l.b16 %v3121
        %v3154 = vunpack.c.l.b16 %v3122
        %v3155 = vpack.c.b16 %v3140, %v3139
        %v3156 = vpack.c.b16 %v3142, %v3141
        %v3157 = vpack.c.b16 %v3144, %v3143
        %v3158 = vpack.c.b16 %v3146, %v3145
        %v3159 = vpack.c.b16 %v3148, %v3147
        %v3160 = vpack.c.b16 %v3150, %v3149
        %v3161 = vpack.c.b16 %v3152, %v3151
        %v3162 = vpack.c.b16 %v3154, %v3153
        %3171 = vmatprep.subr.bf16.mxu0 0
        %3172 = vmatpush1.bf16.msra.mxu0 %v3162
        %3173 = vmatprep.subr.bf16.mxu0 0
        %3174 = vmatpush1.bf16.msra.mxu0 %v3161
        %3175 = vmatprep.subr.bf16.mxu0 0
        %3176 = vmatpush1.bf16.msra.mxu0 %v3160
        %3177 = vmatprep.subr.bf16.mxu0 0
        %3178 = vmatpush1.bf16.msra.mxu0 %v3159
        %3179 = vmatprep.subr.bf16.mxu0 0
        %3180 = vmatpush1.bf16.msra.mxu0 %v3158
        %3181 = vmatprep.subr.bf16.mxu0 0
        %3182 = vmatpush1.bf16.msra.mxu0 %v3157
        %3183 = vmatprep.subr.bf16.mxu0 0
        %3184 = vmatpush1.bf16.msra.mxu0 %v3156
        %3185 = vmatprep.subr.bf16.mxu0 0
        %3186 = vmatpush1.bf16.msra.mxu0 %v3155
        %3187 = vmatprep.subr.bf16.mxu0 0
        %3188 = vmatpush2.bf16.msra.mxu0 0
        %3189 = vmatprep.subr.bf16.mxu0 0
        %3190 = vmatpush2.bf16.msra.mxu0 0
        %3191 = vmatprep.subr.bf16.mxu0 0
        %3192 = vmatpush2.bf16.msra.mxu0 0
        %3193 = vmatprep.subr.bf16.mxu0 0
        %3194 = vmatpush2.bf16.msra.mxu0 0
        %3195 = vmatprep.subr.bf16.mxu0 0
        %3196 = vmatpush2.bf16.msra.mxu0 0
        %3197 = vmatprep.subr.bf16.mxu0 0
        %3198 = vmatpush2.bf16.msra.mxu0 0
        %3199 = vmatprep.subr.bf16.mxu0 0
        %3200 = vmatpush2.bf16.msra.mxu0 0
        %3201 = vmatprep.subr.bf16.mxu0 0
        %3202 = vmatpush2.bf16.msra.mxu0 0
        %3203 = vmatprep.mubr.bf16.mxu0 0
        %3204 = vmatmul.mubr.bf16.gmra.mxu0 %v3104
        %v3205 = vpop.f32.mrf.mxu0
        %v3206 = vadd.f32 0.0, %v3205
        %v3207 = vpop.f32.mrf.mxu0
        %v3208 = vpop.f32.mrf.mxu0
        %v3209 = vadd.f32 0.0, %v3208
        %v3210 = vpop.f32.mrf.mxu0
        %3211 = vmatprep.mubr.bf16.mxu0 0
        %3212 = vmatmul.mubr.bf16.gmra.mxu0 %v3105
        %v3213 = vpop.f32.mrf.mxu0
        %v3214 = vadd.f32 0.0, %v3213
        %v3215 = vpop.f32.mrf.mxu0
        %v3216 = vpop.f32.mrf.mxu0
        %v3217 = vadd.f32 0.0, %v3216
        %v3218 = vpop.f32.mrf.mxu0
        %3219 = vdwg.mxu0
        %v3220 = vadd.f32 %v3092, %v3206
        %v3221 = vadd.f32 %v3093, %v3209
        %v3222 = vadd.f32 %v3094, %v3214
        %v3223 = vadd.f32 %v3095, %v3217
        %s3224 = scalar_lea.vmem [#allocation2], 4
        %v3225 = vld [vmem:[%s3224] ss:$5 sm:$0xff]
        %s3226 = scalar_lea.vmem [#allocation2], 44
        %v3227 = vld [vmem:[%s3226] ss:$5 sm:$0xff]
        %s3228 = scalar_lea.vmem [#allocation2], 84
        %v3229 = vld [vmem:[%s3228] ss:$5 sm:$0xff]
        %s3230 = scalar_lea.vmem [#allocation2], 124
        %v3231 = vld [vmem:[%s3230] ss:$5 sm:$0x3f]
        %v3232 = vpack.c.bf16 %v3227, %v3225
        %v3233 = vpack.c.bf16 %v3231, %v3229
        %s3234 = scalar_lea.vmem %s2, 256
        %v3235 = vld [vmem:[%s3234] sm:$0xf]
        %v3236 = vld [vmem:[%s3234 + $0x4] sm:$0xf]
        %v3237 = vld [vmem:[%s3234 + $0x8] sm:$0xf]
        %v3238 = vld [vmem:[%s3234 + $0xc] sm:$0xf]
        %v3239 = vld [vmem:[%s3234 + $0x10] sm:$0xf]
        %v3240 = vld [vmem:[%s3234 + $0x14] sm:$0xf]
        %v3241 = vld [vmem:[%s3234 + $0x18] sm:$0xf]
        %v3242 = vld [vmem:[%s3234 + $0x1c] sm:$0xf]
        %v3243 = vld [vmem:[%s3234 + $0x20] sm:$0xf]
        %v3244 = vld [vmem:[%s3234 + $0x24] sm:$0xf]
        %v3245 = vld [vmem:[%s3234 + $0x28] sm:$0xf]
        %v3246 = vld [vmem:[%s3234 + $0x2c] sm:$0xf]
        %v3247 = vld [vmem:[%s3234 + $0x30] sm:$0xf]
        %v3248 = vld [vmem:[%s3234 + $0x34] sm:$0xf]
        %v3249 = vld [vmem:[%s3234 + $0x38] sm:$0xf]
        %v3250 = vld [vmem:[%s3234 + $0x3c] sm:$0xf]
        %v3267 = vunpack.c.l.b16 %v3235
        %v3268 = vunpack.c.l.b16 %v3236
        %v3269 = vunpack.c.l.b16 %v3237
        %v3270 = vunpack.c.l.b16 %v3238
        %v3271 = vunpack.c.l.b16 %v3239
        %v3272 = vunpack.c.l.b16 %v3240
        %v3273 = vunpack.c.l.b16 %v3241
        %v3274 = vunpack.c.l.b16 %v3242
        %v3275 = vunpack.c.l.b16 %v3243
        %v3276 = vunpack.c.l.b16 %v3244
        %v3277 = vunpack.c.l.b16 %v3245
        %v3278 = vunpack.c.l.b16 %v3246
        %v3279 = vunpack.c.l.b16 %v3247
        %v3280 = vunpack.c.l.b16 %v3248
        %v3281 = vunpack.c.l.b16 %v3249
        %v3282 = vunpack.c.l.b16 %v3250
        %v3283 = vpack.c.b16 %v3268, %v3267
        %v3284 = vpack.c.b16 %v3270, %v3269
        %v3285 = vpack.c.b16 %v3272, %v3271
        %v3286 = vpack.c.b16 %v3274, %v3273
        %v3287 = vpack.c.b16 %v3276, %v3275
        %v3288 = vpack.c.b16 %v3278, %v3277
        %v3289 = vpack.c.b16 %v3280, %v3279
        %v3290 = vpack.c.b16 %v3282, %v3281
        %3299 = vmatprep.subr.bf16.mxu0 0
        %3300 = vmatpush1.bf16.msra.mxu0 %v3290
        %3301 = vmatprep.subr.bf16.mxu0 0
        %3302 = vmatpush1.bf16.msra.mxu0 %v3289
        %3303 = vmatprep.subr.bf16.mxu0 0
        %3304 = vmatpush1.bf16.msra.mxu0 %v3288
        %3305 = vmatprep.subr.bf16.mxu0 0
        %3306 = vmatpush1.bf16.msra.mxu0 %v3287
        %3307 = vmatprep.subr.bf16.mxu0 0
        %3308 = vmatpush1.bf16.msra.mxu0 %v3286
        %3309 = vmatprep.subr.bf16.mxu0 0
        %3310 = vmatpush1.bf16.msra.mxu0 %v3285
        %3311 = vmatprep.subr.bf16.mxu0 0
        %3312 = vmatpush1.bf16.msra.mxu0 %v3284
        %3313 = vmatprep.subr.bf16.mxu0 0
        %3314 = vmatpush1.bf16.msra.mxu0 %v3283
        %3315 = vmatprep.subr.bf16.mxu0 0
        %3316 = vmatpush2.bf16.msra.mxu0 0
        %3317 = vmatprep.subr.bf16.mxu0 0
        %3318 = vmatpush2.bf16.msra.mxu0 0
        %3319 = vmatprep.subr.bf16.mxu0 0
        %3320 = vmatpush2.bf16.msra.mxu0 0
        %3321 = vmatprep.subr.bf16.mxu0 0
        %3322 = vmatpush2.bf16.msra.mxu0 0
        %3323 = vmatprep.subr.bf16.mxu0 0
        %3324 = vmatpush2.bf16.msra.mxu0 0
        %3325 = vmatprep.subr.bf16.mxu0 0
        %3326 = vmatpush2.bf16.msra.mxu0 0
        %3327 = vmatprep.subr.bf16.mxu0 0
        %3328 = vmatpush2.bf16.msra.mxu0 0
        %3329 = vmatprep.subr.bf16.mxu0 0
        %3330 = vmatpush2.bf16.msra.mxu0 0
        %3331 = vmatprep.mubr.bf16.mxu0 0
        %3332 = vmatmul.mubr.bf16.gmra.mxu0 %v3232
        %v3333 = vpop.f32.mrf.mxu0
        %v3334 = vadd.f32 0.0, %v3333
        %v3335 = vpop.f32.mrf.mxu0
        %v3336 = vpop.f32.mrf.mxu0
        %v3337 = vadd.f32 0.0, %v3336
        %v3338 = vpop.f32.mrf.mxu0
        %3339 = vmatprep.mubr.bf16.mxu0 0
        %3340 = vmatmul.mubr.bf16.gmra.mxu0 %v3233
        %v3341 = vpop.f32.mrf.mxu0
        %v3342 = vadd.f32 0.0, %v3341
        %v3343 = vpop.f32.mrf.mxu0
        %v3344 = vpop.f32.mrf.mxu0
        %v3345 = vadd.f32 0.0, %v3344
        %v3346 = vpop.f32.mrf.mxu0
        %3347 = vdwg.mxu0
        %v3348 = vadd.f32 %v3220, %v3334
        %v3349 = vadd.f32 %v3221, %v3337
        %v3350 = vadd.f32 %v3222, %v3342
        %v3351 = vadd.f32 %v3223, %v3345
        %s3352 = scalar_lea.vmem [#allocation2], 5
        %v3353 = vld [vmem:[%s3352] ss:$5 sm:$0xff]
        %s3354 = scalar_lea.vmem [#allocation2], 45
        %v3355 = vld [vmem:[%s3354] ss:$5 sm:$0xff]
        %s3356 = scalar_lea.vmem [#allocation2], 85
        %v3357 = vld [vmem:[%s3356] ss:$5 sm:$0xff]
        %s3358 = scalar_lea.vmem [#allocation2], 125
        %v3359 = vld [vmem:[%s3358] ss:$5 sm:$0x3f]
        %v3360 = vpack.c.bf16 %v3355, %v3353
        %v3361 = vpack.c.bf16 %v3359, %v3357
        %s3362 = scalar_lea.vmem %s2, 320
        %v3363 = vld [vmem:[%s3362] sm:$0xf]
        %v3364 = vld [vmem:[%s3362 + $0x4] sm:$0xf]
        %v3365 = vld [vmem:[%s3362 + $0x8] sm:$0xf]
        %v3366 = vld [vmem:[%s3362 + $0xc] sm:$0xf]
        %v3367 = vld [vmem:[%s3362 + $0x10] sm:$0xf]
        %v3368 = vld [vmem:[%s3362 + $0x14] sm:$0xf]
        %v3369 = vld [vmem:[%s3362 + $0x18] sm:$0xf]
        %v3370 = vld [vmem:[%s3362 + $0x1c] sm:$0xf]
        %v3371 = vld [vmem:[%s3362 + $0x20] sm:$0xf]
        %v3372 = vld [vmem:[%s3362 + $0x24] sm:$0xf]
        %v3373 = vld [vmem:[%s3362 + $0x28] sm:$0xf]
        %v3374 = vld [vmem:[%s3362 + $0x2c] sm:$0xf]
        %v3375 = vld [vmem:[%s3362 + $0x30] sm:$0xf]
        %v3376 = vld [vmem:[%s3362 + $0x34] sm:$0xf]
        %v3377 = vld [vmem:[%s3362 + $0x38] sm:$0xf]
        %v3378 = vld [vmem:[%s3362 + $0x3c] sm:$0xf]
        %v3395 = vunpack.c.l.b16 %v3363
        %v3396 = vunpack.c.l.b16 %v3364
        %v3397 = vunpack.c.l.b16 %v3365
        %v3398 = vunpack.c.l.b16 %v3366
        %v3399 = vunpack.c.l.b16 %v3367
        %v3400 = vunpack.c.l.b16 %v3368
        %v3401 = vunpack.c.l.b16 %v3369
        %v3402 = vunpack.c.l.b16 %v3370
        %v3403 = vunpack.c.l.b16 %v3371
        %v3404 = vunpack.c.l.b16 %v3372
        %v3405 = vunpack.c.l.b16 %v3373
        %v3406 = vunpack.c.l.b16 %v3374
        %v3407 = vunpack.c.l.b16 %v3375
        %v3408 = vunpack.c.l.b16 %v3376
        %v3409 = vunpack.c.l.b16 %v3377
        %v3410 = vunpack.c.l.b16 %v3378
        %v3411 = vpack.c.b16 %v3396, %v3395
        %v3412 = vpack.c.b16 %v3398, %v3397
        %v3413 = vpack.c.b16 %v3400, %v3399
        %v3414 = vpack.c.b16 %v3402, %v3401
        %v3415 = vpack.c.b16 %v3404, %v3403
        %v3416 = vpack.c.b16 %v3406, %v3405
        %v3417 = vpack.c.b16 %v3408, %v3407
        %v3418 = vpack.c.b16 %v3410, %v3409
        %3427 = vmatprep.subr.bf16.mxu0 0
        %3428 = vmatpush1.bf16.msra.mxu0 %v3418
        %3429 = vmatprep.subr.bf16.mxu0 0
        %3430 = vmatpush1.bf16.msra.mxu0 %v3417
        %3431 = vmatprep.subr.bf16.mxu0 0
        %3432 = vmatpush1.bf16.msra.mxu0 %v3416
        %3433 = vmatprep.subr.bf16.mxu0 0
        %3434 = vmatpush1.bf16.msra.mxu0 %v3415
        %3435 = vmatprep.subr.bf16.mxu0 0
        %3436 = vmatpush1.bf16.msra.mxu0 %v3414
        %3437 = vmatprep.subr.bf16.mxu0 0
        %3438 = vmatpush1.bf16.msra.mxu0 %v3413
        %3439 = vmatprep.subr.bf16.mxu0 0
        %3440 = vmatpush1.bf16.msra.mxu0 %v3412
        %3441 = vmatprep.subr.bf16.mxu0 0
        %3442 = vmatpush1.bf16.msra.mxu0 %v3411
        %3443 = vmatprep.subr.bf16.mxu0 0
        %3444 = vmatpush2.bf16.msra.mxu0 0
        %3445 = vmatprep.subr.bf16.mxu0 0
        %3446 = vmatpush2.bf16.msra.mxu0 0
        %3447 = vmatprep.subr.bf16.mxu0 0
        %3448 = vmatpush2.bf16.msra.mxu0 0
        %3449 = vmatprep.subr.bf16.mxu0 0
        %3450 = vmatpush2.bf16.msra.mxu0 0
        %3451 = vmatprep.subr.bf16.mxu0 0
        %3452 = vmatpush2.bf16.msra.mxu0 0
        %3453 = vmatprep.subr.bf16.mxu0 0
        %3454 = vmatpush2.bf16.msra.mxu0 0
        %3455 = vmatprep.subr.bf16.mxu0 0
        %3456 = vmatpush2.bf16.msra.mxu0 0
        %3457 = vmatprep.subr.bf16.mxu0 0
        %3458 = vmatpush2.bf16.msra.mxu0 0
        %3459 = vmatprep.mubr.bf16.mxu0 0
        %3460 = vmatmul.mubr.bf16.gmra.mxu0 %v3360
        %v3461 = vpop.f32.mrf.mxu0
        %v3462 = vadd.f32 0.0, %v3461
        %v3463 = vpop.f32.mrf.mxu0
        %v3464 = vpop.f32.mrf.mxu0
        %v3465 = vadd.f32 0.0, %v3464
        %v3466 = vpop.f32.mrf.mxu0
        %3467 = vmatprep.mubr.bf16.mxu0 0
        %3468 = vmatmul.mubr.bf16.gmra.mxu0 %v3361
        %v3469 = vpop.f32.mrf.mxu0
        %v3470 = vadd.f32 0.0, %v3469
        %v3471 = vpop.f32.mrf.mxu0
        %v3472 = vpop.f32.mrf.mxu0
        %v3473 = vadd.f32 0.0, %v3472
        %v3474 = vpop.f32.mrf.mxu0
        %3475 = vdwg.mxu0
        %v3476 = vadd.f32 %v3348, %v3462
        %v3477 = vadd.f32 %v3349, %v3465
        %v3478 = vadd.f32 %v3350, %v3470
        %v3479 = vadd.f32 %v3351, %v3473
        %s3480 = scalar_lea.vmem [#allocation2], 6
        %v3481 = vld [vmem:[%s3480] ss:$5 sm:$0xff]
        %s3482 = scalar_lea.vmem [#allocation2], 46
        %v3483 = vld [vmem:[%s3482] ss:$5 sm:$0xff]
        %s3484 = scalar_lea.vmem [#allocation2], 86
        %v3485 = vld [vmem:[%s3484] ss:$5 sm:$0xff]
        %s3486 = scalar_lea.vmem [#allocation2], 126
        %v3487 = vld [vmem:[%s3486] ss:$5 sm:$0x3f]
        %v3488 = vpack.c.bf16 %v3483, %v3481
        %v3489 = vpack.c.bf16 %v3487, %v3485
        %s3490 = scalar_lea.vmem %s2, 384
        %v3491 = vld [vmem:[%s3490] sm:$0xf]
        %v3492 = vld [vmem:[%s3490 + $0x4] sm:$0xf]
        %v3493 = vld [vmem:[%s3490 + $0x8] sm:$0xf]
        %v3494 = vld [vmem:[%s3490 + $0xc] sm:$0xf]
        %v3495 = vld [vmem:[%s3490 + $0x10] sm:$0xf]
        %v3496 = vld [vmem:[%s3490 + $0x14] sm:$0xf]
        %v3497 = vld [vmem:[%s3490 + $0x18] sm:$0xf]
        %v3498 = vld [vmem:[%s3490 + $0x1c] sm:$0xf]
        %v3499 = vld [vmem:[%s3490 + $0x20] sm:$0xf]
        %v3500 = vld [vmem:[%s3490 + $0x24] sm:$0xf]
        %v3501 = vld [vmem:[%s3490 + $0x28] sm:$0xf]
        %v3502 = vld [vmem:[%s3490 + $0x2c] sm:$0xf]
        %v3503 = vld [vmem:[%s3490 + $0x30] sm:$0xf]
        %v3504 = vld [vmem:[%s3490 + $0x34] sm:$0xf]
        %v3505 = vld [vmem:[%s3490 + $0x38] sm:$0xf]
        %v3506 = vld [vmem:[%s3490 + $0x3c] sm:$0xf]
        %v3523 = vunpack.c.l.b16 %v3491
        %v3524 = vunpack.c.l.b16 %v3492
        %v3525 = vunpack.c.l.b16 %v3493
        %v3526 = vunpack.c.l.b16 %v3494
        %v3527 = vunpack.c.l.b16 %v3495
        %v3528 = vunpack.c.l.b16 %v3496
        %v3529 = vunpack.c.l.b16 %v3497
        %v3530 = vunpack.c.l.b16 %v3498
        %v3531 = vunpack.c.l.b16 %v3499
        %v3532 = vunpack.c.l.b16 %v3500
        %v3533 = vunpack.c.l.b16 %v3501
        %v3534 = vunpack.c.l.b16 %v3502
        %v3535 = vunpack.c.l.b16 %v3503
        %v3536 = vunpack.c.l.b16 %v3504
        %v3537 = vunpack.c.l.b16 %v3505
        %v3538 = vunpack.c.l.b16 %v3506
        %v3539 = vpack.c.b16 %v3524, %v3523
        %v3540 = vpack.c.b16 %v3526, %v3525
        %v3541 = vpack.c.b16 %v3528, %v3527
        %v3542 = vpack.c.b16 %v3530, %v3529
        %v3543 = vpack.c.b16 %v3532, %v3531
        %v3544 = vpack.c.b16 %v3534, %v3533
        %v3545 = vpack.c.b16 %v3536, %v3535
        %v3546 = vpack.c.b16 %v3538, %v3537
        %3555 = vmatprep.subr.bf16.mxu0 0
        %3556 = vmatpush1.bf16.msra.mxu0 %v3546
        %3557 = vmatprep.subr.bf16.mxu0 0
        %3558 = vmatpush1.bf16.msra.mxu0 %v3545
        %3559 = vmatprep.subr.bf16.mxu0 0
        %3560 = vmatpush1.bf16.msra.mxu0 %v3544
        %3561 = vmatprep.subr.bf16.mxu0 0
        %3562 = vmatpush1.bf16.msra.mxu0 %v3543
        %3563 = vmatprep.subr.bf16.mxu0 0
        %3564 = vmatpush1.bf16.msra.mxu0 %v3542
        %3565 = vmatprep.subr.bf16.mxu0 0
        %3566 = vmatpush1.bf16.msra.mxu0 %v3541
        %3567 = vmatprep.subr.bf16.mxu0 0
        %3568 = vmatpush1.bf16.msra.mxu0 %v3540
        %3569 = vmatprep.subr.bf16.mxu0 0
        %3570 = vmatpush1.bf16.msra.mxu0 %v3539
        %3571 = vmatprep.subr.bf16.mxu0 0
        %3572 = vmatpush2.bf16.msra.mxu0 0
        %3573 = vmatprep.subr.bf16.mxu0 0
        %3574 = vmatpush2.bf16.msra.mxu0 0
        %3575 = vmatprep.subr.bf16.mxu0 0
        %3576 = vmatpush2.bf16.msra.mxu0 0
        %3577 = vmatprep.subr.bf16.mxu0 0
        %3578 = vmatpush2.bf16.msra.mxu0 0
        %3579 = vmatprep.subr.bf16.mxu0 0
        %3580 = vmatpush2.bf16.msra.mxu0 0
        %3581 = vmatprep.subr.bf16.mxu0 0
        %3582 = vmatpush2.bf16.msra.mxu0 0
        %3583 = vmatprep.subr.bf16.mxu0 0
        %3584 = vmatpush2.bf16.msra.mxu0 0
        %3585 = vmatprep.subr.bf16.mxu0 0
        %3586 = vmatpush2.bf16.msra.mxu0 0
        %3587 = vmatprep.mubr.bf16.mxu0 0
        %3588 = vmatmul.mubr.bf16.gmra.mxu0 %v3488
        %v3589 = vpop.f32.mrf.mxu0
        %v3590 = vadd.f32 0.0, %v3589
        %v3591 = vpop.f32.mrf.mxu0
        %v3592 = vpop.f32.mrf.mxu0
        %v3593 = vadd.f32 0.0, %v3592
        %v3594 = vpop.f32.mrf.mxu0
        %3595 = vmatprep.mubr.bf16.mxu0 0
        %3596 = vmatmul.mubr.bf16.gmra.mxu0 %v3489
        %v3597 = vpop.f32.mrf.mxu0
        %v3598 = vadd.f32 0.0, %v3597
        %v3599 = vpop.f32.mrf.mxu0
        %v3600 = vpop.f32.mrf.mxu0
        %v3601 = vadd.f32 0.0, %v3600
        %v3602 = vpop.f32.mrf.mxu0
        %3603 = vdwg.mxu0
        %v3604 = vadd.f32 %v3476, %v3590
        %v3605 = vadd.f32 %v3477, %v3593
        %v3606 = vadd.f32 %v3478, %v3598
        %v3607 = vadd.f32 %v3479, %v3601
        %s3608 = scalar_lea.vmem [#allocation2], 7
        %v3609 = vld [vmem:[%s3608] ss:$5 sm:$0xff]
        %s3610 = scalar_lea.vmem [#allocation2], 47
        %v3611 = vld [vmem:[%s3610] ss:$5 sm:$0xff]
        %s3612 = scalar_lea.vmem [#allocation2], 87
        %v3613 = vld [vmem:[%s3612] ss:$5 sm:$0xff]
        %s3614 = scalar_lea.vmem [#allocation2], 127
        %v3615 = vld [vmem:[%s3614] ss:$5 sm:$0x3f]
        %v3616 = vpack.c.bf16 %v3611, %v3609
        %v3617 = vpack.c.bf16 %v3615, %v3613
        %s3618 = scalar_lea.vmem %s2, 448
        %v3619 = vld [vmem:[%s3618] sm:$0xf]
        %v3620 = vld [vmem:[%s3618 + $0x4] sm:$0xf]
        %v3621 = vld [vmem:[%s3618 + $0x8] sm:$0xf]
        %v3622 = vld [vmem:[%s3618 + $0xc] sm:$0xf]
        %v3623 = vld [vmem:[%s3618 + $0x10] sm:$0xf]
        %v3624 = vld [vmem:[%s3618 + $0x14] sm:$0xf]
        %v3625 = vld [vmem:[%s3618 + $0x18] sm:$0xf]
        %v3626 = vld [vmem:[%s3618 + $0x1c] sm:$0xf]
        %v3627 = vld [vmem:[%s3618 + $0x20] sm:$0xf]
        %v3628 = vld [vmem:[%s3618 + $0x24] sm:$0xf]
        %v3629 = vld [vmem:[%s3618 + $0x28] sm:$0xf]
        %v3630 = vld [vmem:[%s3618 + $0x2c] sm:$0xf]
        %v3631 = vld [vmem:[%s3618 + $0x30] sm:$0xf]
        %v3632 = vld [vmem:[%s3618 + $0x34] sm:$0xf]
        %v3633 = vld [vmem:[%s3618 + $0x38] sm:$0xf]
        %v3634 = vld [vmem:[%s3618 + $0x3c] sm:$0xf]
        %v3651 = vunpack.c.l.b16 %v3619
        %v3652 = vunpack.c.l.b16 %v3620
        %v3653 = vunpack.c.l.b16 %v3621
        %v3654 = vunpack.c.l.b16 %v3622
        %v3655 = vunpack.c.l.b16 %v3623
        %v3656 = vunpack.c.l.b16 %v3624
        %v3657 = vunpack.c.l.b16 %v3625
        %v3658 = vunpack.c.l.b16 %v3626
        %v3659 = vunpack.c.l.b16 %v3627
        %v3660 = vunpack.c.l.b16 %v3628
        %v3661 = vunpack.c.l.b16 %v3629
        %v3662 = vunpack.c.l.b16 %v3630
        %v3663 = vunpack.c.l.b16 %v3631
        %v3664 = vunpack.c.l.b16 %v3632
        %v3665 = vunpack.c.l.b16 %v3633
        %v3666 = vunpack.c.l.b16 %v3634
        %v3667 = vpack.c.b16 %v3652, %v3651
        %v3668 = vpack.c.b16 %v3654, %v3653
        %v3669 = vpack.c.b16 %v3656, %v3655
        %v3670 = vpack.c.b16 %v3658, %v3657
        %v3671 = vpack.c.b16 %v3660, %v3659
        %v3672 = vpack.c.b16 %v3662, %v3661
        %v3673 = vpack.c.b16 %v3664, %v3663
        %v3674 = vpack.c.b16 %v3666, %v3665
        %3683 = vmatprep.subr.bf16.mxu0 0
        %3684 = vmatpush1.bf16.msra.mxu0 %v3674
        %3685 = vmatprep.subr.bf16.mxu0 0
        %3686 = vmatpush1.bf16.msra.mxu0 %v3673
        %3687 = vmatprep.subr.bf16.mxu0 0
        %3688 = vmatpush1.bf16.msra.mxu0 %v3672
        %3689 = vmatprep.subr.bf16.mxu0 0
        %3690 = vmatpush1.bf16.msra.mxu0 %v3671
        %3691 = vmatprep.subr.bf16.mxu0 0
        %3692 = vmatpush1.bf16.msra.mxu0 %v3670
        %3693 = vmatprep.subr.bf16.mxu0 0
        %3694 = vmatpush1.bf16.msra.mxu0 %v3669
        %3695 = vmatprep.subr.bf16.mxu0 0
        %3696 = vmatpush1.bf16.msra.mxu0 %v3668
        %3697 = vmatprep.subr.bf16.mxu0 0
        %3698 = vmatpush1.bf16.msra.mxu0 %v3667
        %3699 = vmatprep.subr.bf16.mxu0 0
        %3700 = vmatpush2.bf16.msra.mxu0 0
        %3701 = vmatprep.subr.bf16.mxu0 0
        %3702 = vmatpush2.bf16.msra.mxu0 0
        %3703 = vmatprep.subr.bf16.mxu0 0
        %3704 = vmatpush2.bf16.msra.mxu0 0
        %3705 = vmatprep.subr.bf16.mxu0 0
        %3706 = vmatpush2.bf16.msra.mxu0 0
        %3707 = vmatprep.subr.bf16.mxu0 0
        %3708 = vmatpush2.bf16.msra.mxu0 0
        %3709 = vmatprep.subr.bf16.mxu0 0
        %3710 = vmatpush2.bf16.msra.mxu0 0
        %3711 = vmatprep.subr.bf16.mxu0 0
        %3712 = vmatpush2.bf16.msra.mxu0 0
        %3713 = vmatprep.subr.bf16.mxu0 0
        %3714 = vmatpush2.bf16.msra.mxu0 0
        %3715 = vmatprep.mubr.bf16.mxu0 0
        %3716 = vmatmul.mubr.bf16.gmra.mxu0 %v3616
        %v3717 = vpop.f32.mrf.mxu0
        %v3718 = vadd.f32 0.0, %v3717
        %v3719 = vpop.f32.mrf.mxu0
        %v3720 = vpop.f32.mrf.mxu0
        %v3721 = vadd.f32 0.0, %v3720
        %v3722 = vpop.f32.mrf.mxu0
        %3723 = vmatprep.mubr.bf16.mxu0 0
        %3724 = vmatmul.mubr.bf16.gmra.mxu0 %v3617
        %v3725 = vpop.f32.mrf.mxu0
        %v3726 = vadd.f32 0.0, %v3725
        %v3727 = vpop.f32.mrf.mxu0
        %v3728 = vpop.f32.mrf.mxu0
        %v3729 = vadd.f32 0.0, %v3728
        %v3730 = vpop.f32.mrf.mxu0
        %3731 = vdwg.mxu0
        %v3732 = vadd.f32 %v3604, %v3718
        %v3733 = vadd.f32 %v3605, %v3721
        %v3734 = vadd.f32 %v3606, %v3726
        %v3735 = vadd.f32 %v3607, %v3729
        %s3736 = scalar_lea.vmem [#allocation2], 8
        %v3737 = vld [vmem:[%s3736] ss:$5 sm:$0xff]
        %s3738 = scalar_lea.vmem [#allocation2], 48
        %v3739 = vld [vmem:[%s3738] ss:$5 sm:$0xff]
        %s3740 = scalar_lea.vmem [#allocation2], 88
        %v3741 = vld [vmem:[%s3740] ss:$5 sm:$0xff]
        %s3742 = scalar_lea.vmem [#allocation2], 128
        %v3743 = vld [vmem:[%s3742] ss:$5 sm:$0x3f]
        %v3744 = vpack.c.bf16 %v3739, %v3737
        %v3745 = vpack.c.bf16 %v3743, %v3741
        %s3746 = scalar_lea.vmem %s2, 512
        %v3747 = vld [vmem:[%s3746] sm:$0xf]
        %v3748 = vld [vmem:[%s3746 + $0x4] sm:$0xf]
        %v3749 = vld [vmem:[%s3746 + $0x8] sm:$0xf]
        %v3750 = vld [vmem:[%s3746 + $0xc] sm:$0xf]
        %v3751 = vld [vmem:[%s3746 + $0x10] sm:$0xf]
        %v3752 = vld [vmem:[%s3746 + $0x14] sm:$0xf]
        %v3753 = vld [vmem:[%s3746 + $0x18] sm:$0xf]
        %v3754 = vld [vmem:[%s3746 + $0x1c] sm:$0xf]
        %v3755 = vld [vmem:[%s3746 + $0x20] sm:$0xf]
        %v3756 = vld [vmem:[%s3746 + $0x24] sm:$0xf]
        %v3757 = vld [vmem:[%s3746 + $0x28] sm:$0xf]
        %v3758 = vld [vmem:[%s3746 + $0x2c] sm:$0xf]
        %v3759 = vld [vmem:[%s3746 + $0x30] sm:$0xf]
        %v3760 = vld [vmem:[%s3746 + $0x34] sm:$0xf]
        %v3761 = vld [vmem:[%s3746 + $0x38] sm:$0xf]
        %v3762 = vld [vmem:[%s3746 + $0x3c] sm:$0xf]
        %v3779 = vunpack.c.l.b16 %v3747
        %v3780 = vunpack.c.l.b16 %v3748
        %v3781 = vunpack.c.l.b16 %v3749
        %v3782 = vunpack.c.l.b16 %v3750
        %v3783 = vunpack.c.l.b16 %v3751
        %v3784 = vunpack.c.l.b16 %v3752
        %v3785 = vunpack.c.l.b16 %v3753
        %v3786 = vunpack.c.l.b16 %v3754
        %v3787 = vunpack.c.l.b16 %v3755
        %v3788 = vunpack.c.l.b16 %v3756
        %v3789 = vunpack.c.l.b16 %v3757
        %v3790 = vunpack.c.l.b16 %v3758
        %v3791 = vunpack.c.l.b16 %v3759
        %v3792 = vunpack.c.l.b16 %v3760
        %v3793 = vunpack.c.l.b16 %v3761
        %v3794 = vunpack.c.l.b16 %v3762
        %v3795 = vpack.c.b16 %v3780, %v3779
        %v3796 = vpack.c.b16 %v3782, %v3781
        %v3797 = vpack.c.b16 %v3784, %v3783
        %v3798 = vpack.c.b16 %v3786, %v3785
        %v3799 = vpack.c.b16 %v3788, %v3787
        %v3800 = vpack.c.b16 %v3790, %v3789
        %v3801 = vpack.c.b16 %v3792, %v3791
        %v3802 = vpack.c.b16 %v3794, %v3793
        %3811 = vmatprep.subr.bf16.mxu0 0
        %3812 = vmatpush1.bf16.msra.mxu0 %v3802
        %3813 = vmatprep.subr.bf16.mxu0 0
        %3814 = vmatpush1.bf16.msra.mxu0 %v3801
        %3815 = vmatprep.subr.bf16.mxu0 0
        %3816 = vmatpush1.bf16.msra.mxu0 %v3800
        %3817 = vmatprep.subr.bf16.mxu0 0
        %3818 = vmatpush1.bf16.msra.mxu0 %v3799
        %3819 = vmatprep.subr.bf16.mxu0 0
        %3820 = vmatpush1.bf16.msra.mxu0 %v3798
        %3821 = vmatprep.subr.bf16.mxu0 0
        %3822 = vmatpush1.bf16.msra.mxu0 %v3797
        %3823 = vmatprep.subr.bf16.mxu0 0
        %3824 = vmatpush1.bf16.msra.mxu0 %v3796
        %3825 = vmatprep.subr.bf16.mxu0 0
        %3826 = vmatpush1.bf16.msra.mxu0 %v3795
        %3827 = vmatprep.subr.bf16.mxu0 0
        %3828 = vmatpush2.bf16.msra.mxu0 0
        %3829 = vmatprep.subr.bf16.mxu0 0
        %3830 = vmatpush2.bf16.msra.mxu0 0
        %3831 = vmatprep.subr.bf16.mxu0 0
        %3832 = vmatpush2.bf16.msra.mxu0 0
        %3833 = vmatprep.subr.bf16.mxu0 0
        %3834 = vmatpush2.bf16.msra.mxu0 0
        %3835 = vmatprep.subr.bf16.mxu0 0
        %3836 = vmatpush2.bf16.msra.mxu0 0
        %3837 = vmatprep.subr.bf16.mxu0 0
        %3838 = vmatpush2.bf16.msra.mxu0 0
        %3839 = vmatprep.subr.bf16.mxu0 0
        %3840 = vmatpush2.bf16.msra.mxu0 0
        %3841 = vmatprep.subr.bf16.mxu0 0
        %3842 = vmatpush2.bf16.msra.mxu0 0
        %3843 = vmatprep.mubr.bf16.mxu0 0
        %3844 = vmatmul.mubr.bf16.gmra.mxu0 %v3744
        %v3845 = vpop.f32.mrf.mxu0
        %v3846 = vadd.f32 0.0, %v3845
        %v3847 = vpop.f32.mrf.mxu0
        %v3848 = vpop.f32.mrf.mxu0
        %v3849 = vadd.f32 0.0, %v3848
        %v3850 = vpop.f32.mrf.mxu0
        %3851 = vmatprep.mubr.bf16.mxu0 0
        %3852 = vmatmul.mubr.bf16.gmra.mxu0 %v3745
        %v3853 = vpop.f32.mrf.mxu0
        %v3854 = vadd.f32 0.0, %v3853
        %v3855 = vpop.f32.mrf.mxu0
        %v3856 = vpop.f32.mrf.mxu0
        %v3857 = vadd.f32 0.0, %v3856
        %v3858 = vpop.f32.mrf.mxu0
        %3859 = vdwg.mxu0
        %v3860 = vadd.f32 %v3732, %v3846
        %v3861 = vadd.f32 %v3733, %v3849
        %v3862 = vadd.f32 %v3734, %v3854
        %v3863 = vadd.f32 %v3735, %v3857
        %s3864 = scalar_lea.vmem [#allocation2], 9
        %v3865 = vld [vmem:[%s3864] ss:$5 sm:$0xff]
        %s3866 = scalar_lea.vmem [#allocation2], 49
        %v3867 = vld [vmem:[%s3866] ss:$5 sm:$0xff]
        %s3868 = scalar_lea.vmem [#allocation2], 89
        %v3869 = vld [vmem:[%s3868] ss:$5 sm:$0xff]
        %s3870 = scalar_lea.vmem [#allocation2], 129
        %v3871 = vld [vmem:[%s3870] ss:$5 sm:$0x3f]
        %v3872 = vpack.c.bf16 %v3867, %v3865
        %v3873 = vpack.c.bf16 %v3871, %v3869
        %s3874 = scalar_lea.vmem %s2, 576
        %v3875 = vld [vmem:[%s3874] sm:$0xf]
        %v3876 = vld [vmem:[%s3874 + $0x4] sm:$0xf]
        %v3877 = vld [vmem:[%s3874 + $0x8] sm:$0xf]
        %v3878 = vld [vmem:[%s3874 + $0xc] sm:$0xf]
        %v3879 = vld [vmem:[%s3874 + $0x10] sm:$0xf]
        %v3880 = vld [vmem:[%s3874 + $0x14] sm:$0xf]
        %v3881 = vld [vmem:[%s3874 + $0x18] sm:$0xf]
        %v3882 = vld [vmem:[%s3874 + $0x1c] sm:$0xf]
        %v3883 = vld [vmem:[%s3874 + $0x20] sm:$0xf]
        %v3884 = vld [vmem:[%s3874 + $0x24] sm:$0xf]
        %v3885 = vld [vmem:[%s3874 + $0x28] sm:$0xf]
        %v3886 = vld [vmem:[%s3874 + $0x2c] sm:$0xf]
        %v3887 = vld [vmem:[%s3874 + $0x30] sm:$0xf]
        %v3888 = vld [vmem:[%s3874 + $0x34] sm:$0xf]
        %v3889 = vld [vmem:[%s3874 + $0x38] sm:$0xf]
        %v3890 = vld [vmem:[%s3874 + $0x3c] sm:$0xf]
        %v3907 = vunpack.c.l.b16 %v3875
        %v3908 = vunpack.c.l.b16 %v3876
        %v3909 = vunpack.c.l.b16 %v3877
        %v3910 = vunpack.c.l.b16 %v3878
        %v3911 = vunpack.c.l.b16 %v3879
        %v3912 = vunpack.c.l.b16 %v3880
        %v3913 = vunpack.c.l.b16 %v3881
        %v3914 = vunpack.c.l.b16 %v3882
        %v3915 = vunpack.c.l.b16 %v3883
        %v3916 = vunpack.c.l.b16 %v3884
        %v3917 = vunpack.c.l.b16 %v3885
        %v3918 = vunpack.c.l.b16 %v3886
        %v3919 = vunpack.c.l.b16 %v3887
        %v3920 = vunpack.c.l.b16 %v3888
        %v3921 = vunpack.c.l.b16 %v3889
        %v3922 = vunpack.c.l.b16 %v3890
        %v3923 = vpack.c.b16 %v3908, %v3907
        %v3924 = vpack.c.b16 %v3910, %v3909
        %v3925 = vpack.c.b16 %v3912, %v3911
        %v3926 = vpack.c.b16 %v3914, %v3913
        %v3927 = vpack.c.b16 %v3916, %v3915
        %v3928 = vpack.c.b16 %v3918, %v3917
        %v3929 = vpack.c.b16 %v3920, %v3919
        %v3930 = vpack.c.b16 %v3922, %v3921
        %3939 = vmatprep.subr.bf16.mxu0 0
        %3940 = vmatpush1.bf16.msra.mxu0 %v3930
        %3941 = vmatprep.subr.bf16.mxu0 0
        %3942 = vmatpush1.bf16.msra.mxu0 %v3929
        %3943 = vmatprep.subr.bf16.mxu0 0
        %3944 = vmatpush1.bf16.msra.mxu0 %v3928
        %3945 = vmatprep.subr.bf16.mxu0 0
        %3946 = vmatpush1.bf16.msra.mxu0 %v3927
        %3947 = vmatprep.subr.bf16.mxu0 0
        %3948 = vmatpush1.bf16.msra.mxu0 %v3926
        %3949 = vmatprep.subr.bf16.mxu0 0
        %3950 = vmatpush1.bf16.msra.mxu0 %v3925
        %3951 = vmatprep.subr.bf16.mxu0 0
        %3952 = vmatpush1.bf16.msra.mxu0 %v3924
        %3953 = vmatprep.subr.bf16.mxu0 0
        %3954 = vmatpush1.bf16.msra.mxu0 %v3923
        %3955 = vmatprep.subr.bf16.mxu0 0
        %3956 = vmatpush2.bf16.msra.mxu0 0
        %3957 = vmatprep.subr.bf16.mxu0 0
        %3958 = vmatpush2.bf16.msra.mxu0 0
        %3959 = vmatprep.subr.bf16.mxu0 0
        %3960 = vmatpush2.bf16.msra.mxu0 0
        %3961 = vmatprep.subr.bf16.mxu0 0
        %3962 = vmatpush2.bf16.msra.mxu0 0
        %3963 = vmatprep.subr.bf16.mxu0 0
        %3964 = vmatpush2.bf16.msra.mxu0 0
        %3965 = vmatprep.subr.bf16.mxu0 0
        %3966 = vmatpush2.bf16.msra.mxu0 0
        %3967 = vmatprep.subr.bf16.mxu0 0
        %3968 = vmatpush2.bf16.msra.mxu0 0
        %3969 = vmatprep.subr.bf16.mxu0 0
        %3970 = vmatpush2.bf16.msra.mxu0 0
        %3971 = vmatprep.mubr.bf16.mxu0 0
        %3972 = vmatmul.mubr.bf16.gmra.mxu0 %v3872
        %v3973 = vpop.f32.mrf.mxu0
        %v3974 = vadd.f32 0.0, %v3973
        %v3975 = vpop.f32.mrf.mxu0
        %v3976 = vpop.f32.mrf.mxu0
        %v3977 = vadd.f32 0.0, %v3976
        %v3978 = vpop.f32.mrf.mxu0
        %3979 = vmatprep.mubr.bf16.mxu0 0
        %3980 = vmatmul.mubr.bf16.gmra.mxu0 %v3873
        %v3981 = vpop.f32.mrf.mxu0
        %v3982 = vadd.f32 0.0, %v3981
        %v3983 = vpop.f32.mrf.mxu0
        %v3984 = vpop.f32.mrf.mxu0
        %v3985 = vadd.f32 0.0, %v3984
        %v3986 = vpop.f32.mrf.mxu0
        %3987 = vdwg.mxu0
        %v3988 = vadd.f32 %v3860, %v3974
        %v3989 = vadd.f32 %v3861, %v3977
        %v3990 = vadd.f32 %v3862, %v3982
        %v3991 = vadd.f32 %v3863, %v3985
        %v3992 = vld [vmem:[%s6 + $0x3] sm:$0x1]
        %v3993 = vlaneseq
        %v3994 = vshrl.u32 %v3993, 7
        %v3995 = vsub.s32 0, %v3994
        %v3996 = vrot.slane %v3992, %v3995
        %v3997 = vadd.f32 %v3988, %v3996
        %v3998 = vadd.f32 %v3989, %v3996
        %v3999 = vadd.f32 %v3990, %v3996
        %v4000 = vadd.f32 %v3991, %v3996
        %v4001 = vmax.f32 %v3997, 0.0
        %v4002 = vmax.f32 %v3998, 0.0
        %v4003 = vmax.f32 %v3999, 0.0
        %v4004 = vmax.f32 %v4000, 0.0
        %v4005 = vld [vmem:[%s6 + $0x4] sm:$0x1]
        %v4006 = vlaneseq
        %v4007 = vshrl.u32 %v4006, 7
        %v4008 = vsub.s32 0, %v4007
        %v4009 = vrot.slane %v4005, %v4008
        %v4010 = vmul.f32 %v4001, %v4009
        %v4011 = vmul.f32 %v4002, %v4009
        %v4012 = vmul.f32 %v4003, %v4009
        %v4013 = vmul.f32 %v4004, %v4009
        %v4014 = vld [vmem:[%s6 + $0x5] sm:$0x1]
        %v4015 = vlaneseq
        %v4016 = vshrl.u32 %v4015, 7
        %v4017 = vsub.s32 0, %v4016
        %v4018 = vrot.slane %v4014, %v4017
        %v4019 = vadd.f32 %v4010, %v4018
        %v4020 = vadd.f32 %v4011, %v4018
        %v4021 = vadd.f32 %v4012, %v4018
        %v4022 = vadd.f32 %v4013, %v4018
        %4023 = vst [vmem:[#allocation3] sm:$0xff] %v4019
        %4024 = vst [vmem:[#allocation3 + $0x8] sm:$0xff] %v4020
        %4025 = vst [vmem:[#allocation3 + $0x10] sm:$0xff] %v4021
        %4026 = vst [vmem:[#allocation3 + $0x18] sm:$0x3f] %v4022
        %v4027 = vld [vmem:[#allocation3] ss:$5 sm:$0x1f]
        %v4028 = vpack.c.bf16 %v4027, %v4027
        %v4029 = vld [vmem:[%s3] sm:$0xf]
        %v4030 = vld [vmem:[%s3 + $0x4] sm:$0xf]
        %v4031 = vld [vmem:[%s3 + $0x8] sm:$0xf]
        %v4032 = vld [vmem:[%s3 + $0xc] sm:$0xf]
        %v4033 = vld [vmem:[%s3 + $0x10] sm:$0xf]
        %v4034 = vld [vmem:[%s3 + $0x14] sm:$0xf]
        %v4035 = vld [vmem:[%s3 + $0x18] sm:$0xf]
        %v4036 = vld [vmem:[%s3 + $0x1c] sm:$0xf]
        %v4037 = vld [vmem:[%s3 + $0x20] sm:$0xf]
        %v4038 = vld [vmem:[%s3 + $0x24] sm:$0xf]
        %v4039 = vld [vmem:[%s3 + $0x28] sm:$0xf]
        %v4040 = vld [vmem:[%s3 + $0x2c] sm:$0xf]
        %v4041 = vld [vmem:[%s3 + $0x30] sm:$0xf]
        %v4042 = vld [vmem:[%s3 + $0x34] sm:$0xf]
        %v4043 = vld [vmem:[%s3 + $0x38] sm:$0xf]
        %v4044 = vld [vmem:[%s3 + $0x3c] sm:$0xf]
        %s4045 = scalar_lea.vmem [#allocation3], 1
        %v4046 = vld [vmem:[%s4045] ss:$5 sm:$0x1f]
        %v4047 = vpack.c.bf16 %v4046, %v4046
        %s4048 = scalar_lea.vmem %s3, 64
        %v4049 = vld [vmem:[%s4048] sm:$0xf]
        %v4050 = vld [vmem:[%s4048 + $0x4] sm:$0xf]
        %v4051 = vld [vmem:[%s4048 + $0x8] sm:$0xf]
        %v4052 = vld [vmem:[%s4048 + $0xc] sm:$0xf]
        %v4053 = vld [vmem:[%s4048 + $0x10] sm:$0xf]
        %v4054 = vld [vmem:[%s4048 + $0x14] sm:$0xf]
        %v4055 = vld [vmem:[%s4048 + $0x18] sm:$0xf]
        %v4056 = vld [vmem:[%s4048 + $0x1c] sm:$0xf]
        %v4057 = vld [vmem:[%s4048 + $0x20] sm:$0xf]
        %v4058 = vld [vmem:[%s4048 + $0x24] sm:$0xf]
        %v4059 = vld [vmem:[%s4048 + $0x28] sm:$0xf]
        %v4060 = vld [vmem:[%s4048 + $0x2c] sm:$0xf]
        %v4061 = vld [vmem:[%s4048 + $0x30] sm:$0xf]
        %v4062 = vld [vmem:[%s4048 + $0x34] sm:$0xf]
        %v4063 = vld [vmem:[%s4048 + $0x38] sm:$0xf]
        %v4064 = vld [vmem:[%s4048 + $0x3c] sm:$0xf]
        %v4081 = vunpack.c.l.b16 %v4049
        %v4082 = vunpack.c.l.b16 %v4050
        %v4083 = vunpack.c.l.b16 %v4051
        %v4084 = vunpack.c.l.b16 %v4052
        %v4085 = vunpack.c.l.b16 %v4053
        %v4086 = vunpack.c.l.b16 %v4054
        %v4087 = vunpack.c.l.b16 %v4055
        %v4088 = vunpack.c.l.b16 %v4056
        %v4089 = vunpack.c.l.b16 %v4057
        %v4090 = vunpack.c.l.b16 %v4058
        %v4091 = vunpack.c.l.b16 %v4059
        %v4092 = vunpack.c.l.b16 %v4060
        %v4093 = vunpack.c.l.b16 %v4061
        %v4094 = vunpack.c.l.b16 %v4062
        %v4095 = vunpack.c.l.b16 %v4063
        %v4096 = vunpack.c.l.b16 %v4064
        %v4097 = vpack.c.b16 %v4082, %v4081
        %v4098 = vpack.c.b16 %v4084, %v4083
        %v4099 = vpack.c.b16 %v4086, %v4085
        %v4100 = vpack.c.b16 %v4088, %v4087
        %v4101 = vpack.c.b16 %v4090, %v4089
        %v4102 = vpack.c.b16 %v4092, %v4091
        %v4103 = vpack.c.b16 %v4094, %v4093
        %v4104 = vpack.c.b16 %v4096, %v4095
        %4113 = vmatprep.subr.bf16.mxu0 0
        %4114 = vmatpush1.bf16.msra.mxu0 %v4104
        %4115 = vmatprep.subr.bf16.mxu0 0
        %4116 = vmatpush1.bf16.msra.mxu0 %v4103
        %4117 = vmatprep.subr.bf16.mxu0 0
        %4118 = vmatpush1.bf16.msra.mxu0 %v4102
        %4119 = vmatprep.subr.bf16.mxu0 0
        %4120 = vmatpush1.bf16.msra.mxu0 %v4101
        %4121 = vmatprep.subr.bf16.mxu0 0
        %4122 = vmatpush1.bf16.msra.mxu0 %v4100
        %4123 = vmatprep.subr.bf16.mxu0 0
        %4124 = vmatpush1.bf16.msra.mxu0 %v4099
        %4125 = vmatprep.subr.bf16.mxu0 0
        %4126 = vmatpush1.bf16.msra.mxu0 %v4098
        %4127 = vmatprep.subr.bf16.mxu0 0
        %4128 = vmatpush1.bf16.msra.mxu0 %v4097
        %4129 = vmatprep.subr.bf16.mxu0 0
        %4130 = vmatpush2.bf16.msra.mxu0 0
        %4131 = vmatprep.subr.bf16.mxu0 0
        %4132 = vmatpush2.bf16.msra.mxu0 0
        %4133 = vmatprep.subr.bf16.mxu0 0
        %4134 = vmatpush2.bf16.msra.mxu0 0
        %4135 = vmatprep.subr.bf16.mxu0 0
        %4136 = vmatpush2.bf16.msra.mxu0 0
        %4137 = vmatprep.subr.bf16.mxu0 0
        %4138 = vmatpush2.bf16.msra.mxu0 0
        %4139 = vmatprep.subr.bf16.mxu0 0
        %4140 = vmatpush2.bf16.msra.mxu0 0
        %4141 = vmatprep.subr.bf16.mxu0 0
        %4142 = vmatpush2.bf16.msra.mxu0 0
        %4143 = vmatprep.subr.bf16.mxu0 0
        %4144 = vmatpush2.bf16.msra.mxu0 0
        %4145 = vmatprep.mubr.bf16.mxu0 0
        %4146 = vmatmul.mubr.bf16.gmra.mxu0 %v4047
        %v4147 = vpop.f32.mrf.mxu0
        %v4148 = vadd.f32 0.0, %v4147
        %v4149 = vpop.f32.mrf.mxu0
        %v4150 = vpop.f32.mrf.mxu0
        %v4151 = vpop.f32.mrf.mxu0
        %4152 = vdwg.mxu0
        %v4169 = vunpack.c.l.b16 %v4029
        %v4170 = vunpack.c.l.b16 %v4030
        %v4171 = vunpack.c.l.b16 %v4031
        %v4172 = vunpack.c.l.b16 %v4032
        %v4173 = vunpack.c.l.b16 %v4033
        %v4174 = vunpack.c.l.b16 %v4034
        %v4175 = vunpack.c.l.b16 %v4035
        %v4176 = vunpack.c.l.b16 %v4036
        %v4177 = vunpack.c.l.b16 %v4037
        %v4178 = vunpack.c.l.b16 %v4038
        %v4179 = vunpack.c.l.b16 %v4039
        %v4180 = vunpack.c.l.b16 %v4040
        %v4181 = vunpack.c.l.b16 %v4041
        %v4182 = vunpack.c.l.b16 %v4042
        %v4183 = vunpack.c.l.b16 %v4043
        %v4184 = vunpack.c.l.b16 %v4044
        %v4185 = vpack.c.b16 %v4170, %v4169
        %v4186 = vpack.c.b16 %v4172, %v4171
        %v4187 = vpack.c.b16 %v4174, %v4173
        %v4188 = vpack.c.b16 %v4176, %v4175
        %v4189 = vpack.c.b16 %v4178, %v4177
        %v4190 = vpack.c.b16 %v4180, %v4179
        %v4191 = vpack.c.b16 %v4182, %v4181
        %v4192 = vpack.c.b16 %v4184, %v4183
        %4201 = vmatprep.subr.bf16.mxu0 0
        %4202 = vmatpush1.bf16.msra.mxu0 %v4192
        %4203 = vmatprep.subr.bf16.mxu0 0
        %4204 = vmatpush1.bf16.msra.mxu0 %v4191
        %4205 = vmatprep.subr.bf16.mxu0 0
        %4206 = vmatpush1.bf16.msra.mxu0 %v4190
        %4207 = vmatprep.subr.bf16.mxu0 0
        %4208 = vmatpush1.bf16.msra.mxu0 %v4189
        %4209 = vmatprep.subr.bf16.mxu0 0
        %4210 = vmatpush1.bf16.msra.mxu0 %v4188
        %4211 = vmatprep.subr.bf16.mxu0 0
        %4212 = vmatpush1.bf16.msra.mxu0 %v4187
        %4213 = vmatprep.subr.bf16.mxu0 0
        %4214 = vmatpush1.bf16.msra.mxu0 %v4186
        %4215 = vmatprep.subr.bf16.mxu0 0
        %4216 = vmatpush1.bf16.msra.mxu0 %v4185
        %4217 = vmatprep.subr.bf16.mxu0 0
        %4218 = vmatpush2.bf16.msra.mxu0 0
        %4219 = vmatprep.subr.bf16.mxu0 0
        %4220 = vmatpush2.bf16.msra.mxu0 0
        %4221 = vmatprep.subr.bf16.mxu0 0
        %4222 = vmatpush2.bf16.msra.mxu0 0
        %4223 = vmatprep.subr.bf16.mxu0 0
        %4224 = vmatpush2.bf16.msra.mxu0 0
        %4225 = vmatprep.subr.bf16.mxu0 0
        %4226 = vmatpush2.bf16.msra.mxu0 0
        %4227 = vmatprep.subr.bf16.mxu0 0
        %4228 = vmatpush2.bf16.msra.mxu0 0
        %4229 = vmatprep.subr.bf16.mxu0 0
        %4230 = vmatpush2.bf16.msra.mxu0 0
        %4231 = vmatprep.subr.bf16.mxu0 0
        %4232 = vmatpush2.bf16.msra.mxu0 0
        %4233 = vmatprep.mubr.bf16.mxu0 0
        %4234 = vmatmul.mubr.bf16.gmra.mxu0 %v4028
        %v4235 = vpop.f32.mrf.mxu0
        %v4236 = vadd.f32 %v4148, %v4235
        %v4237 = vpop.f32.mrf.mxu0
        %v4238 = vpop.f32.mrf.mxu0
        %v4239 = vpop.f32.mrf.mxu0
        %4240 = vdwg.mxu0
        %s4241 = scalar_lea.vmem [#allocation3], 2
        %v4242 = vld [vmem:[%s4241] ss:$5 sm:$0x1f]
        %v4243 = vpack.c.bf16 %v4242, %v4242
        %s4244 = scalar_lea.vmem %s3, 128
        %v4245 = vld [vmem:[%s4244] sm:$0xf]
        %v4246 = vld [vmem:[%s4244 + $0x4] sm:$0xf]
        %v4247 = vld [vmem:[%s4244 + $0x8] sm:$0xf]
        %v4248 = vld [vmem:[%s4244 + $0xc] sm:$0xf]
        %v4249 = vld [vmem:[%s4244 + $0x10] sm:$0xf]
        %v4250 = vld [vmem:[%s4244 + $0x14] sm:$0xf]
        %v4251 = vld [vmem:[%s4244 + $0x18] sm:$0xf]
        %v4252 = vld [vmem:[%s4244 + $0x1c] sm:$0xf]
        %v4253 = vld [vmem:[%s4244 + $0x20] sm:$0xf]
        %v4254 = vld [vmem:[%s4244 + $0x24] sm:$0xf]
        %v4255 = vld [vmem:[%s4244 + $0x28] sm:$0xf]
        %v4256 = vld [vmem:[%s4244 + $0x2c] sm:$0xf]
        %v4257 = vld [vmem:[%s4244 + $0x30] sm:$0xf]
        %v4258 = vld [vmem:[%s4244 + $0x34] sm:$0xf]
        %v4259 = vld [vmem:[%s4244 + $0x38] sm:$0xf]
        %v4260 = vld [vmem:[%s4244 + $0x3c] sm:$0xf]
        %v4277 = vunpack.c.l.b16 %v4245
        %v4278 = vunpack.c.l.b16 %v4246
        %v4279 = vunpack.c.l.b16 %v4247
        %v4280 = vunpack.c.l.b16 %v4248
        %v4281 = vunpack.c.l.b16 %v4249
        %v4282 = vunpack.c.l.b16 %v4250
        %v4283 = vunpack.c.l.b16 %v4251
        %v4284 = vunpack.c.l.b16 %v4252
        %v4285 = vunpack.c.l.b16 %v4253
        %v4286 = vunpack.c.l.b16 %v4254
        %v4287 = vunpack.c.l.b16 %v4255
        %v4288 = vunpack.c.l.b16 %v4256
        %v4289 = vunpack.c.l.b16 %v4257
        %v4290 = vunpack.c.l.b16 %v4258
        %v4291 = vunpack.c.l.b16 %v4259
        %v4292 = vunpack.c.l.b16 %v4260
        %v4293 = vpack.c.b16 %v4278, %v4277
        %v4294 = vpack.c.b16 %v4280, %v4279
        %v4295 = vpack.c.b16 %v4282, %v4281
        %v4296 = vpack.c.b16 %v4284, %v4283
        %v4297 = vpack.c.b16 %v4286, %v4285
        %v4298 = vpack.c.b16 %v4288, %v4287
        %v4299 = vpack.c.b16 %v4290, %v4289
        %v4300 = vpack.c.b16 %v4292, %v4291
        %4309 = vmatprep.subr.bf16.mxu0 0
        %4310 = vmatpush1.bf16.msra.mxu0 %v4300
        %4311 = vmatprep.subr.bf16.mxu0 0
        %4312 = vmatpush1.bf16.msra.mxu0 %v4299
        %4313 = vmatprep.subr.bf16.mxu0 0
        %4314 = vmatpush1.bf16.msra.mxu0 %v4298
        %4315 = vmatprep.subr.bf16.mxu0 0
        %4316 = vmatpush1.bf16.msra.mxu0 %v4297
        %4317 = vmatprep.subr.bf16.mxu0 0
        %4318 = vmatpush1.bf16.msra.mxu0 %v4296
        %4319 = vmatprep.subr.bf16.mxu0 0
        %4320 = vmatpush1.bf16.msra.mxu0 %v4295
        %4321 = vmatprep.subr.bf16.mxu0 0
        %4322 = vmatpush1.bf16.msra.mxu0 %v4294
        %4323 = vmatprep.subr.bf16.mxu0 0
        %4324 = vmatpush1.bf16.msra.mxu0 %v4293
        %4325 = vmatprep.subr.bf16.mxu0 0
        %4326 = vmatpush2.bf16.msra.mxu0 0
        %4327 = vmatprep.subr.bf16.mxu0 0
        %4328 = vmatpush2.bf16.msra.mxu0 0
        %4329 = vmatprep.subr.bf16.mxu0 0
        %4330 = vmatpush2.bf16.msra.mxu0 0
        %4331 = vmatprep.subr.bf16.mxu0 0
        %4332 = vmatpush2.bf16.msra.mxu0 0
        %4333 = vmatprep.subr.bf16.mxu0 0
        %4334 = vmatpush2.bf16.msra.mxu0 0
        %4335 = vmatprep.subr.bf16.mxu0 0
        %4336 = vmatpush2.bf16.msra.mxu0 0
        %4337 = vmatprep.subr.bf16.mxu0 0
        %4338 = vmatpush2.bf16.msra.mxu0 0
        %4339 = vmatprep.subr.bf16.mxu0 0
        %4340 = vmatpush2.bf16.msra.mxu0 0
        %4341 = vmatprep.mubr.bf16.mxu0 0
        %4342 = vmatmul.mubr.bf16.gmra.mxu0 %v4243
        %v4343 = vpop.f32.mrf.mxu0
        %v4344 = vadd.f32 0.0, %v4343
        %v4345 = vpop.f32.mrf.mxu0
        %v4346 = vpop.f32.mrf.mxu0
        %v4347 = vpop.f32.mrf.mxu0
        %4348 = vdwg.mxu0
        %v4349 = vadd.f32 %v4236, %v4344
        %s4350 = scalar_lea.vmem [#allocation3], 3
        %v4351 = vld [vmem:[%s4350] ss:$5 sm:$0x1f]
        %v4352 = vpack.c.bf16 %v4351, %v4351
        %s4353 = scalar_lea.vmem %s3, 192
        %v4354 = vld [vmem:[%s4353] sm:$0xf]
        %v4355 = vld [vmem:[%s4353 + $0x4] sm:$0xf]
        %v4356 = vld [vmem:[%s4353 + $0x8] sm:$0xf]
        %v4357 = vld [vmem:[%s4353 + $0xc] sm:$0xf]
        %v4358 = vld [vmem:[%s4353 + $0x10] sm:$0xf]
        %v4359 = vld [vmem:[%s4353 + $0x14] sm:$0xf]
        %v4360 = vld [vmem:[%s4353 + $0x18] sm:$0xf]
        %v4361 = vld [vmem:[%s4353 + $0x1c] sm:$0xf]
        %v4362 = vld [vmem:[%s4353 + $0x20] sm:$0xf]
        %v4363 = vld [vmem:[%s4353 + $0x24] sm:$0xf]
        %v4364 = vld [vmem:[%s4353 + $0x28] sm:$0xf]
        %v4365 = vld [vmem:[%s4353 + $0x2c] sm:$0xf]
        %v4366 = vld [vmem:[%s4353 + $0x30] sm:$0xf]
        %v4367 = vld [vmem:[%s4353 + $0x34] sm:$0xf]
        %v4368 = vld [vmem:[%s4353 + $0x38] sm:$0xf]
        %v4369 = vld [vmem:[%s4353 + $0x3c] sm:$0xf]
        %v4386 = vunpack.c.l.b16 %v4354
        %v4387 = vunpack.c.l.b16 %v4355
        %v4388 = vunpack.c.l.b16 %v4356
        %v4389 = vunpack.c.l.b16 %v4357
        %v4390 = vunpack.c.l.b16 %v4358
        %v4391 = vunpack.c.l.b16 %v4359
        %v4392 = vunpack.c.l.b16 %v4360
        %v4393 = vunpack.c.l.b16 %v4361
        %v4394 = vunpack.c.l.b16 %v4362
        %v4395 = vunpack.c.l.b16 %v4363
        %v4396 = vunpack.c.l.b16 %v4364
        %v4397 = vunpack.c.l.b16 %v4365
        %v4398 = vunpack.c.l.b16 %v4366
        %v4399 = vunpack.c.l.b16 %v4367
        %v4400 = vunpack.c.l.b16 %v4368
        %v4401 = vunpack.c.l.b16 %v4369
        %v4402 = vpack.c.b16 %v4387, %v4386
        %v4403 = vpack.c.b16 %v4389, %v4388
        %v4404 = vpack.c.b16 %v4391, %v4390
        %v4405 = vpack.c.b16 %v4393, %v4392
        %v4406 = vpack.c.b16 %v4395, %v4394
        %v4407 = vpack.c.b16 %v4397, %v4396
        %v4408 = vpack.c.b16 %v4399, %v4398
        %v4409 = vpack.c.b16 %v4401, %v4400
        %4418 = vmatprep.subr.bf16.mxu0 0
        %4419 = vmatpush1.bf16.msra.mxu0 %v4409
        %4420 = vmatprep.subr.bf16.mxu0 0
        %4421 = vmatpush1.bf16.msra.mxu0 %v4408
        %4422 = vmatprep.subr.bf16.mxu0 0
        %4423 = vmatpush1.bf16.msra.mxu0 %v4407
        %4424 = vmatprep.subr.bf16.mxu0 0
        %4425 = vmatpush1.bf16.msra.mxu0 %v4406
        %4426 = vmatprep.subr.bf16.mxu0 0
        %4427 = vmatpush1.bf16.msra.mxu0 %v4405
        %4428 = vmatprep.subr.bf16.mxu0 0
        %4429 = vmatpush1.bf16.msra.mxu0 %v4404
        %4430 = vmatprep.subr.bf16.mxu0 0
        %4431 = vmatpush1.bf16.msra.mxu0 %v4403
        %4432 = vmatprep.subr.bf16.mxu0 0
        %4433 = vmatpush1.bf16.msra.mxu0 %v4402
        %4434 = vmatprep.subr.bf16.mxu0 0
        %4435 = vmatpush2.bf16.msra.mxu0 0
        %4436 = vmatprep.subr.bf16.mxu0 0
        %4437 = vmatpush2.bf16.msra.mxu0 0
        %4438 = vmatprep.subr.bf16.mxu0 0
        %4439 = vmatpush2.bf16.msra.mxu0 0
        %4440 = vmatprep.subr.bf16.mxu0 0
        %4441 = vmatpush2.bf16.msra.mxu0 0
        %4442 = vmatprep.subr.bf16.mxu0 0
        %4443 = vmatpush2.bf16.msra.mxu0 0
        %4444 = vmatprep.subr.bf16.mxu0 0
        %4445 = vmatpush2.bf16.msra.mxu0 0
        %4446 = vmatprep.subr.bf16.mxu0 0
        %4447 = vmatpush2.bf16.msra.mxu0 0
        %4448 = vmatprep.subr.bf16.mxu0 0
        %4449 = vmatpush2.bf16.msra.mxu0 0
        %4450 = vmatprep.mubr.bf16.mxu0 0
        %4451 = vmatmul.mubr.bf16.gmra.mxu0 %v4352
        %v4452 = vpop.f32.mrf.mxu0
        %v4453 = vadd.f32 0.0, %v4452
        %v4454 = vpop.f32.mrf.mxu0
        %v4455 = vpop.f32.mrf.mxu0
        %v4456 = vpop.f32.mrf.mxu0
        %4457 = vdwg.mxu0
        %v4458 = vadd.f32 %v4349, %v4453
        %s4459 = scalar_lea.vmem [#allocation3], 4
        %v4460 = vld [vmem:[%s4459] ss:$5 sm:$0x1f]
        %v4461 = vpack.c.bf16 %v4460, %v4460
        %s4462 = scalar_lea.vmem %s3, 256
        %v4463 = vld [vmem:[%s4462] sm:$0xf]
        %v4464 = vld [vmem:[%s4462 + $0x4] sm:$0xf]
        %v4465 = vld [vmem:[%s4462 + $0x8] sm:$0xf]
        %v4466 = vld [vmem:[%s4462 + $0xc] sm:$0xf]
        %v4467 = vld [vmem:[%s4462 + $0x10] sm:$0xf]
        %v4468 = vld [vmem:[%s4462 + $0x14] sm:$0xf]
        %v4469 = vld [vmem:[%s4462 + $0x18] sm:$0xf]
        %v4470 = vld [vmem:[%s4462 + $0x1c] sm:$0xf]
        %v4471 = vld [vmem:[%s4462 + $0x20] sm:$0xf]
        %v4472 = vld [vmem:[%s4462 + $0x24] sm:$0xf]
        %v4473 = vld [vmem:[%s4462 + $0x28] sm:$0xf]
        %v4474 = vld [vmem:[%s4462 + $0x2c] sm:$0xf]
        %v4475 = vld [vmem:[%s4462 + $0x30] sm:$0xf]
        %v4476 = vld [vmem:[%s4462 + $0x34] sm:$0xf]
        %v4477 = vld [vmem:[%s4462 + $0x38] sm:$0xf]
        %v4478 = vld [vmem:[%s4462 + $0x3c] sm:$0xf]
        %v4495 = vunpack.c.l.b16 %v4463
        %v4496 = vunpack.c.l.b16 %v4464
        %v4497 = vunpack.c.l.b16 %v4465
        %v4498 = vunpack.c.l.b16 %v4466
        %v4499 = vunpack.c.l.b16 %v4467
        %v4500 = vunpack.c.l.b16 %v4468
        %v4501 = vunpack.c.l.b16 %v4469
        %v4502 = vunpack.c.l.b16 %v4470
        %v4503 = vunpack.c.l.b16 %v4471
        %v4504 = vunpack.c.l.b16 %v4472
        %v4505 = vunpack.c.l.b16 %v4473
        %v4506 = vunpack.c.l.b16 %v4474
        %v4507 = vunpack.c.l.b16 %v4475
        %v4508 = vunpack.c.l.b16 %v4476
        %v4509 = vunpack.c.l.b16 %v4477
        %v4510 = vunpack.c.l.b16 %v4478
        %v4511 = vpack.c.b16 %v4496, %v4495
        %v4512 = vpack.c.b16 %v4498, %v4497
        %v4513 = vpack.c.b16 %v4500, %v4499
        %v4514 = vpack.c.b16 %v4502, %v4501
        %v4515 = vpack.c.b16 %v4504, %v4503
        %v4516 = vpack.c.b16 %v4506, %v4505
        %v4517 = vpack.c.b16 %v4508, %v4507
        %v4518 = vpack.c.b16 %v4510, %v4509
        %4527 = vmatprep.subr.bf16.mxu0 0
        %4528 = vmatpush1.bf16.msra.mxu0 %v4518
        %4529 = vmatprep.subr.bf16.mxu0 0
        %4530 = vmatpush1.bf16.msra.mxu0 %v4517
        %4531 = vmatprep.subr.bf16.mxu0 0
        %4532 = vmatpush1.bf16.msra.mxu0 %v4516
        %4533 = vmatprep.subr.bf16.mxu0 0
        %4534 = vmatpush1.bf16.msra.mxu0 %v4515
        %4535 = vmatprep.subr.bf16.mxu0 0
        %4536 = vmatpush1.bf16.msra.mxu0 %v4514
        %4537 = vmatprep.subr.bf16.mxu0 0
        %4538 = vmatpush1.bf16.msra.mxu0 %v4513
        %4539 = vmatprep.subr.bf16.mxu0 0
        %4540 = vmatpush1.bf16.msra.mxu0 %v4512
        %4541 = vmatprep.subr.bf16.mxu0 0
        %4542 = vmatpush1.bf16.msra.mxu0 %v4511
        %4543 = vmatprep.subr.bf16.mxu0 0
        %4544 = vmatpush2.bf16.msra.mxu0 0
        %4545 = vmatprep.subr.bf16.mxu0 0
        %4546 = vmatpush2.bf16.msra.mxu0 0
        %4547 = vmatprep.subr.bf16.mxu0 0
        %4548 = vmatpush2.bf16.msra.mxu0 0
        %4549 = vmatprep.subr.bf16.mxu0 0
        %4550 = vmatpush2.bf16.msra.mxu0 0
        %4551 = vmatprep.subr.bf16.mxu0 0
        %4552 = vmatpush2.bf16.msra.mxu0 0
        %4553 = vmatprep.subr.bf16.mxu0 0
        %4554 = vmatpush2.bf16.msra.mxu0 0
        %4555 = vmatprep.subr.bf16.mxu0 0
        %4556 = vmatpush2.bf16.msra.mxu0 0
        %4557 = vmatprep.subr.bf16.mxu0 0
        %4558 = vmatpush2.bf16.msra.mxu0 0
        %4559 = vmatprep.mubr.bf16.mxu0 0
        %4560 = vmatmul.mubr.bf16.gmra.mxu0 %v4461
        %v4561 = vpop.f32.mrf.mxu0
        %v4562 = vadd.f32 0.0, %v4561
        %v4563 = vpop.f32.mrf.mxu0
        %v4564 = vpop.f32.mrf.mxu0
        %v4565 = vpop.f32.mrf.mxu0
        %4566 = vdwg.mxu0
        %v4567 = vadd.f32 %v4458, %v4562
        %s4568 = scalar_lea.vmem [#allocation3], 5
        %v4569 = vld [vmem:[%s4568] ss:$5 sm:$0x1f]
        %v4570 = vpack.c.bf16 %v4569, %v4569
        %s4571 = scalar_lea.vmem %s3, 320
        %v4572 = vld [vmem:[%s4571] sm:$0xf]
        %v4573 = vld [vmem:[%s4571 + $0x4] sm:$0xf]
        %v4574 = vld [vmem:[%s4571 + $0x8] sm:$0xf]
        %v4575 = vld [vmem:[%s4571 + $0xc] sm:$0xf]
        %v4576 = vld [vmem:[%s4571 + $0x10] sm:$0xf]
        %v4577 = vld [vmem:[%s4571 + $0x14] sm:$0xf]
        %v4578 = vld [vmem:[%s4571 + $0x18] sm:$0xf]
        %v4579 = vld [vmem:[%s4571 + $0x1c] sm:$0xf]
        %v4580 = vld [vmem:[%s4571 + $0x20] sm:$0xf]
        %v4581 = vld [vmem:[%s4571 + $0x24] sm:$0xf]
        %v4582 = vld [vmem:[%s4571 + $0x28] sm:$0xf]
        %v4583 = vld [vmem:[%s4571 + $0x2c] sm:$0xf]
        %v4584 = vld [vmem:[%s4571 + $0x30] sm:$0xf]
        %v4585 = vld [vmem:[%s4571 + $0x34] sm:$0xf]
        %v4586 = vld [vmem:[%s4571 + $0x38] sm:$0xf]
        %v4587 = vld [vmem:[%s4571 + $0x3c] sm:$0xf]
        %v4604 = vunpack.c.l.b16 %v4572
        %v4605 = vunpack.c.l.b16 %v4573
        %v4606 = vunpack.c.l.b16 %v4574
        %v4607 = vunpack.c.l.b16 %v4575
        %v4608 = vunpack.c.l.b16 %v4576
        %v4609 = vunpack.c.l.b16 %v4577
        %v4610 = vunpack.c.l.b16 %v4578
        %v4611 = vunpack.c.l.b16 %v4579
        %v4612 = vunpack.c.l.b16 %v4580
        %v4613 = vunpack.c.l.b16 %v4581
        %v4614 = vunpack.c.l.b16 %v4582
        %v4615 = vunpack.c.l.b16 %v4583
        %v4616 = vunpack.c.l.b16 %v4584
        %v4617 = vunpack.c.l.b16 %v4585
        %v4618 = vunpack.c.l.b16 %v4586
        %v4619 = vunpack.c.l.b16 %v4587
        %v4620 = vpack.c.b16 %v4605, %v4604
        %v4621 = vpack.c.b16 %v4607, %v4606
        %v4622 = vpack.c.b16 %v4609, %v4608
        %v4623 = vpack.c.b16 %v4611, %v4610
        %v4624 = vpack.c.b16 %v4613, %v4612
        %v4625 = vpack.c.b16 %v4615, %v4614
        %v4626 = vpack.c.b16 %v4617, %v4616
        %v4627 = vpack.c.b16 %v4619, %v4618
        %4636 = vmatprep.subr.bf16.mxu0 0
        %4637 = vmatpush1.bf16.msra.mxu0 %v4627
        %4638 = vmatprep.subr.bf16.mxu0 0
        %4639 = vmatpush1.bf16.msra.mxu0 %v4626
        %4640 = vmatprep.subr.bf16.mxu0 0
        %4641 = vmatpush1.bf16.msra.mxu0 %v4625
        %4642 = vmatprep.subr.bf16.mxu0 0
        %4643 = vmatpush1.bf16.msra.mxu0 %v4624
        %4644 = vmatprep.subr.bf16.mxu0 0
        %4645 = vmatpush1.bf16.msra.mxu0 %v4623
        %4646 = vmatprep.subr.bf16.mxu0 0
        %4647 = vmatpush1.bf16.msra.mxu0 %v4622
        %4648 = vmatprep.subr.bf16.mxu0 0
        %4649 = vmatpush1.bf16.msra.mxu0 %v4621
        %4650 = vmatprep.subr.bf16.mxu0 0
        %4651 = vmatpush1.bf16.msra.mxu0 %v4620
        %4652 = vmatprep.subr.bf16.mxu0 0
        %4653 = vmatpush2.bf16.msra.mxu0 0
        %4654 = vmatprep.subr.bf16.mxu0 0
        %4655 = vmatpush2.bf16.msra.mxu0 0
        %4656 = vmatprep.subr.bf16.mxu0 0
        %4657 = vmatpush2.bf16.msra.mxu0 0
        %4658 = vmatprep.subr.bf16.mxu0 0
        %4659 = vmatpush2.bf16.msra.mxu0 0
        %4660 = vmatprep.subr.bf16.mxu0 0
        %4661 = vmatpush2.bf16.msra.mxu0 0
        %4662 = vmatprep.subr.bf16.mxu0 0
        %4663 = vmatpush2.bf16.msra.mxu0 0
        %4664 = vmatprep.subr.bf16.mxu0 0
        %4665 = vmatpush2.bf16.msra.mxu0 0
        %4666 = vmatprep.subr.bf16.mxu0 0
        %4667 = vmatpush2.bf16.msra.mxu0 0
        %4668 = vmatprep.mubr.bf16.mxu0 0
        %4669 = vmatmul.mubr.bf16.gmra.mxu0 %v4570
        %v4670 = vpop.f32.mrf.mxu0
        %v4671 = vadd.f32 0.0, %v4670
        %v4672 = vpop.f32.mrf.mxu0
        %v4673 = vpop.f32.mrf.mxu0
        %v4674 = vpop.f32.mrf.mxu0
        %4675 = vdwg.mxu0
        %v4676 = vadd.f32 %v4567, %v4671
        %s4677 = scalar_lea.vmem [#allocation3], 6
        %v4678 = vld [vmem:[%s4677] ss:$5 sm:$0x1f]
        %v4679 = vpack.c.bf16 %v4678, %v4678
        %s4680 = scalar_lea.vmem %s3, 384
        %v4681 = vld [vmem:[%s4680] sm:$0xf]
        %v4682 = vld [vmem:[%s4680 + $0x4] sm:$0xf]
        %v4683 = vld [vmem:[%s4680 + $0x8] sm:$0xf]
        %v4684 = vld [vmem:[%s4680 + $0xc] sm:$0xf]
        %v4685 = vld [vmem:[%s4680 + $0x10] sm:$0xf]
        %v4686 = vld [vmem:[%s4680 + $0x14] sm:$0xf]
        %v4687 = vld [vmem:[%s4680 + $0x18] sm:$0xf]
        %v4688 = vld [vmem:[%s4680 + $0x1c] sm:$0xf]
        %v4689 = vld [vmem:[%s4680 + $0x20] sm:$0xf]
        %v4690 = vld [vmem:[%s4680 + $0x24] sm:$0xf]
        %v4691 = vld [vmem:[%s4680 + $0x28] sm:$0xf]
        %v4692 = vld [vmem:[%s4680 + $0x2c] sm:$0xf]
        %v4693 = vld [vmem:[%s4680 + $0x30] sm:$0xf]
        %v4694 = vld [vmem:[%s4680 + $0x34] sm:$0xf]
        %v4695 = vld [vmem:[%s4680 + $0x38] sm:$0xf]
        %v4696 = vld [vmem:[%s4680 + $0x3c] sm:$0xf]
        %v4713 = vunpack.c.l.b16 %v4681
        %v4714 = vunpack.c.l.b16 %v4682
        %v4715 = vunpack.c.l.b16 %v4683
        %v4716 = vunpack.c.l.b16 %v4684
        %v4717 = vunpack.c.l.b16 %v4685
        %v4718 = vunpack.c.l.b16 %v4686
        %v4719 = vunpack.c.l.b16 %v4687
        %v4720 = vunpack.c.l.b16 %v4688
        %v4721 = vunpack.c.l.b16 %v4689
        %v4722 = vunpack.c.l.b16 %v4690
        %v4723 = vunpack.c.l.b16 %v4691
        %v4724 = vunpack.c.l.b16 %v4692
        %v4725 = vunpack.c.l.b16 %v4693
        %v4726 = vunpack.c.l.b16 %v4694
        %v4727 = vunpack.c.l.b16 %v4695
        %v4728 = vunpack.c.l.b16 %v4696
        %v4729 = vpack.c.b16 %v4714, %v4713
        %v4730 = vpack.c.b16 %v4716, %v4715
        %v4731 = vpack.c.b16 %v4718, %v4717
        %v4732 = vpack.c.b16 %v4720, %v4719
        %v4733 = vpack.c.b16 %v4722, %v4721
        %v4734 = vpack.c.b16 %v4724, %v4723
        %v4735 = vpack.c.b16 %v4726, %v4725
        %v4736 = vpack.c.b16 %v4728, %v4727
        %4745 = vmatprep.subr.bf16.mxu0 0
        %4746 = vmatpush1.bf16.msra.mxu0 %v4736
        %4747 = vmatprep.subr.bf16.mxu0 0
        %4748 = vmatpush1.bf16.msra.mxu0 %v4735
        %4749 = vmatprep.subr.bf16.mxu0 0
        %4750 = vmatpush1.bf16.msra.mxu0 %v4734
        %4751 = vmatprep.subr.bf16.mxu0 0
        %4752 = vmatpush1.bf16.msra.mxu0 %v4733
        %4753 = vmatprep.subr.bf16.mxu0 0
        %4754 = vmatpush1.bf16.msra.mxu0 %v4732
        %4755 = vmatprep.subr.bf16.mxu0 0
        %4756 = vmatpush1.bf16.msra.mxu0 %v4731
        %4757 = vmatprep.subr.bf16.mxu0 0
        %4758 = vmatpush1.bf16.msra.mxu0 %v4730
        %4759 = vmatprep.subr.bf16.mxu0 0
        %4760 = vmatpush1.bf16.msra.mxu0 %v4729
        %4761 = vmatprep.subr.bf16.mxu0 0
        %4762 = vmatpush2.bf16.msra.mxu0 0
        %4763 = vmatprep.subr.bf16.mxu0 0
        %4764 = vmatpush2.bf16.msra.mxu0 0
        %4765 = vmatprep.subr.bf16.mxu0 0
        %4766 = vmatpush2.bf16.msra.mxu0 0
        %4767 = vmatprep.subr.bf16.mxu0 0
        %4768 = vmatpush2.bf16.msra.mxu0 0
        %4769 = vmatprep.subr.bf16.mxu0 0
        %4770 = vmatpush2.bf16.msra.mxu0 0
        %4771 = vmatprep.subr.bf16.mxu0 0
        %4772 = vmatpush2.bf16.msra.mxu0 0
        %4773 = vmatprep.subr.bf16.mxu0 0
        %4774 = vmatpush2.bf16.msra.mxu0 0
        %4775 = vmatprep.subr.bf16.mxu0 0
        %4776 = vmatpush2.bf16.msra.mxu0 0
        %4777 = vmatprep.mubr.bf16.mxu0 0
        %4778 = vmatmul.mubr.bf16.gmra.mxu0 %v4679
        %v4779 = vpop.f32.mrf.mxu0
        %v4780 = vadd.f32 0.0, %v4779
        %v4781 = vpop.f32.mrf.mxu0
        %v4782 = vpop.f32.mrf.mxu0
        %v4783 = vpop.f32.mrf.mxu0
        %4784 = vdwg.mxu0
        %v4785 = vadd.f32 %v4676, %v4780
        %s4786 = scalar_lea.vmem [#allocation3], 7
        %v4787 = vld [vmem:[%s4786] ss:$5 sm:$0x1f]
        %v4788 = vpack.c.bf16 %v4787, %v4787
        %s4789 = scalar_lea.vmem %s3, 448
        %v4790 = vld [vmem:[%s4789] sm:$0xf]
        %v4791 = vld [vmem:[%s4789 + $0x4] sm:$0xf]
        %v4792 = vld [vmem:[%s4789 + $0x8] sm:$0xf]
        %v4793 = vld [vmem:[%s4789 + $0xc] sm:$0xf]
        %v4794 = vld [vmem:[%s4789 + $0x10] sm:$0xf]
        %v4795 = vld [vmem:[%s4789 + $0x14] sm:$0xf]
        %v4796 = vld [vmem:[%s4789 + $0x18] sm:$0xf]
        %v4797 = vld [vmem:[%s4789 + $0x1c] sm:$0xf]
        %v4798 = vld [vmem:[%s4789 + $0x20] sm:$0xf]
        %v4799 = vld [vmem:[%s4789 + $0x24] sm:$0xf]
        %v4800 = vld [vmem:[%s4789 + $0x28] sm:$0xf]
        %v4801 = vld [vmem:[%s4789 + $0x2c] sm:$0xf]
        %v4802 = vld [vmem:[%s4789 + $0x30] sm:$0xf]
        %v4803 = vld [vmem:[%s4789 + $0x34] sm:$0xf]
        %v4804 = vld [vmem:[%s4789 + $0x38] sm:$0xf]
        %v4805 = vld [vmem:[%s4789 + $0x3c] sm:$0xf]
        %v4822 = vunpack.c.l.b16 %v4790
        %v4823 = vunpack.c.l.b16 %v4791
        %v4824 = vunpack.c.l.b16 %v4792
        %v4825 = vunpack.c.l.b16 %v4793
        %v4826 = vunpack.c.l.b16 %v4794
        %v4827 = vunpack.c.l.b16 %v4795
        %v4828 = vunpack.c.l.b16 %v4796
        %v4829 = vunpack.c.l.b16 %v4797
        %v4830 = vunpack.c.l.b16 %v4798
        %v4831 = vunpack.c.l.b16 %v4799
        %v4832 = vunpack.c.l.b16 %v4800
        %v4833 = vunpack.c.l.b16 %v4801
        %v4834 = vunpack.c.l.b16 %v4802
        %v4835 = vunpack.c.l.b16 %v4803
        %v4836 = vunpack.c.l.b16 %v4804
        %v4837 = vunpack.c.l.b16 %v4805
        %v4838 = vpack.c.b16 %v4823, %v4822
        %v4839 = vpack.c.b16 %v4825, %v4824
        %v4840 = vpack.c.b16 %v4827, %v4826
        %v4841 = vpack.c.b16 %v4829, %v4828
        %v4842 = vpack.c.b16 %v4831, %v4830
        %v4843 = vpack.c.b16 %v4833, %v4832
        %v4844 = vpack.c.b16 %v4835, %v4834
        %v4845 = vpack.c.b16 %v4837, %v4836
        %4854 = vmatprep.subr.bf16.mxu0 0
        %4855 = vmatpush1.bf16.msra.mxu0 %v4845
        %4856 = vmatprep.subr.bf16.mxu0 0
        %4857 = vmatpush1.bf16.msra.mxu0 %v4844
        %4858 = vmatprep.subr.bf16.mxu0 0
        %4859 = vmatpush1.bf16.msra.mxu0 %v4843
        %4860 = vmatprep.subr.bf16.mxu0 0
        %4861 = vmatpush1.bf16.msra.mxu0 %v4842
        %4862 = vmatprep.subr.bf16.mxu0 0
        %4863 = vmatpush1.bf16.msra.mxu0 %v4841
        %4864 = vmatprep.subr.bf16.mxu0 0
        %4865 = vmatpush1.bf16.msra.mxu0 %v4840
        %4866 = vmatprep.subr.bf16.mxu0 0
        %4867 = vmatpush1.bf16.msra.mxu0 %v4839
        %4868 = vmatprep.subr.bf16.mxu0 0
        %4869 = vmatpush1.bf16.msra.mxu0 %v4838
        %4870 = vmatprep.subr.bf16.mxu0 0
        %4871 = vmatpush2.bf16.msra.mxu0 0
        %4872 = vmatprep.subr.bf16.mxu0 0
        %4873 = vmatpush2.bf16.msra.mxu0 0
        %4874 = vmatprep.subr.bf16.mxu0 0
        %4875 = vmatpush2.bf16.msra.mxu0 0
        %4876 = vmatprep.subr.bf16.mxu0 0
        %4877 = vmatpush2.bf16.msra.mxu0 0
        %4878 = vmatprep.subr.bf16.mxu0 0
        %4879 = vmatpush2.bf16.msra.mxu0 0
        %4880 = vmatprep.subr.bf16.mxu0 0
        %4881 = vmatpush2.bf16.msra.mxu0 0
        %4882 = vmatprep.subr.bf16.mxu0 0
        %4883 = vmatpush2.bf16.msra.mxu0 0
        %4884 = vmatprep.subr.bf16.mxu0 0
        %4885 = vmatpush2.bf16.msra.mxu0 0
        %4886 = vmatprep.mubr.bf16.mxu0 0
        %4887 = vmatmul.mubr.bf16.gmra.mxu0 %v4788
        %v4888 = vpop.f32.mrf.mxu0
        %v4889 = vadd.f32 0.0, %v4888
        %v4890 = vpop.f32.mrf.mxu0
        %v4891 = vpop.f32.mrf.mxu0
        %v4892 = vpop.f32.mrf.mxu0
        %4893 = vdwg.mxu0
        %v4894 = vadd.f32 %v4785, %v4889
        %s4895 = scalar_lea.vmem [#allocation3], 8
        %v4896 = vld [vmem:[%s4895] ss:$5 sm:$0x1f]
        %v4897 = vpack.c.bf16 %v4896, %v4896
        %s4898 = scalar_lea.vmem %s3, 512
        %v4899 = vld [vmem:[%s4898] sm:$0xf]
        %v4900 = vld [vmem:[%s4898 + $0x4] sm:$0xf]
        %v4901 = vld [vmem:[%s4898 + $0x8] sm:$0xf]
        %v4902 = vld [vmem:[%s4898 + $0xc] sm:$0xf]
        %v4903 = vld [vmem:[%s4898 + $0x10] sm:$0xf]
        %v4904 = vld [vmem:[%s4898 + $0x14] sm:$0xf]
        %v4905 = vld [vmem:[%s4898 + $0x18] sm:$0xf]
        %v4906 = vld [vmem:[%s4898 + $0x1c] sm:$0xf]
        %v4907 = vld [vmem:[%s4898 + $0x20] sm:$0xf]
        %v4908 = vld [vmem:[%s4898 + $0x24] sm:$0xf]
        %v4909 = vld [vmem:[%s4898 + $0x28] sm:$0xf]
        %v4910 = vld [vmem:[%s4898 + $0x2c] sm:$0xf]
        %v4911 = vld [vmem:[%s4898 + $0x30] sm:$0xf]
        %v4912 = vld [vmem:[%s4898 + $0x34] sm:$0xf]
        %v4913 = vld [vmem:[%s4898 + $0x38] sm:$0xf]
        %v4914 = vld [vmem:[%s4898 + $0x3c] sm:$0xf]
        %v4931 = vunpack.c.l.b16 %v4899
        %v4932 = vunpack.c.l.b16 %v4900
        %v4933 = vunpack.c.l.b16 %v4901
        %v4934 = vunpack.c.l.b16 %v4902
        %v4935 = vunpack.c.l.b16 %v4903
        %v4936 = vunpack.c.l.b16 %v4904
        %v4937 = vunpack.c.l.b16 %v4905
        %v4938 = vunpack.c.l.b16 %v4906
        %v4939 = vunpack.c.l.b16 %v4907
        %v4940 = vunpack.c.l.b16 %v4908
        %v4941 = vunpack.c.l.b16 %v4909
        %v4942 = vunpack.c.l.b16 %v4910
        %v4943 = vunpack.c.l.b16 %v4911
        %v4944 = vunpack.c.l.b16 %v4912
        %v4945 = vunpack.c.l.b16 %v4913
        %v4946 = vunpack.c.l.b16 %v4914
        %v4947 = vpack.c.b16 %v4932, %v4931
        %v4948 = vpack.c.b16 %v4934, %v4933
        %v4949 = vpack.c.b16 %v4936, %v4935
        %v4950 = vpack.c.b16 %v4938, %v4937
        %v4951 = vpack.c.b16 %v4940, %v4939
        %v4952 = vpack.c.b16 %v4942, %v4941
        %v4953 = vpack.c.b16 %v4944, %v4943
        %v4954 = vpack.c.b16 %v4946, %v4945
        %4963 = vmatprep.subr.bf16.mxu0 0
        %4964 = vmatpush1.bf16.msra.mxu0 %v4954
        %4965 = vmatprep.subr.bf16.mxu0 0
        %4966 = vmatpush1.bf16.msra.mxu0 %v4953
        %4967 = vmatprep.subr.bf16.mxu0 0
        %4968 = vmatpush1.bf16.msra.mxu0 %v4952
        %4969 = vmatprep.subr.bf16.mxu0 0
        %4970 = vmatpush1.bf16.msra.mxu0 %v4951
        %4971 = vmatprep.subr.bf16.mxu0 0
        %4972 = vmatpush1.bf16.msra.mxu0 %v4950
        %4973 = vmatprep.subr.bf16.mxu0 0
        %4974 = vmatpush1.bf16.msra.mxu0 %v4949
        %4975 = vmatprep.subr.bf16.mxu0 0
        %4976 = vmatpush1.bf16.msra.mxu0 %v4948
        %4977 = vmatprep.subr.bf16.mxu0 0
        %4978 = vmatpush1.bf16.msra.mxu0 %v4947
        %4979 = vmatprep.subr.bf16.mxu0 0
        %4980 = vmatpush2.bf16.msra.mxu0 0
        %4981 = vmatprep.subr.bf16.mxu0 0
        %4982 = vmatpush2.bf16.msra.mxu0 0
        %4983 = vmatprep.subr.bf16.mxu0 0
        %4984 = vmatpush2.bf16.msra.mxu0 0
        %4985 = vmatprep.subr.bf16.mxu0 0
        %4986 = vmatpush2.bf16.msra.mxu0 0
        %4987 = vmatprep.subr.bf16.mxu0 0
        %4988 = vmatpush2.bf16.msra.mxu0 0
        %4989 = vmatprep.subr.bf16.mxu0 0
        %4990 = vmatpush2.bf16.msra.mxu0 0
        %4991 = vmatprep.subr.bf16.mxu0 0
        %4992 = vmatpush2.bf16.msra.mxu0 0
        %4993 = vmatprep.subr.bf16.mxu0 0
        %4994 = vmatpush2.bf16.msra.mxu0 0
        %4995 = vmatprep.mubr.bf16.mxu0 0
        %4996 = vmatmul.mubr.bf16.gmra.mxu0 %v4897
        %v4997 = vpop.f32.mrf.mxu0
        %v4998 = vadd.f32 0.0, %v4997
        %v4999 = vpop.f32.mrf.mxu0
        %v5000 = vpop.f32.mrf.mxu0
        %v5001 = vpop.f32.mrf.mxu0
        %5002 = vdwg.mxu0
        %v5003 = vadd.f32 %v4894, %v4998
        %s5004 = scalar_lea.vmem [#allocation3], 9
        %v5005 = vld [vmem:[%s5004] ss:$5 sm:$0x1f]
        %v5006 = vpack.c.bf16 %v5005, %v5005
        %s5007 = scalar_lea.vmem %s3, 576
        %v5008 = vld [vmem:[%s5007] sm:$0xf]
        %v5009 = vld [vmem:[%s5007 + $0x4] sm:$0xf]
        %v5010 = vld [vmem:[%s5007 + $0x8] sm:$0xf]
        %v5011 = vld [vmem:[%s5007 + $0xc] sm:$0xf]
        %v5012 = vld [vmem:[%s5007 + $0x10] sm:$0xf]
        %v5013 = vld [vmem:[%s5007 + $0x14] sm:$0xf]
        %v5014 = vld [vmem:[%s5007 + $0x18] sm:$0xf]
        %v5015 = vld [vmem:[%s5007 + $0x1c] sm:$0xf]
        %v5016 = vld [vmem:[%s5007 + $0x20] sm:$0xf]
        %v5017 = vld [vmem:[%s5007 + $0x24] sm:$0xf]
        %v5018 = vld [vmem:[%s5007 + $0x28] sm:$0xf]
        %v5019 = vld [vmem:[%s5007 + $0x2c] sm:$0xf]
        %v5020 = vld [vmem:[%s5007 + $0x30] sm:$0xf]
        %v5021 = vld [vmem:[%s5007 + $0x34] sm:$0xf]
        %v5022 = vld [vmem:[%s5007 + $0x38] sm:$0xf]
        %v5023 = vld [vmem:[%s5007 + $0x3c] sm:$0xf]
        %v5040 = vunpack.c.l.b16 %v5008
        %v5041 = vunpack.c.l.b16 %v5009
        %v5042 = vunpack.c.l.b16 %v5010
        %v5043 = vunpack.c.l.b16 %v5011
        %v5044 = vunpack.c.l.b16 %v5012
        %v5045 = vunpack.c.l.b16 %v5013
        %v5046 = vunpack.c.l.b16 %v5014
        %v5047 = vunpack.c.l.b16 %v5015
        %v5048 = vunpack.c.l.b16 %v5016
        %v5049 = vunpack.c.l.b16 %v5017
        %v5050 = vunpack.c.l.b16 %v5018
        %v5051 = vunpack.c.l.b16 %v5019
        %v5052 = vunpack.c.l.b16 %v5020
        %v5053 = vunpack.c.l.b16 %v5021
        %v5054 = vunpack.c.l.b16 %v5022
        %v5055 = vunpack.c.l.b16 %v5023
        %v5056 = vpack.c.b16 %v5041, %v5040
        %v5057 = vpack.c.b16 %v5043, %v5042
        %v5058 = vpack.c.b16 %v5045, %v5044
        %v5059 = vpack.c.b16 %v5047, %v5046
        %v5060 = vpack.c.b16 %v5049, %v5048
        %v5061 = vpack.c.b16 %v5051, %v5050
        %v5062 = vpack.c.b16 %v5053, %v5052
        %v5063 = vpack.c.b16 %v5055, %v5054
        %5072 = vmatprep.subr.bf16.mxu0 0
        %5073 = vmatpush1.bf16.msra.mxu0 %v5063
        %5074 = vmatprep.subr.bf16.mxu0 0
        %5075 = vmatpush1.bf16.msra.mxu0 %v5062
        %5076 = vmatprep.subr.bf16.mxu0 0
        %5077 = vmatpush1.bf16.msra.mxu0 %v5061
        %5078 = vmatprep.subr.bf16.mxu0 0
        %5079 = vmatpush1.bf16.msra.mxu0 %v5060
        %5080 = vmatprep.subr.bf16.mxu0 0
        %5081 = vmatpush1.bf16.msra.mxu0 %v5059
        %5082 = vmatprep.subr.bf16.mxu0 0
        %5083 = vmatpush1.bf16.msra.mxu0 %v5058
        %5084 = vmatprep.subr.bf16.mxu0 0
        %5085 = vmatpush1.bf16.msra.mxu0 %v5057
        %5086 = vmatprep.subr.bf16.mxu0 0
        %5087 = vmatpush1.bf16.msra.mxu0 %v5056
        %5088 = vmatprep.subr.bf16.mxu0 0
        %5089 = vmatpush2.bf16.msra.mxu0 0
        %5090 = vmatprep.subr.bf16.mxu0 0
        %5091 = vmatpush2.bf16.msra.mxu0 0
        %5092 = vmatprep.subr.bf16.mxu0 0
        %5093 = vmatpush2.bf16.msra.mxu0 0
        %5094 = vmatprep.subr.bf16.mxu0 0
        %5095 = vmatpush2.bf16.msra.mxu0 0
        %5096 = vmatprep.subr.bf16.mxu0 0
        %5097 = vmatpush2.bf16.msra.mxu0 0
        %5098 = vmatprep.subr.bf16.mxu0 0
        %5099 = vmatpush2.bf16.msra.mxu0 0
        %5100 = vmatprep.subr.bf16.mxu0 0
        %5101 = vmatpush2.bf16.msra.mxu0 0
        %5102 = vmatprep.subr.bf16.mxu0 0
        %5103 = vmatpush2.bf16.msra.mxu0 0
        %5104 = vmatprep.mubr.bf16.mxu0 0
        %5105 = vmatmul.mubr.bf16.gmra.mxu0 %v5006
        %v5106 = vpop.f32.mrf.mxu0
        %v5107 = vadd.f32 0.0, %v5106
        %v5108 = vpop.f32.mrf.mxu0
        %v5109 = vpop.f32.mrf.mxu0
        %v5110 = vpop.f32.mrf.mxu0
        %5111 = vdwg.mxu0
        %v5112 = vadd.f32 %v5003, %v5107
        %v5113 = vld [vmem:[%s6 + $0x6] sm:$0x1]
        %v5114 = vlaneseq
        %v5115 = vshrl.u32 %v5114, 7
        %v5116 = vsub.s32 0, %v5115
        %v5117 = vrot.slane %v5113, %v5116
        %v5118 = vadd.f32 %v5112, %v5117
        %v5119 = vmax.f32 %v5118, 0.0
        %v5120 = vld [vmem:[%s6 + $0x7] sm:$0x1]
        %v5121 = vlaneseq
        %v5122 = vshrl.u32 %v5121, 7
        %v5123 = vsub.s32 0, %v5122
        %v5124 = vrot.slane %v5120, %v5123
        %v5125 = vmul.f32 %v5119, %v5124
        %v5126 = vld [vmem:[%s6 + $0x8] sm:$0x1]
        %v5127 = vlaneseq
        %v5128 = vshrl.u32 %v5127, 7
        %v5129 = vsub.s32 0, %v5128
        %v5130 = vrot.slane %v5126, %v5129
        %v5131 = vadd.f32 %v5125, %v5130
        %v5132 = vpack.c.bf16 %v5131, %v5131
        %v5133 = vld [vmem:[%s4] sm:$0xf]
        %v5134 = vld [vmem:[%s4 + $0x4] sm:$0xf]
        %v5135 = vld [vmem:[%s4 + $0x8] sm:$0xf]
        %v5136 = vld [vmem:[%s4 + $0xc] sm:$0xf]
        %v5137 = vld [vmem:[%s4 + $0x10] sm:$0xf]
        %v5138 = vld [vmem:[%s4 + $0x14] sm:$0xf]
        %v5139 = vld [vmem:[%s4 + $0x18] sm:$0xf]
        %v5140 = vld [vmem:[%s4 + $0x1c] sm:$0xf]
        %v5141 = vld [vmem:[%s4 + $0x20] sm:$0xf]
        %v5142 = vld [vmem:[%s4 + $0x24] sm:$0xf]
        %v5143 = vld [vmem:[%s4 + $0x28] sm:$0xf]
        %v5144 = vld [vmem:[%s4 + $0x2c] sm:$0xf]
        %v5145 = vld [vmem:[%s4 + $0x30] sm:$0xf]
        %v5146 = vld [vmem:[%s4 + $0x34] sm:$0xf]
        %v5147 = vld [vmem:[%s4 + $0x38] sm:$0xf]
        %v5148 = vld [vmem:[%s4 + $0x3c] sm:$0xf]
        %s5149 = scalar_lea.vmem %s4, 64
        %v5150 = vld [vmem:[%s5149] sm:$0xf]
        %v5151 = vld [vmem:[%s5149 + $0x4] sm:$0xf]
        %v5152 = vld [vmem:[%s5149 + $0x8] sm:$0xf]
        %v5153 = vld [vmem:[%s5149 + $0xc] sm:$0xf]
        %v5154 = vld [vmem:[%s5149 + $0x10] sm:$0xf]
        %v5155 = vld [vmem:[%s5149 + $0x14] sm:$0xf]
        %v5156 = vld [vmem:[%s5149 + $0x18] sm:$0xf]
        %v5157 = vld [vmem:[%s5149 + $0x1c] sm:$0xf]
        %v5158 = vld [vmem:[%s5149 + $0x20] sm:$0xf]
        %v5159 = vld [vmem:[%s5149 + $0x24] sm:$0xf]
        %v5160 = vld [vmem:[%s5149 + $0x28] sm:$0xf]
        %v5161 = vld [vmem:[%s5149 + $0x2c] sm:$0xf]
        %v5162 = vld [vmem:[%s5149 + $0x30] sm:$0xf]
        %v5163 = vld [vmem:[%s5149 + $0x34] sm:$0xf]
        %v5164 = vld [vmem:[%s5149 + $0x38] sm:$0xf]
        %v5165 = vld [vmem:[%s5149 + $0x3c] sm:$0xf]
        %v5167 = vshrl.u32 %v5132, 16
        %v5186 = vunpack.c.l.b16 %v5150
        %v5187 = vunpack.c.l.b16 %v5151
        %v5188 = vunpack.c.l.b16 %v5152
        %v5189 = vunpack.c.l.b16 %v5153
        %v5190 = vunpack.c.l.b16 %v5154
        %v5191 = vunpack.c.l.b16 %v5155
        %v5192 = vunpack.c.l.b16 %v5156
        %v5193 = vunpack.c.l.b16 %v5157
        %v5194 = vunpack.c.l.b16 %v5158
        %v5195 = vunpack.c.l.b16 %v5159
        %v5196 = vunpack.c.l.b16 %v5160
        %v5197 = vunpack.c.l.b16 %v5161
        %v5198 = vunpack.c.l.b16 %v5162
        %v5199 = vunpack.c.l.b16 %v5163
        %v5200 = vunpack.c.l.b16 %v5164
        %v5201 = vunpack.c.l.b16 %v5165
        %v5202 = vpack.c.b16 %v5187, %v5186
        %v5203 = vpack.c.b16 %v5189, %v5188
        %v5204 = vpack.c.b16 %v5191, %v5190
        %v5205 = vpack.c.b16 %v5193, %v5192
        %v5206 = vpack.c.b16 %v5195, %v5194
        %v5207 = vpack.c.b16 %v5197, %v5196
        %v5208 = vpack.c.b16 %v5199, %v5198
        %v5209 = vpack.c.b16 %v5201, %v5200
        %5218 = vmatprep.subr.bf16.mxu0 0
        %5219 = vmatpush1.bf16.msra.mxu0 %v5209
        %5220 = vmatprep.subr.bf16.mxu0 0
        %5221 = vmatpush1.bf16.msra.mxu0 %v5208
        %5222 = vmatprep.subr.bf16.mxu0 0
        %5223 = vmatpush1.bf16.msra.mxu0 %v5207
        %5224 = vmatprep.subr.bf16.mxu0 0
        %5225 = vmatpush1.bf16.msra.mxu0 %v5206
        %5226 = vmatprep.subr.bf16.mxu0 0
        %5227 = vmatpush1.bf16.msra.mxu0 %v5205
        %5228 = vmatprep.subr.bf16.mxu0 0
        %5229 = vmatpush1.bf16.msra.mxu0 %v5204
        %5230 = vmatprep.subr.bf16.mxu0 0
        %5231 = vmatpush1.bf16.msra.mxu0 %v5203
        %5232 = vmatprep.subr.bf16.mxu0 0
        %5233 = vmatpush1.bf16.msra.mxu0 %v5202
        %5234 = vmatprep.subr.bf16.mxu0 0
        %5235 = vmatpush2.bf16.msra.mxu0 0
        %5236 = vmatprep.subr.bf16.mxu0 0
        %5237 = vmatpush2.bf16.msra.mxu0 0
        %5238 = vmatprep.subr.bf16.mxu0 0
        %5239 = vmatpush2.bf16.msra.mxu0 0
        %5240 = vmatprep.subr.bf16.mxu0 0
        %5241 = vmatpush2.bf16.msra.mxu0 0
        %5242 = vmatprep.subr.bf16.mxu0 0
        %5243 = vmatpush2.bf16.msra.mxu0 0
        %5244 = vmatprep.subr.bf16.mxu0 0
        %5245 = vmatpush2.bf16.msra.mxu0 0
        %5246 = vmatprep.subr.bf16.mxu0 0
        %5247 = vmatpush2.bf16.msra.mxu0 0
        %5248 = vmatprep.subr.bf16.mxu0 0
        %5249 = vmatpush2.bf16.msra.mxu0 0
        %5250 = vmatprep.mubr.bf16.mxu0 0
        %5251 = vmatmul.mubr.bf16.gmra.mxu0 %v5167
        %v5252 = vpop.f32.mrf.mxu0
        %v5253 = vadd.f32 0.0, %v5252
        %v5254 = vpop.f32.mrf.mxu0
        %v5255 = vpop.f32.mrf.mxu0
        %v5256 = vpop.f32.mrf.mxu0
        %5257 = vdwg.mxu0
        %v5274 = vunpack.c.l.b16 %v5133
        %v5275 = vunpack.c.l.b16 %v5134
        %v5276 = vunpack.c.l.b16 %v5135
        %v5277 = vunpack.c.l.b16 %v5136
        %v5278 = vunpack.c.l.b16 %v5137
        %v5279 = vunpack.c.l.b16 %v5138
        %v5280 = vunpack.c.l.b16 %v5139
        %v5281 = vunpack.c.l.b16 %v5140
        %v5282 = vunpack.c.l.b16 %v5141
        %v5283 = vunpack.c.l.b16 %v5142
        %v5284 = vunpack.c.l.b16 %v5143
        %v5285 = vunpack.c.l.b16 %v5144
        %v5286 = vunpack.c.l.b16 %v5145
        %v5287 = vunpack.c.l.b16 %v5146
        %v5288 = vunpack.c.l.b16 %v5147
        %v5289 = vunpack.c.l.b16 %v5148
        %v5290 = vpack.c.b16 %v5275, %v5274
        %v5291 = vpack.c.b16 %v5277, %v5276
        %v5292 = vpack.c.b16 %v5279, %v5278
        %v5293 = vpack.c.b16 %v5281, %v5280
        %v5294 = vpack.c.b16 %v5283, %v5282
        %v5295 = vpack.c.b16 %v5285, %v5284
        %v5296 = vpack.c.b16 %v5287, %v5286
        %v5297 = vpack.c.b16 %v5289, %v5288
        %5306 = vmatprep.subr.bf16.mxu0 0
        %5307 = vmatpush1.bf16.msra.mxu0 %v5297
        %5308 = vmatprep.subr.bf16.mxu0 0
        %5309 = vmatpush1.bf16.msra.mxu0 %v5296
        %5310 = vmatprep.subr.bf16.mxu0 0
        %5311 = vmatpush1.bf16.msra.mxu0 %v5295
        %5312 = vmatprep.subr.bf16.mxu0 0
        %5313 = vmatpush1.bf16.msra.mxu0 %v5294
        %5314 = vmatprep.subr.bf16.mxu0 0
        %5315 = vmatpush1.bf16.msra.mxu0 %v5293
        %5316 = vmatprep.subr.bf16.mxu0 0
        %5317 = vmatpush1.bf16.msra.mxu0 %v5292
        %5318 = vmatprep.subr.bf16.mxu0 0
        %5319 = vmatpush1.bf16.msra.mxu0 %v5291
        %5320 = vmatprep.subr.bf16.mxu0 0
        %5321 = vmatpush1.bf16.msra.mxu0 %v5290
        %5322 = vmatprep.subr.bf16.mxu0 0
        %5323 = vmatpush2.bf16.msra.mxu0 0
        %5324 = vmatprep.subr.bf16.mxu0 0
        %5325 = vmatpush2.bf16.msra.mxu0 0
        %5326 = vmatprep.subr.bf16.mxu0 0
        %5327 = vmatpush2.bf16.msra.mxu0 0
        %5328 = vmatprep.subr.bf16.mxu0 0
        %5329 = vmatpush2.bf16.msra.mxu0 0
        %5330 = vmatprep.subr.bf16.mxu0 0
        %5331 = vmatpush2.bf16.msra.mxu0 0
        %5332 = vmatprep.subr.bf16.mxu0 0
        %5333 = vmatpush2.bf16.msra.mxu0 0
        %5334 = vmatprep.subr.bf16.mxu0 0
        %5335 = vmatpush2.bf16.msra.mxu0 0
        %5336 = vmatprep.subr.bf16.mxu0 0
        %5337 = vmatpush2.bf16.msra.mxu0 0
        %5338 = vmatprep.mubr.bf16.mxu0 0
        %5339 = vmatmul.mubr.bf16.gmra.mxu0 %v5132
        %v5340 = vpop.f32.mrf.mxu0
        %v5341 = vadd.f32 %v5253, %v5340
        %v5342 = vpop.f32.mrf.mxu0
        %v5343 = vpop.f32.mrf.mxu0
        %v5344 = vpop.f32.mrf.mxu0
        %5345 = vdwg.mxu0
        %s5346 = scalar_lea.vmem %s4, 128
        %v5347 = vld [vmem:[%s5346] sm:$0xf]
        %v5348 = vld [vmem:[%s5346 + $0x4] sm:$0xf]
        %v5349 = vld [vmem:[%s5346 + $0x8] sm:$0xf]
        %v5350 = vld [vmem:[%s5346 + $0xc] sm:$0xf]
        %v5351 = vld [vmem:[%s5346 + $0x10] sm:$0xf]
        %v5352 = vld [vmem:[%s5346 + $0x14] sm:$0xf]
        %v5353 = vld [vmem:[%s5346 + $0x18] sm:$0xf]
        %v5354 = vld [vmem:[%s5346 + $0x1c] sm:$0xf]
        %v5355 = vld [vmem:[%s5346 + $0x20] sm:$0xf]
        %v5356 = vld [vmem:[%s5346 + $0x24] sm:$0xf]
        %v5357 = vld [vmem:[%s5346 + $0x28] sm:$0xf]
        %v5358 = vld [vmem:[%s5346 + $0x2c] sm:$0xf]
        %v5359 = vld [vmem:[%s5346 + $0x30] sm:$0xf]
        %v5360 = vld [vmem:[%s5346 + $0x34] sm:$0xf]
        %v5361 = vld [vmem:[%s5346 + $0x38] sm:$0xf]
        %v5362 = vld [vmem:[%s5346 + $0x3c] sm:$0xf]
        %v5364 = vrot.slane %v5132, 1
        %v5382 = vunpack.c.l.b16 %v5347
        %v5383 = vunpack.c.l.b16 %v5348
        %v5384 = vunpack.c.l.b16 %v5349
        %v5385 = vunpack.c.l.b16 %v5350
        %v5386 = vunpack.c.l.b16 %v5351
        %v5387 = vunpack.c.l.b16 %v5352
        %v5388 = vunpack.c.l.b16 %v5353
        %v5389 = vunpack.c.l.b16 %v5354
        %v5390 = vunpack.c.l.b16 %v5355
        %v5391 = vunpack.c.l.b16 %v5356
        %v5392 = vunpack.c.l.b16 %v5357
        %v5393 = vunpack.c.l.b16 %v5358
        %v5394 = vunpack.c.l.b16 %v5359
        %v5395 = vunpack.c.l.b16 %v5360
        %v5396 = vunpack.c.l.b16 %v5361
        %v5397 = vunpack.c.l.b16 %v5362
        %v5398 = vpack.c.b16 %v5383, %v5382
        %v5399 = vpack.c.b16 %v5385, %v5384
        %v5400 = vpack.c.b16 %v5387, %v5386
        %v5401 = vpack.c.b16 %v5389, %v5388
        %v5402 = vpack.c.b16 %v5391, %v5390
        %v5403 = vpack.c.b16 %v5393, %v5392
        %v5404 = vpack.c.b16 %v5395, %v5394
        %v5405 = vpack.c.b16 %v5397, %v5396
        %5414 = vmatprep.subr.bf16.mxu0 0
        %5415 = vmatpush1.bf16.msra.mxu0 %v5405
        %5416 = vmatprep.subr.bf16.mxu0 0
        %5417 = vmatpush1.bf16.msra.mxu0 %v5404
        %5418 = vmatprep.subr.bf16.mxu0 0
        %5419 = vmatpush1.bf16.msra.mxu0 %v5403
        %5420 = vmatprep.subr.bf16.mxu0 0
        %5421 = vmatpush1.bf16.msra.mxu0 %v5402
        %5422 = vmatprep.subr.bf16.mxu0 0
        %5423 = vmatpush1.bf16.msra.mxu0 %v5401
        %5424 = vmatprep.subr.bf16.mxu0 0
        %5425 = vmatpush1.bf16.msra.mxu0 %v5400
        %5426 = vmatprep.subr.bf16.mxu0 0
        %5427 = vmatpush1.bf16.msra.mxu0 %v5399
        %5428 = vmatprep.subr.bf16.mxu0 0
        %5429 = vmatpush1.bf16.msra.mxu0 %v5398
        %5430 = vmatprep.subr.bf16.mxu0 0
        %5431 = vmatpush2.bf16.msra.mxu0 0
        %5432 = vmatprep.subr.bf16.mxu0 0
        %5433 = vmatpush2.bf16.msra.mxu0 0
        %5434 = vmatprep.subr.bf16.mxu0 0
        %5435 = vmatpush2.bf16.msra.mxu0 0
        %5436 = vmatprep.subr.bf16.mxu0 0
        %5437 = vmatpush2.bf16.msra.mxu0 0
        %5438 = vmatprep.subr.bf16.mxu0 0
        %5439 = vmatpush2.bf16.msra.mxu0 0
        %5440 = vmatprep.subr.bf16.mxu0 0
        %5441 = vmatpush2.bf16.msra.mxu0 0
        %5442 = vmatprep.subr.bf16.mxu0 0
        %5443 = vmatpush2.bf16.msra.mxu0 0
        %5444 = vmatprep.subr.bf16.mxu0 0
        %5445 = vmatpush2.bf16.msra.mxu0 0
        %5446 = vmatprep.mubr.bf16.mxu0 0
        %5447 = vmatmul.mubr.bf16.gmra.mxu0 %v5364
        %v5448 = vpop.f32.mrf.mxu0
        %v5449 = vadd.f32 0.0, %v5448
        %v5450 = vpop.f32.mrf.mxu0
        %v5451 = vpop.f32.mrf.mxu0
        %v5452 = vpop.f32.mrf.mxu0
        %5453 = vdwg.mxu0
        %v5454 = vadd.f32 %v5341, %v5449
        %s5455 = scalar_lea.vmem %s4, 192
        %v5456 = vld [vmem:[%s5455] sm:$0xf]
        %v5457 = vld [vmem:[%s5455 + $0x4] sm:$0xf]
        %v5458 = vld [vmem:[%s5455 + $0x8] sm:$0xf]
        %v5459 = vld [vmem:[%s5455 + $0xc] sm:$0xf]
        %v5460 = vld [vmem:[%s5455 + $0x10] sm:$0xf]
        %v5461 = vld [vmem:[%s5455 + $0x14] sm:$0xf]
        %v5462 = vld [vmem:[%s5455 + $0x18] sm:$0xf]
        %v5463 = vld [vmem:[%s5455 + $0x1c] sm:$0xf]
        %v5464 = vld [vmem:[%s5455 + $0x20] sm:$0xf]
        %v5465 = vld [vmem:[%s5455 + $0x24] sm:$0xf]
        %v5466 = vld [vmem:[%s5455 + $0x28] sm:$0xf]
        %v5467 = vld [vmem:[%s5455 + $0x2c] sm:$0xf]
        %v5468 = vld [vmem:[%s5455 + $0x30] sm:$0xf]
        %v5469 = vld [vmem:[%s5455 + $0x34] sm:$0xf]
        %v5470 = vld [vmem:[%s5455 + $0x38] sm:$0xf]
        %v5471 = vld [vmem:[%s5455 + $0x3c] sm:$0xf]
        %v5472 = vrot.slane %v5167, 1
        %v5490 = vunpack.c.l.b16 %v5456
        %v5491 = vunpack.c.l.b16 %v5457
        %v5492 = vunpack.c.l.b16 %v5458
        %v5493 = vunpack.c.l.b16 %v5459
        %v5494 = vunpack.c.l.b16 %v5460
        %v5495 = vunpack.c.l.b16 %v5461
        %v5496 = vunpack.c.l.b16 %v5462
        %v5497 = vunpack.c.l.b16 %v5463
        %v5498 = vunpack.c.l.b16 %v5464
        %v5499 = vunpack.c.l.b16 %v5465
        %v5500 = vunpack.c.l.b16 %v5466
        %v5501 = vunpack.c.l.b16 %v5467
        %v5502 = vunpack.c.l.b16 %v5468
        %v5503 = vunpack.c.l.b16 %v5469
        %v5504 = vunpack.c.l.b16 %v5470
        %v5505 = vunpack.c.l.b16 %v5471
        %v5506 = vpack.c.b16 %v5491, %v5490
        %v5507 = vpack.c.b16 %v5493, %v5492
        %v5508 = vpack.c.b16 %v5495, %v5494
        %v5509 = vpack.c.b16 %v5497, %v5496
        %v5510 = vpack.c.b16 %v5499, %v5498
        %v5511 = vpack.c.b16 %v5501, %v5500
        %v5512 = vpack.c.b16 %v5503, %v5502
        %v5513 = vpack.c.b16 %v5505, %v5504
        %5522 = vmatprep.subr.bf16.mxu0 0
        %5523 = vmatpush1.bf16.msra.mxu0 %v5513
        %5524 = vmatprep.subr.bf16.mxu0 0
        %5525 = vmatpush1.bf16.msra.mxu0 %v5512
        %5526 = vmatprep.subr.bf16.mxu0 0
        %5527 = vmatpush1.bf16.msra.mxu0 %v5511
        %5528 = vmatprep.subr.bf16.mxu0 0
        %5529 = vmatpush1.bf16.msra.mxu0 %v5510
        %5530 = vmatprep.subr.bf16.mxu0 0
        %5531 = vmatpush1.bf16.msra.mxu0 %v5509
        %5532 = vmatprep.subr.bf16.mxu0 0
        %5533 = vmatpush1.bf16.msra.mxu0 %v5508
        %5534 = vmatprep.subr.bf16.mxu0 0
        %5535 = vmatpush1.bf16.msra.mxu0 %v5507
        %5536 = vmatprep.subr.bf16.mxu0 0
        %5537 = vmatpush1.bf16.msra.mxu0 %v5506
        %5538 = vmatprep.subr.bf16.mxu0 0
        %5539 = vmatpush2.bf16.msra.mxu0 0
        %5540 = vmatprep.subr.bf16.mxu0 0
        %5541 = vmatpush2.bf16.msra.mxu0 0
        %5542 = vmatprep.subr.bf16.mxu0 0
        %5543 = vmatpush2.bf16.msra.mxu0 0
        %5544 = vmatprep.subr.bf16.mxu0 0
        %5545 = vmatpush2.bf16.msra.mxu0 0
        %5546 = vmatprep.subr.bf16.mxu0 0
        %5547 = vmatpush2.bf16.msra.mxu0 0
        %5548 = vmatprep.subr.bf16.mxu0 0
        %5549 = vmatpush2.bf16.msra.mxu0 0
        %5550 = vmatprep.subr.bf16.mxu0 0
        %5551 = vmatpush2.bf16.msra.mxu0 0
        %5552 = vmatprep.subr.bf16.mxu0 0
        %5553 = vmatpush2.bf16.msra.mxu0 0
        %5554 = vmatprep.mubr.bf16.mxu0 0
        %5555 = vmatmul.mubr.bf16.gmra.mxu0 %v5472
        %v5556 = vpop.f32.mrf.mxu0
        %v5557 = vadd.f32 0.0, %v5556
        %v5558 = vpop.f32.mrf.mxu0
        %v5559 = vpop.f32.mrf.mxu0
        %v5560 = vpop.f32.mrf.mxu0
        %5561 = vdwg.mxu0
        %v5562 = vadd.f32 %v5454, %v5557
        %s5563 = scalar_lea.vmem %s4, 256
        %v5564 = vld [vmem:[%s5563] sm:$0xf]
        %v5565 = vld [vmem:[%s5563 + $0x4] sm:$0xf]
        %v5566 = vld [vmem:[%s5563 + $0x8] sm:$0xf]
        %v5567 = vld [vmem:[%s5563 + $0xc] sm:$0xf]
        %v5568 = vld [vmem:[%s5563 + $0x10] sm:$0xf]
        %v5569 = vld [vmem:[%s5563 + $0x14] sm:$0xf]
        %v5570 = vld [vmem:[%s5563 + $0x18] sm:$0xf]
        %v5571 = vld [vmem:[%s5563 + $0x1c] sm:$0xf]
        %v5572 = vld [vmem:[%s5563 + $0x20] sm:$0xf]
        %v5573 = vld [vmem:[%s5563 + $0x24] sm:$0xf]
        %v5574 = vld [vmem:[%s5563 + $0x28] sm:$0xf]
        %v5575 = vld [vmem:[%s5563 + $0x2c] sm:$0xf]
        %v5576 = vld [vmem:[%s5563 + $0x30] sm:$0xf]
        %v5577 = vld [vmem:[%s5563 + $0x34] sm:$0xf]
        %v5578 = vld [vmem:[%s5563 + $0x38] sm:$0xf]
        %v5579 = vld [vmem:[%s5563 + $0x3c] sm:$0xf]
        %v5580 = vrot.slane %v5132, 2
        %v5598 = vunpack.c.l.b16 %v5564
        %v5599 = vunpack.c.l.b16 %v5565
        %v5600 = vunpack.c.l.b16 %v5566
        %v5601 = vunpack.c.l.b16 %v5567
        %v5602 = vunpack.c.l.b16 %v5568
        %v5603 = vunpack.c.l.b16 %v5569
        %v5604 = vunpack.c.l.b16 %v5570
        %v5605 = vunpack.c.l.b16 %v5571
        %v5606 = vunpack.c.l.b16 %v5572
        %v5607 = vunpack.c.l.b16 %v5573
        %v5608 = vunpack.c.l.b16 %v5574
        %v5609 = vunpack.c.l.b16 %v5575
        %v5610 = vunpack.c.l.b16 %v5576
        %v5611 = vunpack.c.l.b16 %v5577
        %v5612 = vunpack.c.l.b16 %v5578
        %v5613 = vunpack.c.l.b16 %v5579
        %v5614 = vpack.c.b16 %v5599, %v5598
        %v5615 = vpack.c.b16 %v5601, %v5600
        %v5616 = vpack.c.b16 %v5603, %v5602
        %v5617 = vpack.c.b16 %v5605, %v5604
        %v5618 = vpack.c.b16 %v5607, %v5606
        %v5619 = vpack.c.b16 %v5609, %v5608
        %v5620 = vpack.c.b16 %v5611, %v5610
        %v5621 = vpack.c.b16 %v5613, %v5612
        %5630 = vmatprep.subr.bf16.mxu0 0
        %5631 = vmatpush1.bf16.msra.mxu0 %v5621
        %5632 = vmatprep.subr.bf16.mxu0 0
        %5633 = vmatpush1.bf16.msra.mxu0 %v5620
        %5634 = vmatprep.subr.bf16.mxu0 0
        %5635 = vmatpush1.bf16.msra.mxu0 %v5619
        %5636 = vmatprep.subr.bf16.mxu0 0
        %5637 = vmatpush1.bf16.msra.mxu0 %v5618
        %5638 = vmatprep.subr.bf16.mxu0 0
        %5639 = vmatpush1.bf16.msra.mxu0 %v5617
        %5640 = vmatprep.subr.bf16.mxu0 0
        %5641 = vmatpush1.bf16.msra.mxu0 %v5616
        %5642 = vmatprep.subr.bf16.mxu0 0
        %5643 = vmatpush1.bf16.msra.mxu0 %v5615
        %5644 = vmatprep.subr.bf16.mxu0 0
        %5645 = vmatpush1.bf16.msra.mxu0 %v5614
        %5646 = vmatprep.subr.bf16.mxu0 0
        %5647 = vmatpush2.bf16.msra.mxu0 0
        %5648 = vmatprep.subr.bf16.mxu0 0
        %5649 = vmatpush2.bf16.msra.mxu0 0
        %5650 = vmatprep.subr.bf16.mxu0 0
        %5651 = vmatpush2.bf16.msra.mxu0 0
        %5652 = vmatprep.subr.bf16.mxu0 0
        %5653 = vmatpush2.bf16.msra.mxu0 0
        %5654 = vmatprep.subr.bf16.mxu0 0
        %5655 = vmatpush2.bf16.msra.mxu0 0
        %5656 = vmatprep.subr.bf16.mxu0 0
        %5657 = vmatpush2.bf16.msra.mxu0 0
        %5658 = vmatprep.subr.bf16.mxu0 0
        %5659 = vmatpush2.bf16.msra.mxu0 0
        %5660 = vmatprep.subr.bf16.mxu0 0
        %5661 = vmatpush2.bf16.msra.mxu0 0
        %5662 = vmatprep.mubr.bf16.mxu0 0
        %5663 = vmatmul.mubr.bf16.gmra.mxu0 %v5580
        %v5664 = vpop.f32.mrf.mxu0
        %v5665 = vadd.f32 0.0, %v5664
        %v5666 = vpop.f32.mrf.mxu0
        %v5667 = vpop.f32.mrf.mxu0
        %v5668 = vpop.f32.mrf.mxu0
        %5669 = vdwg.mxu0
        %v5670 = vadd.f32 %v5562, %v5665
        %v5671 = vld [vmem:[%s6 + $0x9] sm:$0x1]
        %v5672 = vadd.f32 %v5670, %v5671
        %v5673 = vmax.f32 %v5672, 0.0
        %v5674 = vpack.c.bf16 %v5673, %v5673
        %v5675 = vld [vmem:[%s5] sm:$0xf]
        %v5676 = vld [vmem:[%s5 + $0x4] sm:$0xf]
        %v5677 = vld [vmem:[%s5 + $0x8] sm:$0xf]
        %v5678 = vld [vmem:[%s5 + $0xc] sm:$0xf]
        %v5679 = vld [vmem:[%s5 + $0x10] sm:$0xf]
        %v5680 = vld [vmem:[%s5 + $0x14] sm:$0xf]
        %v5681 = vld [vmem:[%s5 + $0x18] sm:$0xf]
        %v5682 = vld [vmem:[%s5 + $0x1c] sm:$0xf]
        %v5683 = vld [vmem:[%s5 + $0x20] sm:$0xf]
        %v5684 = vld [vmem:[%s5 + $0x24] sm:$0xf]
        %v5685 = vld [vmem:[%s5 + $0x28] sm:$0xf]
        %v5686 = vld [vmem:[%s5 + $0x2c] sm:$0xf]
        %v5687 = vld [vmem:[%s5 + $0x30] sm:$0xf]
        %v5688 = vld [vmem:[%s5 + $0x34] sm:$0xf]
        %v5689 = vld [vmem:[%s5 + $0x38] sm:$0xf]
        %v5690 = vld [vmem:[%s5 + $0x3c] sm:$0xf]
        %v5691 = vld [vmem:[%s6 + $0xa] sm:$0x1]
        %v5708 = vunpack.c.l.b16 %v5675
        %v5709 = vunpack.c.l.b16 %v5676
        %v5710 = vunpack.c.l.b16 %v5677
        %v5711 = vunpack.c.l.b16 %v5678
        %v5712 = vunpack.c.l.b16 %v5679
        %v5713 = vunpack.c.l.b16 %v5680
        %v5714 = vunpack.c.l.b16 %v5681
        %v5715 = vunpack.c.l.b16 %v5682
        %v5716 = vunpack.c.l.b16 %v5683
        %v5717 = vunpack.c.l.b16 %v5684
        %v5718 = vunpack.c.l.b16 %v5685
        %v5719 = vunpack.c.l.b16 %v5686
        %v5720 = vunpack.c.l.b16 %v5687
        %v5721 = vunpack.c.l.b16 %v5688
        %v5722 = vunpack.c.l.b16 %v5689
        %v5723 = vunpack.c.l.b16 %v5690
        %v5724 = vpack.c.b16 %v5709, %v5708
        %v5725 = vpack.c.b16 %v5711, %v5710
        %v5726 = vpack.c.b16 %v5713, %v5712
        %v5727 = vpack.c.b16 %v5715, %v5714
        %v5728 = vpack.c.b16 %v5717, %v5716
        %v5729 = vpack.c.b16 %v5719, %v5718
        %v5730 = vpack.c.b16 %v5721, %v5720
        %v5731 = vpack.c.b16 %v5723, %v5722
        %5740 = vmatprep.subr.bf16.mxu0 0
        %5741 = vmatpush1.bf16.msra.mxu0 %v5731
        %5742 = vmatprep.subr.bf16.mxu0 0
        %5743 = vmatpush1.bf16.msra.mxu0 %v5730
        %5744 = vmatprep.subr.bf16.mxu0 0
        %5745 = vmatpush1.bf16.msra.mxu0 %v5729
        %5746 = vmatprep.subr.bf16.mxu0 0
        %5747 = vmatpush1.bf16.msra.mxu0 %v5728
        %5748 = vmatprep.subr.bf16.mxu0 0
        %5749 = vmatpush1.bf16.msra.mxu0 %v5727
        %5750 = vmatprep.subr.bf16.mxu0 0
        %5751 = vmatpush1.bf16.msra.mxu0 %v5726
        %5752 = vmatprep.subr.bf16.mxu0 0
        %5753 = vmatpush1.bf16.msra.mxu0 %v5725
        %5754 = vmatprep.subr.bf16.mxu0 0
        %5755 = vmatpush1.bf16.msra.mxu0 %v5724
        %5756 = vmatprep.subr.bf16.mxu0 0
        %5757 = vmatpush2.bf16.msra.mxu0 0
        %5758 = vmatprep.subr.bf16.mxu0 0
        %5759 = vmatpush2.bf16.msra.mxu0 0
        %5760 = vmatprep.subr.bf16.mxu0 0
        %5761 = vmatpush2.bf16.msra.mxu0 0
        %5762 = vmatprep.subr.bf16.mxu0 0
        %5763 = vmatpush2.bf16.msra.mxu0 0
        %5764 = vmatprep.subr.bf16.mxu0 0
        %5765 = vmatpush2.bf16.msra.mxu0 0
        %5766 = vmatprep.subr.bf16.mxu0 0
        %5767 = vmatpush2.bf16.msra.mxu0 0
        %5768 = vmatprep.subr.bf16.mxu0 0
        %5769 = vmatpush2.bf16.msra.mxu0 0
        %5770 = vmatprep.subr.bf16.mxu0 0
        %5771 = vmatpush2.bf16.msra.mxu0 0
        %5772 = vmatprep.mubr.bf16.mxu0 0
        %5773 = vmatmul.mubr.bf16.gmra.mxu0 %v5674
        %v5774 = vpop.f32.mrf.mxu0
        %v5775 = vadd.f32 %v5691, %v5774
        %v5776 = vpop.f32.mrf.mxu0
        %v5777 = vpop.f32.mrf.mxu0
        %v5778 = vpop.f32.mrf.mxu0
        %5779 = vdwg.mxu0
        %5780 = vst [vmem:[%s270] sm:$0x1] %v5775
        %s5781 = sand.u32 %s181, 1
        %s5782 = scalar_lea.sflag [#allocation5], %s5781
        %s5783 = sand.u32 %s181, 1
        %s5784 = scalar_lea.vmem [#allocation4], %s5783
        // Predicated region
        $region49: #{forward.1} parent=47 // pred_check
          %p5785 = pneg %p191
        $region50: #{forward.1} parent=47 // pred_check_branch
          %5787 = sbr.rel (%p5785) target = $region52
        $region51: #{forward.1} parent=47 // pred_region
          %s5789 = ssub.s32 16, 16
          %5790 = vsyncadd %s5782, %s5789
          %s5791 = smul.addr %s21, 16
          %s5792 = scalar_lea.hbm %s7, %s5791
          %s5794 = sshll.u32 %s5784, 4
          %s5795 = int_to_ptr.vmem [resolvable:$true] %s5794
          %5797 = dma.vmem_to_hbm [thread:$0]  %s5795, 16, %s5792, %s5782
        $region52: #{forward.1} parent=47 // pred_fallthru
          _
      $region48: #{forward.1} parent=5 // pred_fallthru
        _
      %p5798 = scmp.le.s32.totalorder 2, %s16
      // Predicated region
      $region53: #{forward.1} parent=5 // pred_check
        %p5799 = pneg %p5798
      $region54: #{forward.1} parent=5 // pred_check_branch
        %5801 = sbr.rel (%p5799) target = $region56
      $region55: #{forward.1} parent=5 // pred_region
        %s5802 = ssub.s32 %s16, 2
        // Predicated region
        $region57: #{forward.1} parent=55 // pred_check
          %p5803 = pneg %p197
        $region58: #{forward.1} parent=55 // pred_check_branch
          %5805 = sbr.rel (%p5803) target = $region60
        $region59: #{forward.1} parent=55 // pred_region
          %s5806 = sand.u32 %s182, 1
          %s5807 = scalar_lea.sflag [#allocation5], %s5806
          %s5808 = sand.u32 %s182, 1
          %s5809 = scalar_lea.vmem [#allocation4], %s5808
          %5810 = dma.done %s5807, 16
        $region60: #{forward.1} parent=55 // pred_fallthru
          _
      $region56: #{forward.1} parent=5 // pred_fallthru
        _
    $region6: #{forward.1} parent=1 // loop_footer
      %s20 = sadd.s32 1, %s16
    $region7: #{forward.1} parent=1 // loop_footer_branch
      %15 = sbr.rel target = $region3
    $region8: #{forward.1} parent=1 // loop_exit
      _
    %5811 = vsyncpa [#allocation5], 1
    %s5812 = scalar_lea.sflag [#allocation5], 1
    %5813 = vsyncpa %s5812, 1

</llo_original>
